<compile_context>
chip_gen: v7x
topology: tpu7x:2x2x1
jax: 0.10.0
libtpu: 0.0.40
codegen_flags: <defaults>
</compile_context>

<pallas_src>
import jax
import jax.numpy as jnp
from jax import lax
from jax.experimental import pallas as pl
from jax.experimental.pallas import tpu as pltpu

EPS = 1e-5

# 3x3-conv contraction grouping: taps concatenated per MXU matmul.
#   3 -> per-kh groups, K = 3*Cp (best on v6e/v7x, 256-deep MXU)
#   1 -> per-tap,       K =   Cp (best on v5e, 128-deep MXU)
#   9 -> full im2col (largest patch materialization; avoid)
TAPS_PER_GROUP = 3


# ----------------------------- in-kernel helpers -----------------------------

def _conv3x3_mm(xp, w_ref, H2, W2, stride):
    """3x3 conv as a few tap-grouped MXU matmuls accumulated in f32.

    xp    : (Hp, Wp, Cp) bf16 value (halo-padded, channels padded to 128).
    w_ref : (9*Cp, Cout_p) bf16 Ref, contraction dim ordered (kh, kw, cin).
    Returns (H2*W2, Cout_p) f32.
    """
    Cp = xp.shape[-1]
    taps = []
    for kh in range(3):
        for kw in range(3):
            if stride == 1:
                t = xp[kh:kh + H2, kw:kw + W2, :]
            else:
                t = xp[kh:kh + (H2 - 1) * stride + 1:stride,
                       kw:kw + (W2 - 1) * stride + 1:stride, :]
            taps.append(t)

    g = TAPS_PER_GROUP
    acc = None
    for gi in range(9 // g):
        grp = taps[gi * g:(gi + 1) * g]
        patch = grp[0] if g == 1 else jnp.concatenate(grp, axis=-1)
        patch = patch.reshape(H2 * W2, g * Cp)
        wg = w_ref[pl.ds(gi * g * Cp, g * Cp), :]          # static, aligned slice
        part = jnp.dot(patch, wg, preferred_element_type=jnp.float32)
        acc = part if acc is None else acc + part
    return acc


def _partial_stats(y):
    """One-pass partial BN stats (sum, sum-of-squares) for this tile -> (1,2,Cp) f32."""
    # TODO(synk): for production-sized N*H*W, use per-tile mean-centered /
    # Welford-style merging to avoid one-pass cancellation.
    s = jnp.sum(y, axis=0, keepdims=True)
    ss = jnp.sum(y * y, axis=0, keepdims=True)
    return jnp.concatenate([s, ss], axis=0).reshape(1, 2, y.shape[-1])


# --------------------------------- kernels -----------------------------------

def _make_pass1_kernel(H2, W2, Cin_p, Cout_p, stride, downsample):
    """conv1 (+ optional downsample 1x1 conv) and partial BN stats."""
    def kernel(*refs):
        if downsample:
            xpad_ref, w1_ref, wd_ref, y1_ref, s1_ref, idt_ref, sd_ref = refs
        else:
            xpad_ref, w1_ref, y1_ref, s1_ref = refs

        xp = xpad_ref[0]                                     # (Hp, Wp, Cin_p) bf16
        y = _conv3x3_mm(xp, w1_ref, H2, W2, stride)          # (M, Cout_p) f32
        y1_ref[...] = y.reshape(1, H2, W2, Cout_p).astype(y1_ref.dtype)
        s1_ref[...] = _partial_stats(y)

        if downsample:
            xi = xp[1:(H2 - 1) * stride + 2:stride,
                    1:(W2 - 1) * stride + 2:stride, :]       # (H2, W2, Cin_p) bf16
            d = jnp.dot(xi.reshape(H2 * W2, Cin_p), wd_ref[...],
                        preferred_element_type=jnp.float32)
            idt_ref[...] = d.reshape(1, H2, W2, Cout_p).astype(idt_ref.dtype)
            sd_ref[...] = _partial_stats(d)
    return kernel


def _make_pass2_kernel(H2, W2, Cout_p):
    """bn1-normalize + relu + conv2 and partial BN stats for bn2."""
    def kernel(y1_ref, sc1_ref, bi1_ref, w2_ref, y2_ref, s2_ref, pad_ref):
        sc = sc1_ref[...].reshape(1, 1, Cout_p)
        bi = bi1_ref[...].reshape(1, 1, Cout_p)
        a = jnp.maximum(y1_ref[0].astype(jnp.float32) * sc + bi, 0.0)

        # bf16 halo scratch; zero only the 1-pixel border (every step -- a
        # once-only program_id==0 zero is unsafe under megacore grid sharding,
        # since each TensorCore has its own scratch buffer).
        pad_ref[:, 0:1, :, :] = jnp.zeros((1, 1, W2 + 2, Cout_p), pad_ref.dtype)
        pad_ref[:, H2 + 1:H2 + 2, :, :] = jnp.zeros((1, 1, W2 + 2, Cout_p), pad_ref.dtype)
        pad_ref[:, :, 0:1, :] = jnp.zeros((1, H2 + 2, 1, Cout_p), pad_ref.dtype)
        pad_ref[:, :, W2 + 1:W2 + 2, :] = jnp.zeros((1, H2 + 2, 1, Cout_p), pad_ref.dtype)
        pad_ref[:, 1:H2 + 1, 1:W2 + 1, :] = a.astype(pad_ref.dtype)[None]

        y = _conv3x3_mm(pad_ref[0], w2_ref, H2, W2, 1)       # (M, Cout_p) f32
        y2_ref[...] = y.reshape(1, H2, W2, Cout_p).astype(y2_ref.dtype)
        s2_ref[...] = _partial_stats(y)
    return kernel


def _make_pass3_kernel(H2, W2, Cout_p, downsample):
    """bn2-normalize (+ downsample bn) + residual add + relu."""
    def kernel(*refs):
        if downsample:
            y2_ref, sc2_ref, bi2_ref, idt_ref, scd_ref, bid_ref, o_ref = refs
        else:
            y2_ref, sc2_ref, bi2_ref, xpad_ref, o_ref = refs

        y = y2_ref[0].astype(jnp.float32) * sc2_ref[...].reshape(1, 1, Cout_p) \
            + bi2_ref[...].reshape(1, 1, Cout_p)
        if downsample:
            i = idt_ref[0].astype(jnp.float32) * scd_ref[...].reshape(1, 1, Cout_p) \
                + bid_ref[...].reshape(1, 1, Cout_p)
        else:
            # identity = interior of the halo-padded bf16 input (no extra HBM copy)
            xp = xpad_ref[0]
            i = xp[1:H2 + 1, 1:W2 + 1, :].astype(jnp.float32)
        o_ref[...] = jnp.maximum(y + i, 0.0)[None].astype(o_ref.dtype)
    return kernel


# --------------------------------- wrapper -----------------------------------

def _round_up(x, m):
    return (x + m - 1) // m * m


def _vmem_limit_bytes():
    """Generation-aware scoped-VMEM budget (128 MiB on v5e/v6e, 64 MiB on v7x)."""
    cap = 64 * 1024 * 1024
    try:
        cap = int(pltpu.get_tpu_info().vmem_capacity_bytes) or cap
    except Exception:
        pass
    return int(min(100 * 1024 * 1024, cap * 3 // 4))


def basic_block_forward(x_nchw, params, stride=1, downsample=False):
    """Pallas BasicBlock forward.  x_nchw: (N, Cin, H, W) -> (N, Cout, H2, W2)."""
    N, Cin, H, W = x_nchw.shape
    Cout = params["w1"].shape[0]
    if not downsample:
        # PyTorch BasicBlock never builds stride>1 / Cin!=Cout without downsample.
        assert stride == 1 and Cin == Cout, \
            "downsample=True required when stride > 1 or Cin != Cout"

    H2 = (H + 2 - 3) // stride + 1
    W2 = (W + 2 - 3) // stride + 1
    Cin_p = _round_up(Cin, 128)
    Cout_p = _round_up(Cout, 128)
    M = N * H2 * W2

    # ---- wrapper-side layout glue: NCHW->NHWC, channel pad to 128 lanes,
    # ---- 1-px spatial halo, bf16 activations, OIHW -> (9*Cin_p, Cout_p) ------
    # TODO(synk): if the surrounding model stays NHWC, drop these transposes.
    # NOTE: channel-padding 4/8 -> 128 lanes is structurally MXU-underutilized;
    # real ResNet stages (C >= 64) waste far less.
    x = jnp.transpose(x_nchw, (0, 2, 3, 1)).astype(jnp.float32)       # NHWC
    x_pad = jnp.pad(x, ((0, 0), (1, 1), (1, 1),
                        (0, Cin_p - Cin))).astype(jnp.bfloat16)        # halo + lanes

    def conv3_w(w_oihw, ci, ci_p):
        w = jnp.transpose(w_oihw, (2, 3, 1, 0))                        # (3,3,Ci,Co)
        w = jnp.pad(w, ((0, 0), (0, 0), (0, ci_p - ci), (0, Cout_p - Cout)))
        return w.reshape(9 * ci_p, Cout_p).astype(jnp.bfloat16)

    def padded_vec(v):
        return jnp.pad(v.astype(jnp.float32), (0, Cout_p - Cout))

    w1 = conv3_w(params["w1"], Cin, Cin_p)
    w2 = conv3_w(params["w2"], Cout, Cout_p)

    def fold_bn(stats, gamma, beta):
        """Reduce per-tile partial stats and fold BN into scale/bias."""
        s = jnp.sum(stats, axis=0)                                     # (2, Cp)
        mean = s[0] / M
        var = jnp.maximum(s[1] / M - mean * mean, 0.0)
        scale = padded_vec(gamma) * lax.rsqrt(var + EPS)
        bias = padded_vec(beta) - mean * scale
        return scale.reshape(1, Cout_p), bias.reshape(1, Cout_p)

    grid = (N,)
    cparams = pltpu.CompilerParams(dimension_semantics=("parallel",),
                                   vmem_limit_bytes=_vmem_limit_bytes())

    def batch_spec(shape):
        nd = len(shape)
        return pl.BlockSpec((1,) + tuple(shape[1:]),
                            lambda n, _nd=nd: (n,) + (0,) * (_nd - 1))

    def full_spec(shape):
        nd = len(shape)
        return pl.BlockSpec(tuple(shape), lambda n, _nd=nd: (0,) * _nd)

    act_dt = jnp.bfloat16          # inter-pass HBM hand-off dtype

    # ---------------------------- pass 1 -------------------------------------
    p1_in = [x_pad, w1]
    p1_specs = [batch_spec(x_pad.shape), full_spec(w1.shape)]
    p1_out_shapes = [jax.ShapeDtypeStruct((N, H2, W2, Cout_p), act_dt),
                     jax.ShapeDtypeStruct((N, 2, Cout_p), jnp.float32)]
    p1_out_specs = [batch_spec((N, H2, W2, Cout_p)), batch_spec((N, 2, Cout_p))]
    if downsample:
        wd = jnp.transpose(params["wd"][:, :, 0, 0], (1, 0))           # (Cin, Cout)
        wd = jnp.pad(wd, ((0, Cin_p - Cin), (0, Cout_p - Cout))).astype(jnp.bfloat16)
        p1_in.append(wd)
        p1_specs.append(full_spec(wd.shape))
        p1_out_shapes += [jax.ShapeDtypeStruct((N, H2, W2, Cout_p), act_dt),
                          jax.ShapeDtypeStruct((N, 2, Cout_p), jnp.float32)]
        p1_out_specs += [batch_spec((N, H2, W2, Cout_p)), batch_spec((N, 2, Cout_p))]

    p1_out = pl.pallas_call(
        _make_pass1_kernel(H2, W2, Cin_p, Cout_p, stride, downsample),
        grid=grid,
        in_specs=p1_specs,
        out_shape=tuple(p1_out_shapes),
        out_specs=tuple(p1_out_specs),
        compiler_params=cparams,
    )(*p1_in)
    if downsample:
        y1, s1, idt, sd = p1_out
    else:
        y1, s1 = p1_out

    sc1, bi1 = fold_bn(s1, params["g1"], params["b1"])

    # ---------------------------- pass 2 -------------------------------------
    y2, s2 = pl.pallas_call(
        _make_pass2_kernel(H2, W2, Cout_p),
        grid=grid,
        in_specs=[batch_spec(y1.shape), full_spec(sc1.shape),
                  full_spec(bi1.shape), full_spec(w2.shape)],
        out_shape=(jax.ShapeDtypeStruct((N, H2, W2, Cout_p), act_dt),
                   jax.ShapeDtypeStruct((N, 2, Cout_p), jnp.float32)),
        out_specs=(batch_spec((N, H2, W2, Cout_p)), batch_spec((N, 2, Cout_p))),
        scratch_shapes=[pltpu.VMEM((1, H2 + 2, W2 + 2, Cout_p), jnp.bfloat16)],
        compiler_params=cparams,
    )(y1, sc1, bi1, w2)

    sc2, bi2 = fold_bn(s2, params["g2"], params["b2"])

    # ---------------------------- pass 3 -------------------------------------
    if downsample:
        scd, bid = fold_bn(sd, params["gd"], params["bd"])
        p3_in = [y2, sc2, bi2, idt, scd, bid]
        p3_specs = [batch_spec(y2.shape), full_spec(sc2.shape), full_spec(bi2.shape),
                    batch_spec(idt.shape), full_spec(scd.shape), full_spec(bid.shape)]
    else:
        p3_in = [y2, sc2, bi2, x_pad]     # identity read from the padded input
        p3_specs = [batch_spec(y2.shape), full_spec(sc2.shape), full_spec(bi2.shape),
                    batch_spec(x_pad.shape)]

    out_p = pl.pallas_call(
        _make_pass3_kernel(H2, W2, Cout_p, downsample),
        grid=grid,
        in_specs=p3_specs,
        out_shape=jax.ShapeDtypeStruct((N, H2, W2, Cout_p), jnp.float32),
        out_specs=batch_spec((N, H2, W2, Cout_p)),
        compiler_params=cparams,
    )(*p3_in)

    out = out_p[..., :Cout]                           # drop channel padding
    return jnp.transpose(out, (0, 3, 1, 2))           # back to NCHW


# --------------------------- pure-JAX reference -------------------------------

def _q(x):
    """bf16 round-trip matching the kernel's bf16 activation hand-offs."""
    return x.astype(jnp.bfloat16).astype(jnp.float32)


def _bn_ref(y, g, b, y_stats=None):
    ys = y if y_stats is None else y_stats
    mean = ys.mean(axis=(0, 1, 2), keepdims=True)
    var = ((ys - mean) ** 2).mean(axis=(0, 1, 2), keepdims=True)
    return (y - mean) * lax.rsqrt(var + EPS) * g.reshape(1, 1, 1, -1) \
        + b.reshape(1, 1, 1, -1)


def _conv_ref(x, w_oihw, stride, pad):
    # bf16 MXU operands / f32 accumulation, matching the kernel numerics
    xq = _q(x)
    wq = _q(jnp.transpose(w_oihw, (2, 3, 1, 0)))
    return lax.conv_general_dilated(
        xq, wq, (stride, stride), ((pad, pad), (pad, pad)),
        dimension_numbers=("NHWC", "HWIO", "NHWC"),
        precision=lax.Precision.HIGHEST)


def basic_block_ref(x_nchw, params, stride=1, downsample=False):
    x = jnp.transpose(x_nchw, (0, 2, 3, 1)).astype(jnp.float32)
    y1 = _conv_ref(x, params["w1"], stride, 1)
    a = jnp.maximum(_bn_ref(_q(y1), params["g1"], params["b1"], y_stats=y1), 0.0)
    y2 = _conv_ref(a, params["w2"], 1, 1)
    yn = _bn_ref(_q(y2), params["g2"], params["b2"], y_stats=y2)
    if downsample:
        d = _conv_ref(x, params["wd"], stride, 0)
        i = _bn_ref(_q(d), params["gd"], params["bd"], y_stats=d)
    else:
        i = _q(x)
    return jnp.transpose(jnp.maximum(yn + i, 0.0), (0, 3, 1, 2))


# ----------------------------------- main -------------------------------------

if __name__ == "__main__":
    key = jax.random.PRNGKey(0)

    def make_params(k, cin, cout, ds):
        ks = jax.random.split(k, 9)
        p = {
            "w1": 0.1 * jax.random.normal(ks[0], (cout, cin, 3, 3), jnp.float32),
            "g1": 1.0 + 0.1 * jax.random.normal(ks[1], (cout,), jnp.float32),
            "b1": 0.1 * jax.random.normal(ks[2], (cout,), jnp.float32),
            "w2": 0.1 * jax.random.normal(ks[3], (cout, cout, 3, 3), jnp.float32),
            "g2": 1.0 + 0.1 * jax.random.normal(ks[4], (cout,), jnp.float32),
            "b2": 0.1 * jax.random.normal(ks[5], (cout,), jnp.float32),
        }
        if ds:
            p.update({
                "wd": 0.1 * jax.random.normal(ks[6], (cout, cin, 1, 1), jnp.float32),
                "gd": 1.0 + 0.1 * jax.random.normal(ks[7], (cout,), jnp.float32),
                "bd": 0.1 * jax.random.normal(ks[8], (cout,), jnp.float32),
            })
        return p

    configs = [
        # (N, Cin, Cout, H, W, stride, downsample)
        (2, 4, 8, 16, 16, 1, True),    # channel-changing block, downsample path
        (2, 8, 8, 16, 16, 1, False),   # plain identity block
    ]
    for (N, Cin, Cout, H, W, stride, ds) in configs:
        kp, kx, key = jax.random.split(key, 3)
        params = make_params(kp, Cin, Cout, ds)
        x = jax.random.normal(kx, (N, Cin, H, W), jnp.float32)

        out = jax.block_until_ready(
            basic_block_forward(x, params, stride=stride, downsample=ds))
        ref = basic_block_ref(x, params, stride=stride, downsample=ds)

        assert out.shape == ref.shape, (out.shape, ref.shape)
        max_err = float(jnp.max(jnp.abs(out - ref)))
        assert jnp.allclose(out, ref, atol=2e-2, rtol=2e-2), max_err

    print("KERNEL_OK")
</pallas_src>

<mosaic_0001>
module attributes {stable_mosaic.version = 11 : i64} {
  func.func @kernel(%arg0: i32, %arg1: memref<1x18x18x128xbf16, #tpu.memory_space<vmem>>, %arg2: memref<1152x128xbf16, #tpu.memory_space<vmem>>, %arg3: memref<128x128xbf16, #tpu.memory_space<vmem>>, %arg4: memref<1x16x16x128xbf16, #tpu.memory_space<vmem>>, %arg5: memref<1x2x128xf32, #tpu.memory_space<vmem>>, %arg6: memref<1x16x16x128xbf16, #tpu.memory_space<vmem>>, %arg7: memref<1x2x128xf32, #tpu.memory_space<vmem>>) attributes {dimension_semantics = [#tpu.dimension_semantics<parallel>], iteration_bounds = array<i64: 2>, scalar_prefetch = 0 : i64, scratch_operands = 0 : i64, tpu.core_type = #tpu.core_type<tc>, window_params = [{transform_indices = @transform_0, window_bounds = array<i64: 1, 18, 18, 128>}, {pipeline_mode = #tpu.pipeline_mode<synchronous>, transform_indices = @transform_1, window_bounds = array<i64: 1152, 128>}, {pipeline_mode = #tpu.pipeline_mode<synchronous>, transform_indices = @transform_2, window_bounds = array<i64: 128, 128>}, {transform_indices = @transform_3, window_bounds = array<i64: 1, 16, 16, 128>}, {transform_indices = @transform_4, window_bounds = array<i64: 1, 2, 128>}, {transform_indices = @transform_5, window_bounds = array<i64: 1, 16, 16, 128>}, {transform_indices = @transform_6, window_bounds = array<i64: 1, 2, 128>}]} {
    %c0 = arith.constant 0 : index
    %c0_0 = arith.constant 0 : index
    %c0_1 = arith.constant 0 : index
    %c0_2 = arith.constant 0 : index
    %0 = vector.load %arg1[%c0, %c0_0, %c0_1, %c0_2] : memref<1x18x18x128xbf16, #tpu.memory_space<vmem>>, vector<1x18x18x128xbf16>
    %1 = vector.shape_cast %0 : vector<1x18x18x128xbf16> to vector<18x18x128xbf16>
    %2 = vector.extract_strided_slice %1 {offsets = [0, 0, 0], sizes = [16, 16, 128], strides = [1, 1, 1]} : vector<18x18x128xbf16> to vector<16x16x128xbf16>
    %3 = vector.extract_strided_slice %1 {offsets = [0, 1, 0], sizes = [16, 16, 128], strides = [1, 1, 1]} : vector<18x18x128xbf16> to vector<16x16x128xbf16>
    %4 = vector.extract_strided_slice %1 {offsets = [0, 2, 0], sizes = [16, 16, 128], strides = [1, 1, 1]} : vector<18x18x128xbf16> to vector<16x16x128xbf16>
    %5 = vector.extract_strided_slice %1 {offsets = [1, 0, 0], sizes = [16, 16, 128], strides = [1, 1, 1]} : vector<18x18x128xbf16> to vector<16x16x128xbf16>
    %6 = vector.extract_strided_slice %1 {offsets = [1, 1, 0], sizes = [16, 16, 128], strides = [1, 1, 1]} : vector<18x18x128xbf16> to vector<16x16x128xbf16>
    %7 = vector.extract_strided_slice %1 {offsets = [1, 2, 0], sizes = [16, 16, 128], strides = [1, 1, 1]} : vector<18x18x128xbf16> to vector<16x16x128xbf16>
    %8 = vector.extract_strided_slice %1 {offsets = [2, 0, 0], sizes = [16, 16, 128], strides = [1, 1, 1]} : vector<18x18x128xbf16> to vector<16x16x128xbf16>
    %9 = vector.extract_strided_slice %1 {offsets = [2, 1, 0], sizes = [16, 16, 128], strides = [1, 1, 1]} : vector<18x18x128xbf16> to vector<16x16x128xbf16>
    %10 = vector.extract_strided_slice %1 {offsets = [2, 2, 0], sizes = [16, 16, 128], strides = [1, 1, 1]} : vector<18x18x128xbf16> to vector<16x16x128xbf16>
    %11 = tpu.concatenate %2, %3, %4 in 2 : vector<16x16x128xbf16>, vector<16x16x128xbf16>, vector<16x16x128xbf16> -> vector<16x16x384xbf16>
    %12 = vector.shape_cast %11 : vector<16x16x384xbf16> to vector<256x384xbf16>
    %c0_3 = arith.constant 0 : index
    %c0_4 = arith.constant 0 : index
    %13 = vector.load %arg2[%c0_3, %c0_4] : memref<1152x128xbf16, #tpu.memory_space<vmem>>, vector<384x128xbf16>
    %cst = arith.constant dense<0.000000e+00> : vector<256x128xf32>
    %14 = tpu.matmul %12, %13, %cst {dimension_numbers = #tpu.dot_dimension_numbers<[1], [0], [0], [1], [0, 0, 1, 1], [], []>} : vector<256x384xbf16>, vector<384x128xbf16>, vector<256x128xf32> -> vector<256x128xf32>
    %15 = tpu.concatenate %5, %6, %7 in 2 : vector<16x16x128xbf16>, vector<16x16x128xbf16>, vector<16x16x128xbf16> -> vector<16x16x384xbf16>
    %16 = vector.shape_cast %15 : vector<16x16x384xbf16> to vector<256x384xbf16>
    %c384 = arith.constant 384 : index
    %c0_5 = arith.constant 0 : index
    %17 = vector.load %arg2[%c384, %c0_5] : memref<1152x128xbf16, #tpu.memory_space<vmem>>, vector<384x128xbf16>
    %cst_6 = arith.constant dense<0.000000e+00> : vector<256x128xf32>
    %18 = tpu.matmul %16, %17, %cst_6 {dimension_numbers = #tpu.dot_dimension_numbers<[1], [0], [0], [1], [0, 0, 1, 1], [], []>} : vector<256x384xbf16>, vector<384x128xbf16>, vector<256x128xf32> -> vector<256x128xf32>
    %19 = arith.addf %14, %18 : vector<256x128xf32>
    %20 = tpu.concatenate %8, %9, %10 in 2 : vector<16x16x128xbf16>, vector<16x16x128xbf16>, vector<16x16x128xbf16> -> vector<16x16x384xbf16>
    %21 = vector.shape_cast %20 : vector<16x16x384xbf16> to vector<256x384xbf16>
    %c768 = arith.constant 768 : index
    %c0_7 = arith.constant 0 : index
    %22 = vector.load %arg2[%c768, %c0_7] : memref<1152x128xbf16, #tpu.memory_space<vmem>>, vector<384x128xbf16>
    %cst_8 = arith.constant dense<0.000000e+00> : vector<256x128xf32>
    %23 = tpu.matmul %21, %22, %cst_8 {dimension_numbers = #tpu.dot_dimension_numbers<[1], [0], [0], [1], [0, 0, 1, 1], [], []>} : vector<256x384xbf16>, vector<384x128xbf16>, vector<256x128xf32> -> vector<256x128xf32>
    %24 = arith.addf %19, %23 : vector<256x128xf32>
    %25 = vector.shape_cast %24 : vector<256x128xf32> to vector<1x16x16x128xf32>
    %26 = arith.truncf %25 : vector<1x16x16x128xf32> to vector<1x16x16x128xbf16>
    %c0_9 = arith.constant 0 : index
    %c0_10 = arith.constant 0 : index
    %c0_11 = arith.constant 0 : index
    %c0_12 = arith.constant 0 : index
    %27 = vector.load %arg4[%c0_9, %c0_10, %c0_11, %c0_12] : memref<1x16x16x128xbf16, #tpu.memory_space<vmem>>, vector<1x16x16x128xbf16>
    tpu.vector_store %arg4[%c0_9, %c0_10, %c0_11, %c0_12], %26 {strides = array<i32>} : memref<1x16x16x128xbf16, #tpu.memory_space<vmem>>, vector<1x16x16x128xbf16>,
    %cst_13 = arith.constant dense<0.000000e+00> : vector<128xf32>
    %28 = vector.multi_reduction <add>, %24, %cst_13 [0] : vector<256x128xf32> to vector<128xf32>
    %29 = vector.shape_cast %28 : vector<128xf32> to vector<1x128xf32>
    %30 = arith.mulf %24, %24 : vector<256x128xf32>
    %cst_14 = arith.constant dense<0.000000e+00> : vector<128xf32>
    %31 = vector.multi_reduction <add>, %30, %cst_14 [0] : vector<256x128xf32> to vector<128xf32>
    %32 = vector.shape_cast %31 : vector<128xf32> to vector<1x128xf32>
    %33 = tpu.concatenate %29, %32 in 0 : vector<1x128xf32>, vector<1x128xf32> -> vector<2x128xf32>
    %34 = vector.shape_cast %33 : vector<2x128xf32> to vector<1x2x128xf32>
    %c0_15 = arith.constant 0 : index
    %c0_16 = arith.constant 0 : index
    %c0_17 = arith.constant 0 : index
    %35 = vector.load %arg5[%c0_15, %c0_16, %c0_17] : memref<1x2x128xf32, #tpu.memory_space<vmem>>, vector<1x2x128xf32>
    tpu.vector_store %arg5[%c0_15, %c0_16, %c0_17], %34 {strides = array<i32>} : memref<1x2x128xf32, #tpu.memory_space<vmem>>, vector<1x2x128xf32>,
    %36 = vector.extract_strided_slice %1 {offsets = [1, 1, 0], sizes = [16, 16, 128], strides = [1, 1, 1]} : vector<18x18x128xbf16> to vector<16x16x128xbf16>
    %37 = vector.shape_cast %36 : vector<16x16x128xbf16> to vector<256x128xbf16>
    %c0_18 = arith.constant 0 : index
    %c0_19 = arith.constant 0 : index
    %38 = vector.load %arg3[%c0_18, %c0_19] : memref<128x128xbf16, #tpu.memory_space<vmem>>, vector<128x128xbf16>
    %cst_20 = arith.constant dense<0.000000e+00> : vector<256x128xf32>
    %39 = tpu.matmul %37, %38, %cst_20 {dimension_numbers = #tpu.dot_dimension_numbers<[1], [0], [0], [1], [0, 0, 1, 1], [], []>} : vector<256x128xbf16>, vector<128x128xbf16>, vector<256x128xf32> -> vector<256x128xf32>
    %40 = vector.shape_cast %39 : vector<256x128xf32> to vector<1x16x16x128xf32>
    %41 = arith.truncf %40 : vector<1x16x16x128xf32> to vector<1x16x16x128xbf16>
    %c0_21 = arith.constant 0 : index
    %c0_22 = arith.constant 0 : index
    %c0_23 = arith.constant 0 : index
    %c0_24 = arith.constant 0 : index
    %42 = vector.load %arg6[%c0_21, %c0_22, %c0_23, %c0_24] : memref<1x16x16x128xbf16, #tpu.memory_space<vmem>>, vector<1x16x16x128xbf16>
    tpu.vector_store %arg6[%c0_21, %c0_22, %c0_23, %c0_24], %41 {strides = array<i32>} : memref<1x16x16x128xbf16, #tpu.memory_space<vmem>>, vector<1x16x16x128xbf16>,
    %cst_25 = arith.constant dense<0.000000e+00> : vector<128xf32>
    %43 = vector.multi_reduction <add>, %39, %cst_25 [0] : vector<256x128xf32> to vector<128xf32>
    %44 = vector.shape_cast %43 : vector<128xf32> to vector<1x128xf32>
    %45 = arith.mulf %39, %39 : vector<256x128xf32>
    %cst_26 = arith.constant dense<0.000000e+00> : vector<128xf32>
    %46 = vector.multi_reduction <add>, %45, %cst_26 [0] : vector<256x128xf32> to vector<128xf32>
    %47 = vector.shape_cast %46 : vector<128xf32> to vector<1x128xf32>
    %48 = tpu.concatenate %44, %47 in 0 : vector<1x128xf32>, vector<1x128xf32> -> vector<2x128xf32>
    %49 = vector.shape_cast %48 : vector<2x128xf32> to vector<1x2x128xf32>
    %c0_27 = arith.constant 0 : index
    %c0_28 = arith.constant 0 : index
    %c0_29 = arith.constant 0 : index
    %50 = vector.load %arg7[%c0_27, %c0_28, %c0_29] : memref<1x2x128xf32, #tpu.memory_space<vmem>>, vector<1x2x128xf32>
    tpu.vector_store %arg7[%c0_27, %c0_28, %c0_29], %49 {strides = array<i32>} : memref<1x2x128xf32, #tpu.memory_space<vmem>>, vector<1x2x128xf32>,
    return
  }
  func.func @transform_0(%arg0: i32) -> (i32, i32, i32, i32) {
    %c0_i32 = arith.constant 0 : i32
    %c0_i32_0 = arith.constant 0 : i32
    %c0_i32_1 = arith.constant 0 : i32
    %c0_i32_2 = arith.constant 0 : i32
    return %arg0, %c0_i32, %c0_i32_0, %c0_i32_1 : i32, i32, i32, i32
  }
  func.func @transform_1(%arg0: i32) -> (i32, i32) {
    %c0_i32 = arith.constant 0 : i32
    %c0_i32_0 = arith.constant 0 : i32
    %c0_i32_1 = arith.constant 0 : i32
    return %c0_i32, %c0_i32_0 : i32, i32
  }
  func.func @transform_2(%arg0: i32) -> (i32, i32) {
    %c0_i32 = arith.constant 0 : i32
    %c0_i32_0 = arith.constant 0 : i32
    %c0_i32_1 = arith.constant 0 : i32
    return %c0_i32, %c0_i32_0 : i32, i32
  }
  func.func @transform_3(%arg0: i32) -> (i32, i32, i32, i32) {
    %c0_i32 = arith.constant 0 : i32
    %c0_i32_0 = arith.constant 0 : i32
    %c0_i32_1 = arith.constant 0 : i32
    %c0_i32_2 = arith.constant 0 : i32
    return %arg0, %c0_i32, %c0_i32_0, %c0_i32_1 : i32, i32, i32, i32
  }
  func.func @transform_4(%arg0: i32) -> (i32, i32, i32) {
    %c0_i32 = arith.constant 0 : i32
    %c0_i32_0 = arith.constant 0 : i32
    %c0_i32_1 = arith.constant 0 : i32
    return %arg0, %c0_i32, %c0_i32_0 : i32, i32, i32
  }
  func.func @transform_5(%arg0: i32) -> (i32, i32, i32, i32) {
    %c0_i32 = arith.constant 0 : i32
    %c0_i32_0 = arith.constant 0 : i32
    %c0_i32_1 = arith.constant 0 : i32
    %c0_i32_2 = arith.constant 0 : i32
    return %arg0, %c0_i32, %c0_i32_0, %c0_i32_1 : i32, i32, i32, i32
  }
  func.func @transform_6(%arg0: i32) -> (i32, i32, i32) {
    %c0_i32 = arith.constant 0 : i32
    %c0_i32_0 = arith.constant 0 : i32
    %c0_i32_1 = arith.constant 0 : i32
    return %arg0, %c0_i32, %c0_i32_0 : i32, i32, i32
  }
}

</mosaic_0001>

<llo_original>
// kernel: tpu_custom_call.1
$region0: #{tpu_custom_call.1}
  #allocation0 [shape = 'u32[]', space=smem, size = 0x4, offset = 0x4, fixed_abs, tag = 'smem constant byte address 0x4 - core index']
  #allocation1 [shape = 'u32[144,128]{1,0:T(1,128)}', space=vmem, size = 0x12000, scoped, tag = 'internal scratch']
  %s0 = inlined_call_operand.vmem [shape: bf16[2,18,18,128], index: 0, kind: input, shape index: {}]
  %s1 = inlined_call_operand.vmem [shape: bf16[1152,128], index: 1, kind: input, shape index: {}]
  %s2 = inlined_call_operand.vmem [shape: bf16[128,128], index: 2, kind: input, shape index: {}]
  %s3 = inlined_call_operand.hbm [shape: bf16[2,16,16,128], index: 3, kind: output, shape index: {0}]
  %s4 = inlined_call_operand.hbm [shape: f32[2,2,128], index: 4, kind: output, shape index: {1}]
  %s5 = inlined_call_operand.hbm [shape: bf16[2,16,16,128], index: 5, kind: output, shape index: {2}]
  %s6 = inlined_call_operand.hbm [shape: f32[2,2,128], index: 6, kind: output, shape index: {3}]
  %7 = xla_tuple %s3, %s4, %s5, %s6
  %s8 = sld [smem:[#allocation0]]
  $region69: #{tpu_custom_call.1} parent=0
    _
  %s10 = ssub.s32 1, %s8
  %s11 = scalar_select 0, %s10, %s8
  $region1: #{tpu_custom_call.1} parent=0
    #allocation2 [shape = 'u8[131072]{0}', space=vmem, size = 0x20000, scoped, tag = 'output window, operand 0']
    #allocation3 [shape = 's32[2]{0}', space=sflag, size = 0x8, scoped, tag = 'scoped memory for tpu_custom_call.1']
    #allocation4 [shape = 'u8[2048]{0}', space=vmem, size = 0x800, scoped, tag = 'output window, operand 1']
    #allocation5 [shape = 's32[2]{0}', space=sflag, size = 0x8, scoped, tag = 'scoped memory for tpu_custom_call.1']
    #allocation6 [shape = 'u8[131072]{0}', space=vmem, size = 0x20000, scoped, tag = 'output window, operand 2']
    #allocation7 [shape = 'u8[2048]{0}', space=vmem, size = 0x800, scoped, tag = 'output window, operand 3']
    #allocation8 [shape = 's32[2]{0}', space=sflag, size = 0x8, scoped, tag = 'scoped memory for tpu_custom_call.1']
    %12 = vsyncpa [#allocation3], 0
    %s13 = scalar_lea.sflag [#allocation3], 1
    %14 = vsyncpa %s13, 0
    %15 = vsyncpa [#allocation5], 0
    %s16 = scalar_lea.sflag [#allocation5], 1
    %17 = vsyncpa %s16, 0
    %18 = vsyncpa [#allocation8], 0
    %s19 = scalar_lea.sflag [#allocation8], 1
    %20 = vsyncpa %s19, 0
    loop: start=0, step=1, limit=4
    $region2: #{tpu_custom_call.1} parent=1 // loop_pre_header
      _
    $region3: #{tpu_custom_call.1} parent=1 // loop_header
      %s22 = sphi 0, %s26
      %p23 = scmp.ge.s32.totalorder %s22, 4
      %s32 = sphi 0, %s34
      %s35 = sphi 0, %s32
      %s36 = sphi 0, %s35
      %s52 = sphi 0, %s36
      %s56 = sphi 0, %s56
      %s58 = sphi 0, %s56
      %s59 = sphi 0, %s58
      %s73 = sphi 0, %s59
      %s77 = sphi 0, %s77
      %s79 = sphi 0, %s77
      %s80 = sphi 0, %s79
      %s94 = sphi 0, %s80
      %s100 = sphi 0, %s102
      %s103 = sphi 0, %s100
      %s104 = sphi 0, %s103
      %s120 = sphi 0, %s104
      %s126 = sphi 0, %s128
      %s129 = sphi 0, %s126
      %s130 = sphi 0, %s129
      %s146 = sphi 0, %s130
      %s152 = sphi 0, %s154
      %s155 = sphi 0, %s152
      %s156 = sphi 0, %s155
      %s172 = sphi 0, %s156
      %s178 = sphi 0, %s180
      %s181 = sphi 0, %s178
      %s182 = sphi 0, %s181
      %s198 = sphi 0, %s182
    $region4: #{tpu_custom_call.1} parent=1 // loop_header_branch
      %25 = sbr.rel (%p23) target = $region8
    $region5: #{tpu_custom_call.1} parent=1 // loop_body
      %s27 = ssub.s32 %s22, 1
      %s28 = ssub.s32 %s22, 2
      %s29 = sadd.s32 %s22, 1
      %s30 = ssub.s32 %s22, %s29
      %p31 = scmp.eq.s32.totalorder %s30, 0
      %s33 = sadd.s32 %s32, 1
      %s34 = scalar_select %p31, %s32, %s33
      %p37 = pneg %p31
      %p38 = scmp.eq.s32.totalorder %s22, 1
      %p39 = por %p37, %p38
      %p40 = scmp.ne.s32.totalorder %s32, %s35
      %p41 = scmp.eq.s32.totalorder %s22, 0
      %p42 = por %p40, %p41
      %p43 = scmp.ne.s32.totalorder %s32, %s35
      %p44 = scmp.eq.s32.totalorder %s27, 1
      %p45 = por %p43, %p44
      %p46 = scmp.ne.s32.totalorder %s35, %s36
      %p47 = scmp.eq.s32.totalorder %s27, 0
      %p48 = por %p46, %p47
      %p49 = scmp.ne.s32.totalorder %s35, %s36
      %p50 = scmp.eq.s32.totalorder %s28, 1
      %p51 = por %p49, %p50
      %p53 = scmp.ne.s32.totalorder %s36, %s52
      %p54 = scmp.eq.s32.totalorder %s28, 0
      %p55 = por %p53, %p54
      %s57 = sadd.s32 %s56, 1
      %p60 = scmp.eq.s32.totalorder %s22, 1
      %p61 = scmp.ne.s32.totalorder %s56, %s58
      %p62 = scmp.eq.s32.totalorder %s22, 0
      %p63 = por %p61, %p62
      %p64 = scmp.ne.s32.totalorder %s56, %s58
      %p65 = scmp.eq.s32.totalorder %s27, 1
      %p66 = por %p64, %p65
      %p67 = scmp.ne.s32.totalorder %s58, %s59
      %p68 = scmp.eq.s32.totalorder %s27, 0
      %p69 = por %p67, %p68
      %p70 = scmp.ne.s32.totalorder %s58, %s59
      %p71 = scmp.eq.s32.totalorder %s28, 1
      %p72 = por %p70, %p71
      %p74 = scmp.ne.s32.totalorder %s59, %s73
      %p75 = scmp.eq.s32.totalorder %s28, 0
      %p76 = por %p74, %p75
      %s78 = sadd.s32 %s77, 1
      %p81 = scmp.eq.s32.totalorder %s22, 1
      %p82 = scmp.ne.s32.totalorder %s77, %s79
      %p83 = scmp.eq.s32.totalorder %s22, 0
      %p84 = por %p82, %p83
      %p85 = scmp.ne.s32.totalorder %s77, %s79
      %p86 = scmp.eq.s32.totalorder %s27, 1
      %p87 = por %p85, %p86
      %p88 = scmp.ne.s32.totalorder %s79, %s80
      %p89 = scmp.eq.s32.totalorder %s27, 0
      %p90 = por %p88, %p89
      %p91 = scmp.ne.s32.totalorder %s79, %s80
      %p92 = scmp.eq.s32.totalorder %s28, 1
      %p93 = por %p91, %p92
      %p95 = scmp.ne.s32.totalorder %s80, %s94
      %p96 = scmp.eq.s32.totalorder %s28, 0
      %p97 = por %p95, %p96
      %s98 = ssub.s32 %s22, %s29
      %p99 = scmp.eq.s32.totalorder %s98, 0
      %s101 = sadd.s32 %s100, 1
      %s102 = scalar_select %p99, %s100, %s101
      %p105 = pneg %p99
      %p106 = scmp.eq.s32.totalorder %s22, 1
      %p107 = por %p105, %p106
      %p108 = scmp.ne.s32.totalorder %s100, %s103
      %p109 = scmp.eq.s32.totalorder %s22, 0
      %p110 = por %p108, %p109
      %p111 = scmp.ne.s32.totalorder %s100, %s103
      %p112 = scmp.eq.s32.totalorder %s27, 1
      %p113 = por %p111, %p112
      %p114 = scmp.ne.s32.totalorder %s103, %s104
      %p115 = scmp.eq.s32.totalorder %s27, 0
      %p116 = por %p114, %p115
      %p117 = scmp.ne.s32.totalorder %s103, %s104
      %p118 = scmp.eq.s32.totalorder %s28, 1
      %p119 = por %p117, %p118
      %p121 = scmp.ne.s32.totalorder %s104, %s120
      %p122 = scmp.eq.s32.totalorder %s28, 0
      %p123 = por %p121, %p122
      %s124 = ssub.s32 %s22, %s29
      %p125 = scmp.eq.s32.totalorder %s124, 0
      %s127 = sadd.s32 %s126, 1
      %s128 = scalar_select %p125, %s126, %s127
      %p131 = pneg %p125
      %p132 = scmp.eq.s32.totalorder %s22, 1
      %p133 = por %p131, %p132
      %p134 = scmp.ne.s32.totalorder %s126, %s129
      %p135 = scmp.eq.s32.totalorder %s22, 0
      %p136 = por %p134, %p135
      %p137 = scmp.ne.s32.totalorder %s126, %s129
      %p138 = scmp.eq.s32.totalorder %s27, 1
      %p139 = por %p137, %p138
      %p140 = scmp.ne.s32.totalorder %s129, %s130
      %p141 = scmp.eq.s32.totalorder %s27, 0
      %p142 = por %p140, %p141
      %p143 = scmp.ne.s32.totalorder %s129, %s130
      %p144 = scmp.eq.s32.totalorder %s28, 1
      %p145 = por %p143, %p144
      %p147 = scmp.ne.s32.totalorder %s130, %s146
      %p148 = scmp.eq.s32.totalorder %s28, 0
      %p149 = por %p147, %p148
      %s150 = ssub.s32 %s22, %s29
      %p151 = scmp.eq.s32.totalorder %s150, 0
      %s153 = sadd.s32 %s152, 1
      %s154 = scalar_select %p151, %s152, %s153
      %p157 = pneg %p151
      %p158 = scmp.eq.s32.totalorder %s22, 1
      %p159 = por %p157, %p158
      %p160 = scmp.ne.s32.totalorder %s152, %s155
      %p161 = scmp.eq.s32.totalorder %s22, 0
      %p162 = por %p160, %p161
      %p163 = scmp.ne.s32.totalorder %s152, %s155
      %p164 = scmp.eq.s32.totalorder %s27, 1
      %p165 = por %p163, %p164
      %p166 = scmp.ne.s32.totalorder %s155, %s156
      %p167 = scmp.eq.s32.totalorder %s27, 0
      %p168 = por %p166, %p167
      %p169 = scmp.ne.s32.totalorder %s155, %s156
      %p170 = scmp.eq.s32.totalorder %s28, 1
      %p171 = por %p169, %p170
      %p173 = scmp.ne.s32.totalorder %s156, %s172
      %p174 = scmp.eq.s32.totalorder %s28, 0
      %p175 = por %p173, %p174
      %s176 = ssub.s32 %s22, %s29
      %p177 = scmp.eq.s32.totalorder %s176, 0
      %s179 = sadd.s32 %s178, 1
      %s180 = scalar_select %p177, %s178, %s179
      %p183 = pneg %p177
      %p184 = scmp.eq.s32.totalorder %s22, 1
      %p185 = por %p183, %p184
      %p186 = scmp.ne.s32.totalorder %s178, %s181
      %p187 = scmp.eq.s32.totalorder %s22, 0
      %p188 = por %p186, %p187
      %p189 = scmp.ne.s32.totalorder %s178, %s181
      %p190 = scmp.eq.s32.totalorder %s27, 1
      %p191 = por %p189, %p190
      %p192 = scmp.ne.s32.totalorder %s181, %s182
      %p193 = scmp.eq.s32.totalorder %s27, 0
      %p194 = por %p192, %p193
      %p195 = scmp.ne.s32.totalorder %s181, %s182
      %p196 = scmp.eq.s32.totalorder %s28, 1
      %p197 = por %p195, %p196
      %p199 = scmp.ne.s32.totalorder %s182, %s198
      %p200 = scmp.eq.s32.totalorder %s28, 0
      %p201 = por %p199, %p200
      %p202 = scmp.le.s32.totalorder 1, %s22
      %p203 = scmp.lt.s32.totalorder %s22, 3
      %p204 = pnand %p202, %p203
      %p205 = pneg %p204
      // Predicated region
      $region9: #{tpu_custom_call.1} parent=5 // pred_check
        _
      $region10: #{tpu_custom_call.1} parent=5 // pred_check_branch
        %207 = sbr.rel (%p204) target = $region12
      $region11: #{tpu_custom_call.1} parent=5 // pred_region
        %s208 = ssub.s32 %s22, 1
        // Predicated region
        $region13: #{tpu_custom_call.1} parent=11 // pred_check
          %p209 = pneg %p69
        $region14: #{tpu_custom_call.1} parent=11 // pred_check_branch
          %211 = sbr.rel (%p209) target = $region16
        $region15: #{tpu_custom_call.1} parent=11 // pred_region
          _
        $region16: #{tpu_custom_call.1} parent=11 // pred_fallthru
          _
        // Predicated region
        $region17: #{tpu_custom_call.1} parent=11 // pred_check
          %p212 = pneg %p90
        $region18: #{tpu_custom_call.1} parent=11 // pred_check_branch
          %214 = sbr.rel (%p212) target = $region20
        $region19: #{tpu_custom_call.1} parent=11 // pred_region
          _
        $region20: #{tpu_custom_call.1} parent=11 // pred_fallthru
          _
      $region12: #{tpu_custom_call.1} parent=5 // pred_fallthru
        _
      %p215 = scmp.lt.s32.totalorder %s22, 2
      // Predicated region
      $region21: #{tpu_custom_call.1} parent=5 // pred_check
        %p216 = pneg %p215
      $region22: #{tpu_custom_call.1} parent=5 // pred_check_branch
        %218 = sbr.rel (%p216) target = $region24
      $region23: #{tpu_custom_call.1} parent=5 // pred_region
        // Predicated region
        $region25: #{tpu_custom_call.1} parent=23 // pred_check
          %p219 = pneg %p42
        $region26: #{tpu_custom_call.1} parent=23 // pred_check_branch
          %221 = sbr.rel (%p219) target = $region28
        $region27: #{tpu_custom_call.1} parent=23 // pred_region
          %p222 = scmp.lt.s32.totalorder %s22, 1
          %s223 = scalar_select %p222, %s22, 1
          %s224 = smul.addr %s223, 54
          %s225 = smul.addr %s224, 4
          %s226 = scalar_lea.vmem %s0, %s225
        $region28: #{tpu_custom_call.1} parent=23 // pred_fallthru
          _
      $region24: #{tpu_custom_call.1} parent=5 // pred_fallthru
        _
      %p227 = scmp.le.s32.totalorder 1, %s22
      %p228 = scmp.lt.s32.totalorder %s22, 3
      %p229 = pnand %p227, %p228
      %p230 = pneg %p229
      // Predicated region
      $region29: #{tpu_custom_call.1} parent=5 // pred_check
        _
      $region30: #{tpu_custom_call.1} parent=5 // pred_check_branch
        %232 = sbr.rel (%p229) target = $region32
      $region31: #{tpu_custom_call.1} parent=5 // pred_region
        %s233 = ssub.s32 %s22, 1
        %p234 = scmp.lt.s32.totalorder %s27, 1
        %s235 = scalar_select %p234, %s27, 1
        %s236 = smul.addr %s235, 54
        %s237 = smul.addr %s236, 4
        %s238 = scalar_lea.vmem %s0, %s237
        %p239 = pneg %p48
        %p240 = pneg %p45
        %p241 = pneg %p69
        %p242 = pneg %p66
        %p243 = pneg %p90
        %p244 = pneg %p87
        %p245 = pneg %p116
        %p246 = pneg %p113
        %s247 = sand.u32 %s103, 1
        %s248 = scalar_lea.sflag [#allocation3], %s247
        %s249 = sand.u32 %s103, 1
        %s250 = smul.addr %s249, 128
        %s251 = scalar_lea.vmem [#allocation2], %s250
        %p252 = pneg %p142
        %p253 = pneg %p139
        %s254 = sand.u32 %s27, 1
        %s255 = scalar_lea.sflag [#allocation5], %s254
        %s256 = sand.u32 %s129, 1
        %s257 = smul.addr %s256, 2
        %s258 = scalar_lea.vmem [#allocation4], %s257
        %p259 = pneg %p168
        %p260 = pneg %p165
        %s261 = sand.u32 %s27, 1
        %s262 = scalar_lea.sflag [#allocation5], %s261
        %s263 = sand.u32 %s155, 1
        %s264 = smul.addr %s263, 128
        %s265 = scalar_lea.vmem [#allocation6], %s264
        %p266 = pneg %p194
        %p267 = pneg %p191
        %s268 = sand.u32 %s181, 1
        %s269 = scalar_lea.sflag [#allocation8], %s268
        %s270 = sand.u32 %s181, 1
        %s271 = smul.addr %s270, 2
        %s272 = scalar_lea.vmem [#allocation7], %s271
        %p273 = scmp.lt.s32.totalorder %s27, 1
        %s274 = scalar_select %p273, %s27, 1
        %s275 = smul.addr %s274, 54
        %s276 = smul.addr %s275, 4
        %s277 = scalar_lea.vmem %s0, %s276
        %v279 = vld [vmem:[%s277] sm:$0xf]
        %v280 = vld [vmem:[%s277 + $0x4] sm:$0xf]
        %v281 = vld [vmem:[%s277 + $0x8] sm:$0x1]
        %v282 = vld [vmem:[%s277 + $0xc] sm:$0xf]
        %v283 = vld [vmem:[%s277 + $0x10] sm:$0xf]
        %v284 = vld [vmem:[%s277 + $0x14] sm:$0x1]
        %v285 = vld [vmem:[%s277 + $0x18] sm:$0xf]
        %v286 = vld [vmem:[%s277 + $0x1c] sm:$0xf]
        %v287 = vld [vmem:[%s277 + $0x20] sm:$0x1]
        %v288 = vld [vmem:[%s277 + $0x24] sm:$0xf]
        %v289 = vld [vmem:[%s277 + $0x28] sm:$0xf]
        %v290 = vld [vmem:[%s277 + $0x2c] sm:$0x1]
        %v291 = vld [vmem:[%s277 + $0x30] sm:$0xf]
        %v292 = vld [vmem:[%s277 + $0x34] sm:$0xf]
        %v293 = vld [vmem:[%s277 + $0x38] sm:$0x1]
        %v294 = vld [vmem:[%s277 + $0x3c] sm:$0xf]
        %v295 = vld [vmem:[%s277 + $0x40] sm:$0xf]
        %v296 = vld [vmem:[%s277 + $0x44] sm:$0x1]
        %v297 = vld [vmem:[%s277 + $0x48] sm:$0xf]
        %v298 = vld [vmem:[%s277 + $0x4c] sm:$0xf]
        %v299 = vld [vmem:[%s277 + $0x50] sm:$0x1]
        %v300 = vld [vmem:[%s277 + $0x54] sm:$0xf]
        %v301 = vld [vmem:[%s277 + $0x58] sm:$0xf]
        %v302 = vld [vmem:[%s277 + $0x5c] sm:$0x1]
        %v303 = vld [vmem:[%s277 + $0x60] sm:$0xf]
        %v304 = vld [vmem:[%s277 + $0x64] sm:$0xf]
        %v305 = vld [vmem:[%s277 + $0x68] sm:$0x1]
        %v306 = vld [vmem:[%s277 + $0x6c] sm:$0xf]
        %v307 = vld [vmem:[%s277 + $0x70] sm:$0xf]
        %v308 = vld [vmem:[%s277 + $0x74] sm:$0x1]
        %v309 = vld [vmem:[%s277 + $0x78] sm:$0xf]
        %v310 = vld [vmem:[%s277 + $0x7c] sm:$0xf]
        %v311 = vld [vmem:[%s277 + $0x80] sm:$0x1]
        %v312 = vld [vmem:[%s277 + $0x84] sm:$0xf]
        %v313 = vld [vmem:[%s277 + $0x88] sm:$0xf]
        %v314 = vld [vmem:[%s277 + $0x8c] sm:$0x1]
        %v315 = vld [vmem:[%s277 + $0x90] sm:$0xf]
        %v316 = vld [vmem:[%s277 + $0x94] sm:$0xf]
        %v317 = vld [vmem:[%s277 + $0x98] sm:$0x1]
        %v318 = vld [vmem:[%s277 + $0x9c] sm:$0xf]
        %v319 = vld [vmem:[%s277 + $0xa0] sm:$0xf]
        %v320 = vld [vmem:[%s277 + $0xa4] sm:$0x1]
        %v321 = vld [vmem:[%s277 + $0xa8] sm:$0xf]
        %v322 = vld [vmem:[%s277 + $0xac] sm:$0xf]
        %v323 = vld [vmem:[%s277 + $0xb0] sm:$0x1]
        %v324 = vld [vmem:[%s277 + $0xb4] sm:$0xf]
        %v325 = vld [vmem:[%s277 + $0xb8] sm:$0xf]
        %v326 = vld [vmem:[%s277 + $0xbc] sm:$0x1]
        %v327 = vld [vmem:[%s277 + $0xc0] sm:$0xf]
        %v328 = vld [vmem:[%s277 + $0xc4] sm:$0xf]
        %v329 = vld [vmem:[%s277 + $0xc8] sm:$0x1]
        %v330 = vld [vmem:[%s277 + $0xcc] sm:$0xf]
        %v331 = vld [vmem:[%s277 + $0xd0] sm:$0xf]
        %v332 = vld [vmem:[%s277 + $0xd4] sm:$0x1]
        %v365 = vunpack.c.l.b16 %v279
        %v366 = vunpack.c.l.b16 %v280
        %v367 = vunpack.c.l.b16 %v282
        %v368 = vunpack.c.l.b16 %v283
        %v369 = vunpack.c.l.b16 %v285
        %v370 = vunpack.c.l.b16 %v286
        %v371 = vunpack.c.l.b16 %v288
        %v372 = vunpack.c.l.b16 %v289
        %v373 = vunpack.c.l.b16 %v291
        %v374 = vunpack.c.l.b16 %v292
        %v375 = vunpack.c.l.b16 %v294
        %v376 = vunpack.c.l.b16 %v295
        %v377 = vunpack.c.l.b16 %v297
        %v378 = vunpack.c.l.b16 %v298
        %v379 = vunpack.c.l.b16 %v300
        %v380 = vunpack.c.l.b16 %v301
        %v381 = vunpack.c.l.b16 %v303
        %v382 = vunpack.c.l.b16 %v304
        %v383 = vunpack.c.l.b16 %v306
        %v384 = vunpack.c.l.b16 %v307
        %v385 = vunpack.c.l.b16 %v309
        %v386 = vunpack.c.l.b16 %v310
        %v387 = vunpack.c.l.b16 %v312
        %v388 = vunpack.c.l.b16 %v313
        %v389 = vunpack.c.l.b16 %v315
        %v390 = vunpack.c.l.b16 %v316
        %v391 = vunpack.c.l.b16 %v318
        %v392 = vunpack.c.l.b16 %v319
        %v393 = vunpack.c.l.b16 %v321
        %v394 = vunpack.c.l.b16 %v322
        %v395 = vunpack.c.l.b16 %v324
        %v396 = vunpack.c.l.b16 %v325
        %v397 = vpack.c.b16 %v366, %v365
        %v398 = vpack.c.b16 %v368, %v367
        %v399 = vpack.c.b16 %v370, %v369
        %v400 = vpack.c.b16 %v372, %v371
        %v401 = vpack.c.b16 %v374, %v373
        %v402 = vpack.c.b16 %v376, %v375
        %v403 = vpack.c.b16 %v378, %v377
        %v404 = vpack.c.b16 %v380, %v379
        %v405 = vpack.c.b16 %v382, %v381
        %v406 = vpack.c.b16 %v384, %v383
        %v407 = vpack.c.b16 %v386, %v385
        %v408 = vpack.c.b16 %v388, %v387
        %v409 = vpack.c.b16 %v390, %v389
        %v410 = vpack.c.b16 %v392, %v391
        %v411 = vpack.c.b16 %v394, %v393
        %v412 = vpack.c.b16 %v396, %v395
        %v445 = vunpack.c.l.b16 %v281
        %v446 = vunpack.c.l.b16 %v284
        %v447 = vunpack.c.l.b16 %v287
        %v448 = vunpack.c.l.b16 %v290
        %v449 = vunpack.c.l.b16 %v293
        %v450 = vunpack.c.l.b16 %v296
        %v451 = vunpack.c.l.b16 %v299
        %v452 = vunpack.c.l.b16 %v302
        %v453 = vunpack.c.l.b16 %v305
        %v454 = vunpack.c.l.b16 %v308
        %v455 = vunpack.c.l.b16 %v311
        %v456 = vunpack.c.l.b16 %v314
        %v457 = vunpack.c.l.b16 %v317
        %v458 = vunpack.c.l.b16 %v320
        %v459 = vunpack.c.l.b16 %v323
        %v460 = vunpack.c.l.b16 %v326
        %v461 = vpack.c.b16 %v445, %v445
        %v462 = vpack.c.b16 %v446, %v446
        %v463 = vpack.c.b16 %v447, %v447
        %v464 = vpack.c.b16 %v448, %v448
        %v465 = vpack.c.b16 %v449, %v449
        %v466 = vpack.c.b16 %v450, %v450
        %v467 = vpack.c.b16 %v451, %v451
        %v468 = vpack.c.b16 %v452, %v452
        %v469 = vpack.c.b16 %v453, %v453
        %v470 = vpack.c.b16 %v454, %v454
        %v471 = vpack.c.b16 %v455, %v455
        %v472 = vpack.c.b16 %v456, %v456
        %v473 = vpack.c.b16 %v457, %v457
        %v474 = vpack.c.b16 %v458, %v458
        %v475 = vpack.c.b16 %v459, %v459
        %v476 = vpack.c.b16 %v460, %v460
        %vm477 = vsmask.f32 7424
        %v479 = vshrl.u32 %v397, 16
        %v481 = vshll.u32 %v397, 16
        %v483 = vrot.slane %v481, 1
        %v484 = vor.u32 %v479, %v483
        %v486 = vshll.u32 %v461, 16
        %v488 = vrot.slane %v486, 1
        %v489 = vsel %vm477, %v484, %v488
        %v491 = vshrl.u32 %v398, 16
        %v493 = vshll.u32 %v398, 16
        %v495 = vrot.slane %v493, 1
        %v496 = vor.u32 %v491, %v495
        %v498 = vshll.u32 %v462, 16
        %v500 = vrot.slane %v498, 1
        %v501 = vsel %vm477, %v496, %v500
        %v503 = vshrl.u32 %v399, 16
        %v505 = vshll.u32 %v399, 16
        %v507 = vrot.slane %v505, 1
        %v508 = vor.u32 %v503, %v507
        %v510 = vshll.u32 %v463, 16
        %v512 = vrot.slane %v510, 1
        %v513 = vsel %vm477, %v508, %v512
        %v515 = vshrl.u32 %v400, 16
        %v517 = vshll.u32 %v400, 16
        %v519 = vrot.slane %v517, 1
        %v520 = vor.u32 %v515, %v519
        %v522 = vshll.u32 %v464, 16
        %v524 = vrot.slane %v522, 1
        %v525 = vsel %vm477, %v520, %v524
        %v527 = vshrl.u32 %v401, 16
        %v529 = vshll.u32 %v401, 16
        %v531 = vrot.slane %v529, 1
        %v532 = vor.u32 %v527, %v531
        %v534 = vshll.u32 %v465, 16
        %v536 = vrot.slane %v534, 1
        %v537 = vsel %vm477, %v532, %v536
        %v539 = vshrl.u32 %v402, 16
        %v541 = vshll.u32 %v402, 16
        %v543 = vrot.slane %v541, 1
        %v544 = vor.u32 %v539, %v543
        %v546 = vshll.u32 %v466, 16
        %v548 = vrot.slane %v546, 1
        %v549 = vsel %vm477, %v544, %v548
        %v551 = vshrl.u32 %v403, 16
        %v553 = vshll.u32 %v403, 16
        %v555 = vrot.slane %v553, 1
        %v556 = vor.u32 %v551, %v555
        %v558 = vshll.u32 %v467, 16
        %v560 = vrot.slane %v558, 1
        %v561 = vsel %vm477, %v556, %v560
        %v563 = vshrl.u32 %v404, 16
        %v565 = vshll.u32 %v404, 16
        %v567 = vrot.slane %v565, 1
        %v568 = vor.u32 %v563, %v567
        %v570 = vshll.u32 %v468, 16
        %v572 = vrot.slane %v570, 1
        %v573 = vsel %vm477, %v568, %v572
        %v575 = vshrl.u32 %v405, 16
        %v577 = vshll.u32 %v405, 16
        %v579 = vrot.slane %v577, 1
        %v580 = vor.u32 %v575, %v579
        %v582 = vshll.u32 %v469, 16
        %v584 = vrot.slane %v582, 1
        %v585 = vsel %vm477, %v580, %v584
        %v587 = vshrl.u32 %v406, 16
        %v589 = vshll.u32 %v406, 16
        %v591 = vrot.slane %v589, 1
        %v592 = vor.u32 %v587, %v591
        %v594 = vshll.u32 %v470, 16
        %v596 = vrot.slane %v594, 1
        %v597 = vsel %vm477, %v592, %v596
        %v599 = vshrl.u32 %v407, 16
        %v601 = vshll.u32 %v407, 16
        %v603 = vrot.slane %v601, 1
        %v604 = vor.u32 %v599, %v603
        %v606 = vshll.u32 %v471, 16
        %v608 = vrot.slane %v606, 1
        %v609 = vsel %vm477, %v604, %v608
        %v611 = vshrl.u32 %v408, 16
        %v613 = vshll.u32 %v408, 16
        %v615 = vrot.slane %v613, 1
        %v616 = vor.u32 %v611, %v615
        %v618 = vshll.u32 %v472, 16
        %v620 = vrot.slane %v618, 1
        %v621 = vsel %vm477, %v616, %v620
        %v623 = vshrl.u32 %v409, 16
        %v625 = vshll.u32 %v409, 16
        %v627 = vrot.slane %v625, 1
        %v628 = vor.u32 %v623, %v627
        %v630 = vshll.u32 %v473, 16
        %v632 = vrot.slane %v630, 1
        %v633 = vsel %vm477, %v628, %v632
        %v635 = vshrl.u32 %v410, 16
        %v637 = vshll.u32 %v410, 16
        %v639 = vrot.slane %v637, 1
        %v640 = vor.u32 %v635, %v639
        %v642 = vshll.u32 %v474, 16
        %v644 = vrot.slane %v642, 1
        %v645 = vsel %vm477, %v640, %v644
        %v647 = vshrl.u32 %v411, 16
        %v649 = vshll.u32 %v411, 16
        %v651 = vrot.slane %v649, 1
        %v652 = vor.u32 %v647, %v651
        %v654 = vshll.u32 %v475, 16
        %v656 = vrot.slane %v654, 1
        %v657 = vsel %vm477, %v652, %v656
        %v659 = vshrl.u32 %v412, 16
        %v661 = vshll.u32 %v412, 16
        %v663 = vrot.slane %v661, 1
        %v664 = vor.u32 %v659, %v663
        %v666 = vshll.u32 %v476, 16
        %v668 = vrot.slane %v666, 1
        %v669 = vsel %vm477, %v664, %v668
        %vm686 = vcmask 1046528
        %v687 = vrot.slane %v397, 1
        %v688 = vrot.slane %v461, 1
        %v689 = vsel %vm686, %v687, %v688
        %v690 = vrot.slane %v398, 1
        %v691 = vrot.slane %v462, 1
        %v692 = vsel %vm686, %v690, %v691
        %v693 = vrot.slane %v399, 1
        %v694 = vrot.slane %v463, 1
        %v695 = vsel %vm686, %v693, %v694
        %v696 = vrot.slane %v400, 1
        %v697 = vrot.slane %v464, 1
        %v698 = vsel %vm686, %v696, %v697
        %v699 = vrot.slane %v401, 1
        %v700 = vrot.slane %v465, 1
        %v701 = vsel %vm686, %v699, %v700
        %v702 = vrot.slane %v402, 1
        %v703 = vrot.slane %v466, 1
        %v704 = vsel %vm686, %v702, %v703
        %v705 = vrot.slane %v403, 1
        %v706 = vrot.slane %v467, 1
        %v707 = vsel %vm686, %v705, %v706
        %v708 = vrot.slane %v404, 1
        %v709 = vrot.slane %v468, 1
        %v710 = vsel %vm686, %v708, %v709
        %v711 = vrot.slane %v405, 1
        %v712 = vrot.slane %v469, 1
        %v713 = vsel %vm686, %v711, %v712
        %v714 = vrot.slane %v406, 1
        %v715 = vrot.slane %v470, 1
        %v716 = vsel %vm686, %v714, %v715
        %v717 = vrot.slane %v407, 1
        %v718 = vrot.slane %v471, 1
        %v719 = vsel %vm686, %v717, %v718
        %v720 = vrot.slane %v408, 1
        %v721 = vrot.slane %v472, 1
        %v722 = vsel %vm686, %v720, %v721
        %v723 = vrot.slane %v409, 1
        %v724 = vrot.slane %v473, 1
        %v725 = vsel %vm686, %v723, %v724
        %v726 = vrot.slane %v410, 1
        %v727 = vrot.slane %v474, 1
        %v728 = vsel %vm686, %v726, %v727
        %v729 = vrot.slane %v411, 1
        %v730 = vrot.slane %v475, 1
        %v731 = vsel %vm686, %v729, %v730
        %v732 = vrot.slane %v412, 1
        %v733 = vrot.slane %v476, 1
        %v734 = vsel %vm686, %v732, %v733
        %v751 = vld [vmem:[%s1] sm:$0xf]
        %v752 = vld [vmem:[%s1 + $0x4] sm:$0xf]
        %v753 = vld [vmem:[%s1 + $0x8] sm:$0xf]
        %v754 = vld [vmem:[%s1 + $0xc] sm:$0xf]
        %v755 = vld [vmem:[%s1 + $0x10] sm:$0xf]
        %v756 = vld [vmem:[%s1 + $0x14] sm:$0xf]
        %v757 = vld [vmem:[%s1 + $0x18] sm:$0xf]
        %v758 = vld [vmem:[%s1 + $0x1c] sm:$0xf]
        %v759 = vld [vmem:[%s1 + $0x20] sm:$0xf]
        %v760 = vld [vmem:[%s1 + $0x24] sm:$0xf]
        %v761 = vld [vmem:[%s1 + $0x28] sm:$0xf]
        %v762 = vld [vmem:[%s1 + $0x2c] sm:$0xf]
        %v763 = vld [vmem:[%s1 + $0x30] sm:$0xf]
        %v764 = vld [vmem:[%s1 + $0x34] sm:$0xf]
        %v765 = vld [vmem:[%s1 + $0x38] sm:$0xf]
        %v766 = vld [vmem:[%s1 + $0x3c] sm:$0xf]
        %v767 = vld [vmem:[%s1 + $0x40] sm:$0xf]
        %v768 = vld [vmem:[%s1 + $0x44] sm:$0xf]
        %v769 = vld [vmem:[%s1 + $0x48] sm:$0xf]
        %v770 = vld [vmem:[%s1 + $0x4c] sm:$0xf]
        %v771 = vld [vmem:[%s1 + $0x50] sm:$0xf]
        %v772 = vld [vmem:[%s1 + $0x54] sm:$0xf]
        %v773 = vld [vmem:[%s1 + $0x58] sm:$0xf]
        %v774 = vld [vmem:[%s1 + $0x5c] sm:$0xf]
        %v775 = vld [vmem:[%s1 + $0x60] sm:$0xf]
        %v776 = vld [vmem:[%s1 + $0x64] sm:$0xf]
        %v777 = vld [vmem:[%s1 + $0x68] sm:$0xf]
        %v778 = vld [vmem:[%s1 + $0x6c] sm:$0xf]
        %v779 = vld [vmem:[%s1 + $0x70] sm:$0xf]
        %v780 = vld [vmem:[%s1 + $0x74] sm:$0xf]
        %v781 = vld [vmem:[%s1 + $0x78] sm:$0xf]
        %v782 = vld [vmem:[%s1 + $0x7c] sm:$0xf]
        %v783 = vld [vmem:[%s1 + $0x80] sm:$0xf]
        %v784 = vld [vmem:[%s1 + $0x84] sm:$0xf]
        %v785 = vld [vmem:[%s1 + $0x88] sm:$0xf]
        %v786 = vld [vmem:[%s1 + $0x8c] sm:$0xf]
        %v787 = vld [vmem:[%s1 + $0x90] sm:$0xf]
        %v788 = vld [vmem:[%s1 + $0x94] sm:$0xf]
        %v789 = vld [vmem:[%s1 + $0x98] sm:$0xf]
        %v790 = vld [vmem:[%s1 + $0x9c] sm:$0xf]
        %v791 = vld [vmem:[%s1 + $0xa0] sm:$0xf]
        %v792 = vld [vmem:[%s1 + $0xa4] sm:$0xf]
        %v793 = vld [vmem:[%s1 + $0xa8] sm:$0xf]
        %v794 = vld [vmem:[%s1 + $0xac] sm:$0xf]
        %v795 = vld [vmem:[%s1 + $0xb0] sm:$0xf]
        %v796 = vld [vmem:[%s1 + $0xb4] sm:$0xf]
        %v797 = vld [vmem:[%s1 + $0xb8] sm:$0xf]
        %v798 = vld [vmem:[%s1 + $0xbc] sm:$0xf]
        %v801 = vunpack.c.l.b16 %v327
        %v802 = vunpack.c.l.b16 %v328
        %v803 = vpack.c.b16 %v802, %v801
        %v806 = vunpack.c.l.b16 %v329
        %v807 = vpack.c.b16 %v806, %v806
        %v809 = vshrl.u32 %v803, 16
        %v811 = vshll.u32 %v803, 16
        %v813 = vrot.slane %v811, 1
        %v814 = vor.u32 %v809, %v813
        %v816 = vshll.u32 %v807, 16
        %v818 = vrot.slane %v816, 1
        %v819 = vsel %vm477, %v814, %v818
        %v821 = vrot.slane %v803, 1
        %v822 = vrot.slane %v807, 1
        %v823 = vsel %vm686, %v821, %v822
        %v825 = vld [vmem:[%s1 + $0xc0] sm:$0xf]
        %v826 = vld [vmem:[%s1 + $0xc4] sm:$0xf]
        %v827 = vld [vmem:[%s1 + $0xc8] sm:$0xf]
        %v828 = vld [vmem:[%s1 + $0xcc] sm:$0xf]
        %v829 = vld [vmem:[%s1 + $0xd0] sm:$0xf]
        %v830 = vld [vmem:[%s1 + $0xd4] sm:$0xf]
        %v831 = vld [vmem:[%s1 + $0xd8] sm:$0xf]
        %v832 = vld [vmem:[%s1 + $0xdc] sm:$0xf]
        %v833 = vld [vmem:[%s1 + $0xe0] sm:$0xf]
        %v834 = vld [vmem:[%s1 + $0xe4] sm:$0xf]
        %v835 = vld [vmem:[%s1 + $0xe8] sm:$0xf]
        %v836 = vld [vmem:[%s1 + $0xec] sm:$0xf]
        %v837 = vld [vmem:[%s1 + $0xf0] sm:$0xf]
        %v838 = vld [vmem:[%s1 + $0xf4] sm:$0xf]
        %v839 = vld [vmem:[%s1 + $0xf8] sm:$0xf]
        %v840 = vld [vmem:[%s1 + $0xfc] sm:$0xf]
        %v841 = vld [vmem:[%s1 + $0x100] sm:$0xf]
        %v842 = vld [vmem:[%s1 + $0x104] sm:$0xf]
        %v843 = vld [vmem:[%s1 + $0x108] sm:$0xf]
        %v844 = vld [vmem:[%s1 + $0x10c] sm:$0xf]
        %v845 = vld [vmem:[%s1 + $0x110] sm:$0xf]
        %v846 = vld [vmem:[%s1 + $0x114] sm:$0xf]
        %v847 = vld [vmem:[%s1 + $0x118] sm:$0xf]
        %v848 = vld [vmem:[%s1 + $0x11c] sm:$0xf]
        %v849 = vld [vmem:[%s1 + $0x120] sm:$0xf]
        %v850 = vld [vmem:[%s1 + $0x124] sm:$0xf]
        %v851 = vld [vmem:[%s1 + $0x128] sm:$0xf]
        %v852 = vld [vmem:[%s1 + $0x12c] sm:$0xf]
        %v853 = vld [vmem:[%s1 + $0x130] sm:$0xf]
        %v854 = vld [vmem:[%s1 + $0x134] sm:$0xf]
        %v855 = vld [vmem:[%s1 + $0x138] sm:$0xf]
        %v856 = vld [vmem:[%s1 + $0x13c] sm:$0xf]
        %v857 = vld [vmem:[%s1 + $0x140] sm:$0xf]
        %v858 = vld [vmem:[%s1 + $0x144] sm:$0xf]
        %v859 = vld [vmem:[%s1 + $0x148] sm:$0xf]
        %v860 = vld [vmem:[%s1 + $0x14c] sm:$0xf]
        %v861 = vld [vmem:[%s1 + $0x150] sm:$0xf]
        %v862 = vld [vmem:[%s1 + $0x154] sm:$0xf]
        %v863 = vld [vmem:[%s1 + $0x158] sm:$0xf]
        %v864 = vld [vmem:[%s1 + $0x15c] sm:$0xf]
        %v865 = vld [vmem:[%s1 + $0x160] sm:$0xf]
        %v866 = vld [vmem:[%s1 + $0x164] sm:$0xf]
        %v867 = vld [vmem:[%s1 + $0x168] sm:$0xf]
        %v868 = vld [vmem:[%s1 + $0x16c] sm:$0xf]
        %v869 = vld [vmem:[%s1 + $0x170] sm:$0xf]
        %v870 = vld [vmem:[%s1 + $0x174] sm:$0xf]
        %v871 = vld [vmem:[%s1 + $0x178] sm:$0xf]
        %v872 = vld [vmem:[%s1 + $0x17c] sm:$0xf]
        %v921 = vunpack.c.l.b16 %v825
        %v922 = vunpack.c.l.b16 %v826
        %v923 = vunpack.c.l.b16 %v827
        %v924 = vunpack.c.l.b16 %v828
        %v925 = vunpack.c.l.b16 %v829
        %v926 = vunpack.c.l.b16 %v830
        %v927 = vunpack.c.l.b16 %v831
        %v928 = vunpack.c.l.b16 %v832
        %v929 = vunpack.c.l.b16 %v833
        %v930 = vunpack.c.l.b16 %v834
        %v931 = vunpack.c.l.b16 %v835
        %v932 = vunpack.c.l.b16 %v836
        %v933 = vunpack.c.l.b16 %v837
        %v934 = vunpack.c.l.b16 %v838
        %v935 = vunpack.c.l.b16 %v839
        %v936 = vunpack.c.l.b16 %v840
        %v937 = vunpack.c.l.b16 %v841
        %v938 = vunpack.c.l.b16 %v842
        %v939 = vunpack.c.l.b16 %v843
        %v940 = vunpack.c.l.b16 %v844
        %v941 = vunpack.c.l.b16 %v845
        %v942 = vunpack.c.l.b16 %v846
        %v943 = vunpack.c.l.b16 %v847
        %v944 = vunpack.c.l.b16 %v848
        %v945 = vunpack.c.l.b16 %v849
        %v946 = vunpack.c.l.b16 %v850
        %v947 = vunpack.c.l.b16 %v851
        %v948 = vunpack.c.l.b16 %v852
        %v949 = vunpack.c.l.b16 %v853
        %v950 = vunpack.c.l.b16 %v854
        %v951 = vunpack.c.l.b16 %v855
        %v952 = vunpack.c.l.b16 %v856
        %v953 = vunpack.c.l.b16 %v857
        %v954 = vunpack.c.l.b16 %v858
        %v955 = vunpack.c.l.b16 %v859
        %v956 = vunpack.c.l.b16 %v860
        %v957 = vunpack.c.l.b16 %v861
        %v958 = vunpack.c.l.b16 %v862
        %v959 = vunpack.c.l.b16 %v863
        %v960 = vunpack.c.l.b16 %v864
        %v961 = vunpack.c.l.b16 %v865
        %v962 = vunpack.c.l.b16 %v866
        %v963 = vunpack.c.l.b16 %v867
        %v964 = vunpack.c.l.b16 %v868
        %v965 = vunpack.c.l.b16 %v869
        %v966 = vunpack.c.l.b16 %v870
        %v967 = vunpack.c.l.b16 %v871
        %v968 = vunpack.c.l.b16 %v872
        %v969 = vpack.c.b16 %v922, %v921
        %v970 = vpack.c.b16 %v924, %v923
        %v971 = vpack.c.b16 %v926, %v925
        %v972 = vpack.c.b16 %v928, %v927
        %v973 = vpack.c.b16 %v930, %v929
        %v974 = vpack.c.b16 %v932, %v931
        %v975 = vpack.c.b16 %v934, %v933
        %v976 = vpack.c.b16 %v936, %v935
        %v977 = vpack.c.b16 %v938, %v937
        %v978 = vpack.c.b16 %v940, %v939
        %v979 = vpack.c.b16 %v942, %v941
        %v980 = vpack.c.b16 %v944, %v943
        %v981 = vpack.c.b16 %v946, %v945
        %v982 = vpack.c.b16 %v948, %v947
        %v983 = vpack.c.b16 %v950, %v949
        %v984 = vpack.c.b16 %v952, %v951
        %v985 = vpack.c.b16 %v954, %v953
        %v986 = vpack.c.b16 %v956, %v955
        %v987 = vpack.c.b16 %v958, %v957
        %v988 = vpack.c.b16 %v960, %v959
        %v989 = vpack.c.b16 %v962, %v961
        %v990 = vpack.c.b16 %v964, %v963
        %v991 = vpack.c.b16 %v966, %v965
        %v992 = vpack.c.b16 %v968, %v967
        %1017 = vmatprep.subr.bf16.mxu0 0
        %1018 = vmatpush1.bf16.msra.mxu0 %v969
        %1019 = vmatprep.subr.bf16.mxu0 0
        %1020 = vmatpush1.bf16.msra.mxu0 %v970
        %1021 = vmatprep.subr.bf16.mxu0 0
        %1022 = vmatpush1.bf16.msra.mxu0 %v971
        %1023 = vmatprep.subr.bf16.mxu0 0
        %1024 = vmatpush1.bf16.msra.mxu0 %v972
        %1025 = vmatprep.subr.bf16.mxu0 0
        %1026 = vmatpush1.bf16.msra.mxu0 %v973
        %1027 = vmatprep.subr.bf16.mxu0 0
        %1028 = vmatpush1.bf16.msra.mxu0 %v974
        %1029 = vmatprep.subr.bf16.mxu0 0
        %1030 = vmatpush1.bf16.msra.mxu0 %v975
        %1031 = vmatprep.subr.bf16.mxu0 0
        %1032 = vmatpush1.bf16.msra.mxu0 %v976
        %1033 = vmatprep.subr.bf16.mxu0 0
        %1034 = vmatpush1.bf16.msra.mxu0 %v977
        %1035 = vmatprep.subr.bf16.mxu0 0
        %1036 = vmatpush1.bf16.msra.mxu0 %v978
        %1037 = vmatprep.subr.bf16.mxu0 0
        %1038 = vmatpush1.bf16.msra.mxu0 %v979
        %1039 = vmatprep.subr.bf16.mxu0 0
        %1040 = vmatpush1.bf16.msra.mxu0 %v980
        %1041 = vmatprep.subr.bf16.mxu0 0
        %1042 = vmatpush1.bf16.msra.mxu0 %v981
        %1043 = vmatprep.subr.bf16.mxu0 0
        %1044 = vmatpush1.bf16.msra.mxu0 %v982
        %1045 = vmatprep.subr.bf16.mxu0 0
        %1046 = vmatpush1.bf16.msra.mxu0 %v983
        %1047 = vmatprep.subr.bf16.mxu0 0
        %1048 = vmatpush1.bf16.msra.mxu0 %v984
        %1049 = vmatprep.mubr.bf16.mxu0 %v501
        %1050 = vmatmul.mubr.bf16.gmra.mrb[0].mxu0 %v398
        %v1051 = vpop.f32.mrb[0].mxu0
        %v1052 = vadd.f32 0.0, %v1051
        %v1053 = vpop.f32.mrb[0].mxu0
        %v1054 = vpop.f32.mrb[0].mxu0
        %v1055 = vadd.f32 0.0, %v1054
        %v1056 = vpop.f32.mrb[0].mxu0
        %1057 = vmatprep.mubr.bf16.mxu0 %v513
        %1058 = vmatmul.mubr.bf16.gmra.mrb[0].mxu0 %v399
        %v1059 = vpop.f32.mrb[0].mxu0
        %v1060 = vadd.f32 0.0, %v1059
        %v1061 = vpop.f32.mrb[0].mxu0
        %v1062 = vpop.f32.mrb[0].mxu0
        %v1063 = vadd.f32 0.0, %v1062
        %v1064 = vpop.f32.mrb[0].mxu0
        %1065 = vmatprep.mubr.bf16.mxu0 %v525
        %1066 = vmatmul.mubr.bf16.gmra.mrb[0].mxu0 %v400
        %v1067 = vpop.f32.mrb[0].mxu0
        %v1068 = vadd.f32 0.0, %v1067
        %v1069 = vpop.f32.mrb[0].mxu0
        %v1070 = vpop.f32.mrb[0].mxu0
        %v1071 = vadd.f32 0.0, %v1070
        %v1072 = vpop.f32.mrb[0].mxu0
        %1073 = vmatprep.mubr.bf16.mxu0 %v537
        %1074 = vmatmul.mubr.bf16.gmra.mrb[0].mxu0 %v401
        %v1075 = vpop.f32.mrb[0].mxu0
        %v1076 = vadd.f32 0.0, %v1075
        %v1077 = vpop.f32.mrb[0].mxu0
        %v1078 = vpop.f32.mrb[0].mxu0
        %v1079 = vadd.f32 0.0, %v1078
        %v1080 = vpop.f32.mrb[0].mxu0
        %1081 = vmatprep.mubr.bf16.mxu0 %v549
        %1082 = vmatmul.mubr.bf16.gmra.mrb[0].mxu0 %v402
        %v1083 = vpop.f32.mrb[0].mxu0
        %v1084 = vadd.f32 0.0, %v1083
        %v1085 = vpop.f32.mrb[0].mxu0
        %v1086 = vpop.f32.mrb[0].mxu0
        %v1087 = vadd.f32 0.0, %v1086
        %v1088 = vpop.f32.mrb[0].mxu0
        %1089 = vmatprep.mubr.bf16.mxu0 %v561
        %1090 = vmatmul.mubr.bf16.gmra.mrb[0].mxu0 %v403
        %v1091 = vpop.f32.mrb[0].mxu0
        %v1092 = vadd.f32 0.0, %v1091
        %v1093 = vpop.f32.mrb[0].mxu0
        %v1094 = vpop.f32.mrb[0].mxu0
        %v1095 = vadd.f32 0.0, %v1094
        %v1096 = vpop.f32.mrb[0].mxu0
        %1097 = vmatprep.mubr.bf16.mxu0 %v573
        %1098 = vmatmul.mubr.bf16.gmra.mrb[0].mxu0 %v404
        %v1099 = vpop.f32.mrb[0].mxu0
        %v1100 = vadd.f32 0.0, %v1099
        %v1101 = vpop.f32.mrb[0].mxu0
        %v1102 = vpop.f32.mrb[0].mxu0
        %v1103 = vadd.f32 0.0, %v1102
        %v1104 = vpop.f32.mrb[0].mxu0
        %1105 = vmatprep.mubr.bf16.mxu0 %v585
        %1106 = vmatmul.mubr.bf16.gmra.mrb[0].mxu0 %v405
        %v1107 = vpop.f32.mrb[0].mxu0
        %v1108 = vadd.f32 0.0, %v1107
        %v1109 = vpop.f32.mrb[0].mxu0
        %v1110 = vpop.f32.mrb[0].mxu0
        %v1111 = vadd.f32 0.0, %v1110
        %v1112 = vpop.f32.mrb[0].mxu0
        %1113 = vmatprep.mubr.bf16.mxu0 %v597
        %1114 = vmatmul.mubr.bf16.gmra.mrb[0].mxu0 %v406
        %v1115 = vpop.f32.mrb[0].mxu0
        %v1116 = vadd.f32 0.0, %v1115
        %v1117 = vpop.f32.mrb[0].mxu0
        %v1118 = vpop.f32.mrb[0].mxu0
        %v1119 = vadd.f32 0.0, %v1118
        %v1120 = vpop.f32.mrb[0].mxu0
        %1121 = vmatprep.mubr.bf16.mxu0 %v609
        %1122 = vmatmul.mubr.bf16.gmra.mrb[0].mxu0 %v407
        %v1123 = vpop.f32.mrb[0].mxu0
        %v1124 = vadd.f32 0.0, %v1123
        %v1125 = vpop.f32.mrb[0].mxu0
        %v1126 = vpop.f32.mrb[0].mxu0
        %v1127 = vadd.f32 0.0, %v1126
        %v1128 = vpop.f32.mrb[0].mxu0
        %1129 = vmatprep.mubr.bf16.mxu0 %v621
        %1130 = vmatmul.mubr.bf16.gmra.mrb[0].mxu0 %v408
        %v1131 = vpop.f32.mrb[0].mxu0
        %v1132 = vadd.f32 0.0, %v1131
        %v1133 = vpop.f32.mrb[0].mxu0
        %v1134 = vpop.f32.mrb[0].mxu0
        %v1135 = vadd.f32 0.0, %v1134
        %v1136 = vpop.f32.mrb[0].mxu0
        %1137 = vmatprep.mubr.bf16.mxu0 %v633
        %1138 = vmatmul.mubr.bf16.gmra.mrb[0].mxu0 %v409
        %v1139 = vpop.f32.mrb[0].mxu0
        %v1140 = vadd.f32 0.0, %v1139
        %v1141 = vpop.f32.mrb[0].mxu0
        %v1142 = vpop.f32.mrb[0].mxu0
        %v1143 = vadd.f32 0.0, %v1142
        %v1144 = vpop.f32.mrb[0].mxu0
        %1145 = vmatprep.mubr.bf16.mxu0 %v645
        %1146 = vmatmul.mubr.bf16.gmra.mrb[0].mxu0 %v410
        %v1147 = vpop.f32.mrb[0].mxu0
        %v1148 = vadd.f32 0.0, %v1147
        %v1149 = vpop.f32.mrb[0].mxu0
        %v1150 = vpop.f32.mrb[0].mxu0
        %v1151 = vadd.f32 0.0, %v1150
        %v1152 = vpop.f32.mrb[0].mxu0
        %1153 = vmatprep.mubr.bf16.mxu0 %v657
        %1154 = vmatmul.mubr.bf16.gmra.mrb[0].mxu0 %v411
        %v1155 = vpop.f32.mrb[0].mxu0
        %v1156 = vadd.f32 0.0, %v1155
        %v1157 = vpop.f32.mrb[0].mxu0
        %v1158 = vpop.f32.mrb[0].mxu0
        %v1159 = vadd.f32 0.0, %v1158
        %v1160 = vpop.f32.mrb[0].mxu0
        %1161 = vmatprep.mubr.bf16.mxu0 %v669
        %1162 = vmatmul.mubr.bf16.gmra.mrb[0].mxu0 %v412
        %v1163 = vpop.f32.mrb[0].mxu0
        %v1164 = vadd.f32 0.0, %v1163
        %v1165 = vpop.f32.mrb[0].mxu0
        %v1166 = vpop.f32.mrb[0].mxu0
        %v1167 = vadd.f32 0.0, %v1166
        %v1168 = vpop.f32.mrb[0].mxu0
        %1169 = vmatprep.mubr.bf16.mxu0 %v819
        %1170 = vmatmul.mubr.bf16.gmra.mrb[0].mxu0 %v803
        %v1171 = vpop.f32.mrb[0].mxu0
        %v1172 = vadd.f32 0.0, %v1171
        %v1173 = vpop.f32.mrb[0].mxu0
        %v1174 = vpop.f32.mrb[0].mxu0
        %v1175 = vadd.f32 0.0, %v1174
        %v1176 = vpop.f32.mrb[0].mxu0
        %1177 = vdwg.mxu0
        %1178 = vmatprep.subr.bf16.mxu0 0
        %1179 = vmatpush1.bf16.msra.mxu0 %v985
        %1180 = vmatprep.subr.bf16.mxu0 0
        %1181 = vmatpush1.bf16.msra.mxu0 %v986
        %1182 = vmatprep.subr.bf16.mxu0 0
        %1183 = vmatpush1.bf16.msra.mxu0 %v987
        %1184 = vmatprep.subr.bf16.mxu0 0
        %1185 = vmatpush1.bf16.msra.mxu0 %v988
        %1186 = vmatprep.subr.bf16.mxu0 0
        %1187 = vmatpush1.bf16.msra.mxu0 %v989
        %1188 = vmatprep.subr.bf16.mxu0 0
        %1189 = vmatpush1.bf16.msra.mxu0 %v990
        %1190 = vmatprep.subr.bf16.mxu0 0
        %1191 = vmatpush1.bf16.msra.mxu0 %v991
        %1192 = vmatprep.subr.bf16.mxu0 0
        %1193 = vmatpush1.bf16.msra.mxu0 %v992
        %1194 = vmatprep.subr.bf16.mxu0 0
        %1195 = vmatpush1.bf16.msra.mxu0 0
        %1196 = vmatprep.subr.bf16.mxu0 0
        %1197 = vmatpush1.bf16.msra.mxu0 0
        %1198 = vmatprep.subr.bf16.mxu0 0
        %1199 = vmatpush1.bf16.msra.mxu0 0
        %1200 = vmatprep.subr.bf16.mxu0 0
        %1201 = vmatpush1.bf16.msra.mxu0 0
        %1202 = vmatprep.subr.bf16.mxu0 0
        %1203 = vmatpush1.bf16.msra.mxu0 0
        %1204 = vmatprep.subr.bf16.mxu0 0
        %1205 = vmatpush1.bf16.msra.mxu0 0
        %1206 = vmatprep.subr.bf16.mxu0 0
        %1207 = vmatpush1.bf16.msra.mxu0 0
        %1208 = vmatprep.subr.bf16.mxu0 0
        %1209 = vmatpush1.bf16.msra.mxu0 0
        %1210 = vmatprep.mubr.bf16.mxu0 0
        %1211 = vmatmul.mubr.bf16.gmra.mrb[0].mxu0 %v692
        %v1212 = vpop.f32.mrb[0].mxu0
        %v1213 = vadd.f32 %v1052, %v1212
        %v1214 = vpop.f32.mrb[0].mxu0
        %v1215 = vpop.f32.mrb[0].mxu0
        %v1216 = vadd.f32 %v1055, %v1215
        %v1217 = vpop.f32.mrb[0].mxu0
        %1218 = vmatprep.mubr.bf16.mxu0 0
        %1219 = vmatmul.mubr.bf16.gmra.mrb[0].mxu0 %v695
        %v1220 = vpop.f32.mrb[0].mxu0
        %v1221 = vadd.f32 %v1060, %v1220
        %v1222 = vpop.f32.mrb[0].mxu0
        %v1223 = vpop.f32.mrb[0].mxu0
        %v1224 = vadd.f32 %v1063, %v1223
        %v1225 = vpop.f32.mrb[0].mxu0
        %1226 = vmatprep.mubr.bf16.mxu0 0
        %1227 = vmatmul.mubr.bf16.gmra.mrb[0].mxu0 %v698
        %v1228 = vpop.f32.mrb[0].mxu0
        %v1229 = vadd.f32 %v1068, %v1228
        %v1230 = vpop.f32.mrb[0].mxu0
        %v1231 = vpop.f32.mrb[0].mxu0
        %v1232 = vadd.f32 %v1071, %v1231
        %v1233 = vpop.f32.mrb[0].mxu0
        %1234 = vmatprep.mubr.bf16.mxu0 0
        %1235 = vmatmul.mubr.bf16.gmra.mrb[0].mxu0 %v701
        %v1236 = vpop.f32.mrb[0].mxu0
        %v1237 = vadd.f32 %v1076, %v1236
        %v1238 = vpop.f32.mrb[0].mxu0
        %v1239 = vpop.f32.mrb[0].mxu0
        %v1240 = vadd.f32 %v1079, %v1239
        %v1241 = vpop.f32.mrb[0].mxu0
        %1242 = vmatprep.mubr.bf16.mxu0 0
        %1243 = vmatmul.mubr.bf16.gmra.mrb[0].mxu0 %v704
        %v1244 = vpop.f32.mrb[0].mxu0
        %v1245 = vadd.f32 %v1084, %v1244
        %v1246 = vpop.f32.mrb[0].mxu0
        %v1247 = vpop.f32.mrb[0].mxu0
        %v1248 = vadd.f32 %v1087, %v1247
        %v1249 = vpop.f32.mrb[0].mxu0
        %1250 = vmatprep.mubr.bf16.mxu0 0
        %1251 = vmatmul.mubr.bf16.gmra.mrb[0].mxu0 %v707
        %v1252 = vpop.f32.mrb[0].mxu0
        %v1253 = vadd.f32 %v1092, %v1252
        %v1254 = vpop.f32.mrb[0].mxu0
        %v1255 = vpop.f32.mrb[0].mxu0
        %v1256 = vadd.f32 %v1095, %v1255
        %v1257 = vpop.f32.mrb[0].mxu0
        %1258 = vmatprep.mubr.bf16.mxu0 0
        %1259 = vmatmul.mubr.bf16.gmra.mrb[0].mxu0 %v710
        %v1260 = vpop.f32.mrb[0].mxu0
        %v1261 = vadd.f32 %v1100, %v1260
        %v1262 = vpop.f32.mrb[0].mxu0
        %v1263 = vpop.f32.mrb[0].mxu0
        %v1264 = vadd.f32 %v1103, %v1263
        %v1265 = vpop.f32.mrb[0].mxu0
        %1266 = vmatprep.mubr.bf16.mxu0 0
        %1267 = vmatmul.mubr.bf16.gmra.mrb[0].mxu0 %v713
        %v1268 = vpop.f32.mrb[0].mxu0
        %v1269 = vadd.f32 %v1108, %v1268
        %v1270 = vpop.f32.mrb[0].mxu0
        %v1271 = vpop.f32.mrb[0].mxu0
        %v1272 = vadd.f32 %v1111, %v1271
        %v1273 = vpop.f32.mrb[0].mxu0
        %1274 = vmatprep.mubr.bf16.mxu0 0
        %1275 = vmatmul.mubr.bf16.gmra.mrb[0].mxu0 %v716
        %v1276 = vpop.f32.mrb[0].mxu0
        %v1277 = vadd.f32 %v1116, %v1276
        %v1278 = vpop.f32.mrb[0].mxu0
        %v1279 = vpop.f32.mrb[0].mxu0
        %v1280 = vadd.f32 %v1119, %v1279
        %v1281 = vpop.f32.mrb[0].mxu0
        %1282 = vmatprep.mubr.bf16.mxu0 0
        %1283 = vmatmul.mubr.bf16.gmra.mrb[0].mxu0 %v719
        %v1284 = vpop.f32.mrb[0].mxu0
        %v1285 = vadd.f32 %v1124, %v1284
        %v1286 = vpop.f32.mrb[0].mxu0
        %v1287 = vpop.f32.mrb[0].mxu0
        %v1288 = vadd.f32 %v1127, %v1287
        %v1289 = vpop.f32.mrb[0].mxu0
        %1290 = vmatprep.mubr.bf16.mxu0 0
        %1291 = vmatmul.mubr.bf16.gmra.mrb[0].mxu0 %v722
        %v1292 = vpop.f32.mrb[0].mxu0
        %v1293 = vadd.f32 %v1132, %v1292
        %v1294 = vpop.f32.mrb[0].mxu0
        %v1295 = vpop.f32.mrb[0].mxu0
        %v1296 = vadd.f32 %v1135, %v1295
        %v1297 = vpop.f32.mrb[0].mxu0
        %1298 = vmatprep.mubr.bf16.mxu0 0
        %1299 = vmatmul.mubr.bf16.gmra.mrb[0].mxu0 %v725
        %v1300 = vpop.f32.mrb[0].mxu0
        %v1301 = vadd.f32 %v1140, %v1300
        %v1302 = vpop.f32.mrb[0].mxu0
        %v1303 = vpop.f32.mrb[0].mxu0
        %v1304 = vadd.f32 %v1143, %v1303
        %v1305 = vpop.f32.mrb[0].mxu0
        %1306 = vmatprep.mubr.bf16.mxu0 0
        %1307 = vmatmul.mubr.bf16.gmra.mrb[0].mxu0 %v728
        %v1308 = vpop.f32.mrb[0].mxu0
        %v1309 = vadd.f32 %v1148, %v1308
        %v1310 = vpop.f32.mrb[0].mxu0
        %v1311 = vpop.f32.mrb[0].mxu0
        %v1312 = vadd.f32 %v1151, %v1311
        %v1313 = vpop.f32.mrb[0].mxu0
        %1314 = vmatprep.mubr.bf16.mxu0 0
        %1315 = vmatmul.mubr.bf16.gmra.mrb[0].mxu0 %v731
        %v1316 = vpop.f32.mrb[0].mxu0
        %v1317 = vadd.f32 %v1156, %v1316
        %v1318 = vpop.f32.mrb[0].mxu0
        %v1319 = vpop.f32.mrb[0].mxu0
        %v1320 = vadd.f32 %v1159, %v1319
        %v1321 = vpop.f32.mrb[0].mxu0
        %1322 = vmatprep.mubr.bf16.mxu0 0
        %1323 = vmatmul.mubr.bf16.gmra.mrb[0].mxu0 %v734
        %v1324 = vpop.f32.mrb[0].mxu0
        %v1325 = vadd.f32 %v1164, %v1324
        %v1326 = vpop.f32.mrb[0].mxu0
        %v1327 = vpop.f32.mrb[0].mxu0
        %v1328 = vadd.f32 %v1167, %v1327
        %v1329 = vpop.f32.mrb[0].mxu0
        %1330 = vmatprep.mubr.bf16.mxu0 0
        %1331 = vmatmul.mubr.bf16.gmra.mrb[0].mxu0 %v823
        %v1332 = vpop.f32.mrb[0].mxu0
        %v1333 = vadd.f32 %v1172, %v1332
        %v1334 = vpop.f32.mrb[0].mxu0
        %v1335 = vpop.f32.mrb[0].mxu0
        %v1336 = vadd.f32 %v1175, %v1335
        %v1337 = vpop.f32.mrb[0].mxu0
        %1338 = vdwg.mxu0
        %v1387 = vunpack.c.l.b16 %v751
        %v1388 = vunpack.c.l.b16 %v752
        %v1389 = vunpack.c.l.b16 %v753
        %v1390 = vunpack.c.l.b16 %v754
        %v1391 = vunpack.c.l.b16 %v755
        %v1392 = vunpack.c.l.b16 %v756
        %v1393 = vunpack.c.l.b16 %v757
        %v1394 = vunpack.c.l.b16 %v758
        %v1395 = vunpack.c.l.b16 %v759
        %v1396 = vunpack.c.l.b16 %v760
        %v1397 = vunpack.c.l.b16 %v761
        %v1398 = vunpack.c.l.b16 %v762
        %v1399 = vunpack.c.l.b16 %v763
        %v1400 = vunpack.c.l.b16 %v764
        %v1401 = vunpack.c.l.b16 %v765
        %v1402 = vunpack.c.l.b16 %v766
        %v1403 = vunpack.c.l.b16 %v767
        %v1404 = vunpack.c.l.b16 %v768
        %v1405 = vunpack.c.l.b16 %v769
        %v1406 = vunpack.c.l.b16 %v770
        %v1407 = vunpack.c.l.b16 %v771
        %v1408 = vunpack.c.l.b16 %v772
        %v1409 = vunpack.c.l.b16 %v773
        %v1410 = vunpack.c.l.b16 %v774
        %v1411 = vunpack.c.l.b16 %v775
        %v1412 = vunpack.c.l.b16 %v776
        %v1413 = vunpack.c.l.b16 %v777
        %v1414 = vunpack.c.l.b16 %v778
        %v1415 = vunpack.c.l.b16 %v779
        %v1416 = vunpack.c.l.b16 %v780
        %v1417 = vunpack.c.l.b16 %v781
        %v1418 = vunpack.c.l.b16 %v782
        %v1419 = vunpack.c.l.b16 %v783
        %v1420 = vunpack.c.l.b16 %v784
        %v1421 = vunpack.c.l.b16 %v785
        %v1422 = vunpack.c.l.b16 %v786
        %v1423 = vunpack.c.l.b16 %v787
        %v1424 = vunpack.c.l.b16 %v788
        %v1425 = vunpack.c.l.b16 %v789
        %v1426 = vunpack.c.l.b16 %v790
        %v1427 = vunpack.c.l.b16 %v791
        %v1428 = vunpack.c.l.b16 %v792
        %v1429 = vunpack.c.l.b16 %v793
        %v1430 = vunpack.c.l.b16 %v794
        %v1431 = vunpack.c.l.b16 %v795
        %v1432 = vunpack.c.l.b16 %v796
        %v1433 = vunpack.c.l.b16 %v797
        %v1434 = vunpack.c.l.b16 %v798
        %v1435 = vpack.c.b16 %v1388, %v1387
        %v1436 = vpack.c.b16 %v1390, %v1389
        %v1437 = vpack.c.b16 %v1392, %v1391
        %v1438 = vpack.c.b16 %v1394, %v1393
        %v1439 = vpack.c.b16 %v1396, %v1395
        %v1440 = vpack.c.b16 %v1398, %v1397
        %v1441 = vpack.c.b16 %v1400, %v1399
        %v1442 = vpack.c.b16 %v1402, %v1401
        %v1443 = vpack.c.b16 %v1404, %v1403
        %v1444 = vpack.c.b16 %v1406, %v1405
        %v1445 = vpack.c.b16 %v1408, %v1407
        %v1446 = vpack.c.b16 %v1410, %v1409
        %v1447 = vpack.c.b16 %v1412, %v1411
        %v1448 = vpack.c.b16 %v1414, %v1413
        %v1449 = vpack.c.b16 %v1416, %v1415
        %v1450 = vpack.c.b16 %v1418, %v1417
        %v1451 = vpack.c.b16 %v1420, %v1419
        %v1452 = vpack.c.b16 %v1422, %v1421
        %v1453 = vpack.c.b16 %v1424, %v1423
        %v1454 = vpack.c.b16 %v1426, %v1425
        %v1455 = vpack.c.b16 %v1428, %v1427
        %v1456 = vpack.c.b16 %v1430, %v1429
        %v1457 = vpack.c.b16 %v1432, %v1431
        %v1458 = vpack.c.b16 %v1434, %v1433
        %1483 = vmatprep.subr.bf16.mxu0 0
        %1484 = vmatpush1.bf16.msra.mxu0 %v1435
        %1485 = vmatprep.subr.bf16.mxu0 0
        %1486 = vmatpush1.bf16.msra.mxu0 %v1436
        %1487 = vmatprep.subr.bf16.mxu0 0
        %1488 = vmatpush1.bf16.msra.mxu0 %v1437
        %1489 = vmatprep.subr.bf16.mxu0 0
        %1490 = vmatpush1.bf16.msra.mxu0 %v1438
        %1491 = vmatprep.subr.bf16.mxu0 0
        %1492 = vmatpush1.bf16.msra.mxu0 %v1439
        %1493 = vmatprep.subr.bf16.mxu0 0
        %1494 = vmatpush1.bf16.msra.mxu0 %v1440
        %1495 = vmatprep.subr.bf16.mxu0 0
        %1496 = vmatpush1.bf16.msra.mxu0 %v1441
        %1497 = vmatprep.subr.bf16.mxu0 0
        %1498 = vmatpush1.bf16.msra.mxu0 %v1442
        %1499 = vmatprep.subr.bf16.mxu0 0
        %1500 = vmatpush1.bf16.msra.mxu0 %v1443
        %1501 = vmatprep.subr.bf16.mxu0 0
        %1502 = vmatpush1.bf16.msra.mxu0 %v1444
        %1503 = vmatprep.subr.bf16.mxu0 0
        %1504 = vmatpush1.bf16.msra.mxu0 %v1445
        %1505 = vmatprep.subr.bf16.mxu0 0
        %1506 = vmatpush1.bf16.msra.mxu0 %v1446
        %1507 = vmatprep.subr.bf16.mxu0 0
        %1508 = vmatpush1.bf16.msra.mxu0 %v1447
        %1509 = vmatprep.subr.bf16.mxu0 0
        %1510 = vmatpush1.bf16.msra.mxu0 %v1448
        %1511 = vmatprep.subr.bf16.mxu0 0
        %1512 = vmatpush1.bf16.msra.mxu0 %v1449
        %1513 = vmatprep.subr.bf16.mxu0 0
        %1514 = vmatpush1.bf16.msra.mxu0 %v1450
        %1515 = vmatprep.mubr.bf16.mxu0 %v489
        %1516 = vmatmul.mubr.bf16.gmra.mrb[0].mxu0 %v397
        %v1517 = vpop.f32.mrb[0].mxu0
        %v1518 = vadd.f32 %v1213, %v1517
        %v1519 = vpop.f32.mrb[0].mxu0
        %v1520 = vpop.f32.mrb[0].mxu0
        %v1521 = vadd.f32 %v1216, %v1520
        %v1522 = vpop.f32.mrb[0].mxu0
        %1523 = vmatprep.mubr.bf16.mxu0 %v501
        %1524 = vmatmul.mubr.bf16.gmra.mrb[0].mxu0 %v398
        %v1525 = vpop.f32.mrb[0].mxu0
        %v1526 = vadd.f32 %v1221, %v1525
        %v1527 = vpop.f32.mrb[0].mxu0
        %v1528 = vpop.f32.mrb[0].mxu0
        %v1529 = vadd.f32 %v1224, %v1528
        %v1530 = vpop.f32.mrb[0].mxu0
        %1531 = vmatprep.mubr.bf16.mxu0 %v513
        %1532 = vmatmul.mubr.bf16.gmra.mrb[0].mxu0 %v399
        %v1533 = vpop.f32.mrb[0].mxu0
        %v1534 = vadd.f32 %v1229, %v1533
        %v1535 = vpop.f32.mrb[0].mxu0
        %v1536 = vpop.f32.mrb[0].mxu0
        %v1537 = vadd.f32 %v1232, %v1536
        %v1538 = vpop.f32.mrb[0].mxu0
        %1539 = vmatprep.mubr.bf16.mxu0 %v525
        %1540 = vmatmul.mubr.bf16.gmra.mrb[0].mxu0 %v400
        %v1541 = vpop.f32.mrb[0].mxu0
        %v1542 = vadd.f32 %v1237, %v1541
        %v1543 = vpop.f32.mrb[0].mxu0
        %v1544 = vpop.f32.mrb[0].mxu0
        %v1545 = vadd.f32 %v1240, %v1544
        %v1546 = vpop.f32.mrb[0].mxu0
        %1547 = vmatprep.mubr.bf16.mxu0 %v537
        %1548 = vmatmul.mubr.bf16.gmra.mrb[0].mxu0 %v401
        %v1549 = vpop.f32.mrb[0].mxu0
        %v1550 = vadd.f32 %v1245, %v1549
        %v1551 = vpop.f32.mrb[0].mxu0
        %v1552 = vpop.f32.mrb[0].mxu0
        %v1553 = vadd.f32 %v1248, %v1552
        %v1554 = vpop.f32.mrb[0].mxu0
        %1555 = vmatprep.mubr.bf16.mxu0 %v549
        %1556 = vmatmul.mubr.bf16.gmra.mrb[0].mxu0 %v402
        %v1557 = vpop.f32.mrb[0].mxu0
        %v1558 = vadd.f32 %v1253, %v1557
        %v1559 = vpop.f32.mrb[0].mxu0
        %v1560 = vpop.f32.mrb[0].mxu0
        %v1561 = vadd.f32 %v1256, %v1560
        %v1562 = vpop.f32.mrb[0].mxu0
        %1563 = vmatprep.mubr.bf16.mxu0 %v561
        %1564 = vmatmul.mubr.bf16.gmra.mrb[0].mxu0 %v403
        %v1565 = vpop.f32.mrb[0].mxu0
        %v1566 = vadd.f32 %v1261, %v1565
        %v1567 = vpop.f32.mrb[0].mxu0
        %v1568 = vpop.f32.mrb[0].mxu0
        %v1569 = vadd.f32 %v1264, %v1568
        %v1570 = vpop.f32.mrb[0].mxu0
        %1571 = vmatprep.mubr.bf16.mxu0 %v573
        %1572 = vmatmul.mubr.bf16.gmra.mrb[0].mxu0 %v404
        %v1573 = vpop.f32.mrb[0].mxu0
        %v1574 = vadd.f32 %v1269, %v1573
        %v1575 = vpop.f32.mrb[0].mxu0
        %v1576 = vpop.f32.mrb[0].mxu0
        %v1577 = vadd.f32 %v1272, %v1576
        %v1578 = vpop.f32.mrb[0].mxu0
        %1579 = vmatprep.mubr.bf16.mxu0 %v585
        %1580 = vmatmul.mubr.bf16.gmra.mrb[0].mxu0 %v405
        %v1581 = vpop.f32.mrb[0].mxu0
        %v1582 = vadd.f32 %v1277, %v1581
        %v1583 = vpop.f32.mrb[0].mxu0
        %v1584 = vpop.f32.mrb[0].mxu0
        %v1585 = vadd.f32 %v1280, %v1584
        %v1586 = vpop.f32.mrb[0].mxu0
        %1587 = vmatprep.mubr.bf16.mxu0 %v597
        %1588 = vmatmul.mubr.bf16.gmra.mrb[0].mxu0 %v406
        %v1589 = vpop.f32.mrb[0].mxu0
        %v1590 = vadd.f32 %v1285, %v1589
        %v1591 = vpop.f32.mrb[0].mxu0
        %v1592 = vpop.f32.mrb[0].mxu0
        %v1593 = vadd.f32 %v1288, %v1592
        %v1594 = vpop.f32.mrb[0].mxu0
        %1595 = vmatprep.mubr.bf16.mxu0 %v609
        %1596 = vmatmul.mubr.bf16.gmra.mrb[0].mxu0 %v407
        %v1597 = vpop.f32.mrb[0].mxu0
        %v1598 = vadd.f32 %v1293, %v1597
        %v1599 = vpop.f32.mrb[0].mxu0
        %v1600 = vpop.f32.mrb[0].mxu0
        %v1601 = vadd.f32 %v1296, %v1600
        %v1602 = vpop.f32.mrb[0].mxu0
        %1603 = vmatprep.mubr.bf16.mxu0 %v621
        %1604 = vmatmul.mubr.bf16.gmra.mrb[0].mxu0 %v408
        %v1605 = vpop.f32.mrb[0].mxu0
        %v1606 = vadd.f32 %v1301, %v1605
        %v1607 = vpop.f32.mrb[0].mxu0
        %v1608 = vpop.f32.mrb[0].mxu0
        %v1609 = vadd.f32 %v1304, %v1608
        %v1610 = vpop.f32.mrb[0].mxu0
        %1611 = vmatprep.mubr.bf16.mxu0 %v633
        %1612 = vmatmul.mubr.bf16.gmra.mrb[0].mxu0 %v409
        %v1613 = vpop.f32.mrb[0].mxu0
        %v1614 = vadd.f32 %v1309, %v1613
        %v1615 = vpop.f32.mrb[0].mxu0
        %v1616 = vpop.f32.mrb[0].mxu0
        %v1617 = vadd.f32 %v1312, %v1616
        %v1618 = vpop.f32.mrb[0].mxu0
        %1619 = vmatprep.mubr.bf16.mxu0 %v645
        %1620 = vmatmul.mubr.bf16.gmra.mrb[0].mxu0 %v410
        %v1621 = vpop.f32.mrb[0].mxu0
        %v1622 = vadd.f32 %v1317, %v1621
        %v1623 = vpop.f32.mrb[0].mxu0
        %v1624 = vpop.f32.mrb[0].mxu0
        %v1625 = vadd.f32 %v1320, %v1624
        %v1626 = vpop.f32.mrb[0].mxu0
        %1627 = vmatprep.mubr.bf16.mxu0 %v657
        %1628 = vmatmul.mubr.bf16.gmra.mrb[0].mxu0 %v411
        %v1629 = vpop.f32.mrb[0].mxu0
        %v1630 = vadd.f32 %v1325, %v1629
        %v1631 = vpop.f32.mrb[0].mxu0
        %v1632 = vpop.f32.mrb[0].mxu0
        %v1633 = vadd.f32 %v1328, %v1632
        %v1634 = vpop.f32.mrb[0].mxu0
        %1635 = vmatprep.mubr.bf16.mxu0 %v669
        %1636 = vmatmul.mubr.bf16.gmra.mrb[0].mxu0 %v412
        %v1637 = vpop.f32.mrb[0].mxu0
        %v1638 = vadd.f32 %v1333, %v1637
        %v1639 = vpop.f32.mrb[0].mxu0
        %v1640 = vpop.f32.mrb[0].mxu0
        %v1641 = vadd.f32 %v1336, %v1640
        %v1642 = vpop.f32.mrb[0].mxu0
        %1643 = vdwg.mxu0
        %1644 = vmatprep.subr.bf16.mxu0 0
        %1645 = vmatpush1.bf16.msra.mxu0 %v1451
        %1646 = vmatprep.subr.bf16.mxu0 0
        %1647 = vmatpush1.bf16.msra.mxu0 %v1452
        %1648 = vmatprep.subr.bf16.mxu0 0
        %1649 = vmatpush1.bf16.msra.mxu0 %v1453
        %1650 = vmatprep.subr.bf16.mxu0 0
        %1651 = vmatpush1.bf16.msra.mxu0 %v1454
        %1652 = vmatprep.subr.bf16.mxu0 0
        %1653 = vmatpush1.bf16.msra.mxu0 %v1455
        %1654 = vmatprep.subr.bf16.mxu0 0
        %1655 = vmatpush1.bf16.msra.mxu0 %v1456
        %1656 = vmatprep.subr.bf16.mxu0 0
        %1657 = vmatpush1.bf16.msra.mxu0 %v1457
        %1658 = vmatprep.subr.bf16.mxu0 0
        %1659 = vmatpush1.bf16.msra.mxu0 %v1458
        %1660 = vmatprep.subr.bf16.mxu0 0
        %1661 = vmatpush1.bf16.msra.mxu0 0
        %1662 = vmatprep.subr.bf16.mxu0 0
        %1663 = vmatpush1.bf16.msra.mxu0 0
        %1664 = vmatprep.subr.bf16.mxu0 0
        %1665 = vmatpush1.bf16.msra.mxu0 0
        %1666 = vmatprep.subr.bf16.mxu0 0
        %1667 = vmatpush1.bf16.msra.mxu0 0
        %1668 = vmatprep.subr.bf16.mxu0 0
        %1669 = vmatpush1.bf16.msra.mxu0 0
        %1670 = vmatprep.subr.bf16.mxu0 0
        %1671 = vmatpush1.bf16.msra.mxu0 0
        %1672 = vmatprep.subr.bf16.mxu0 0
        %1673 = vmatpush1.bf16.msra.mxu0 0
        %1674 = vmatprep.subr.bf16.mxu0 0
        %1675 = vmatpush1.bf16.msra.mxu0 0
        %1676 = vmatprep.mubr.bf16.mxu0 0
        %1677 = vmatmul.mubr.bf16.gmra.mrb[0].mxu0 %v689
        %v1678 = vpop.f32.mrb[0].mxu0
        %v1679 = vadd.f32 %v1518, %v1678
        %v1680 = vpop.f32.mrb[0].mxu0
        %v1681 = vpop.f32.mrb[0].mxu0
        %v1682 = vadd.f32 %v1521, %v1681
        %v1683 = vpop.f32.mrb[0].mxu0
        %1684 = vmatprep.mubr.bf16.mxu0 0
        %1685 = vmatmul.mubr.bf16.gmra.mrb[0].mxu0 %v692
        %v1686 = vpop.f32.mrb[0].mxu0
        %v1687 = vadd.f32 %v1526, %v1686
        %v1688 = vpop.f32.mrb[0].mxu0
        %v1689 = vpop.f32.mrb[0].mxu0
        %v1690 = vadd.f32 %v1529, %v1689
        %v1691 = vpop.f32.mrb[0].mxu0
        %1692 = vmatprep.mubr.bf16.mxu0 0
        %1693 = vmatmul.mubr.bf16.gmra.mrb[0].mxu0 %v695
        %v1694 = vpop.f32.mrb[0].mxu0
        %v1695 = vadd.f32 %v1534, %v1694
        %v1696 = vpop.f32.mrb[0].mxu0
        %v1697 = vpop.f32.mrb[0].mxu0
        %v1698 = vadd.f32 %v1537, %v1697
        %v1699 = vpop.f32.mrb[0].mxu0
        %1700 = vmatprep.mubr.bf16.mxu0 0
        %1701 = vmatmul.mubr.bf16.gmra.mrb[0].mxu0 %v698
        %v1702 = vpop.f32.mrb[0].mxu0
        %v1703 = vadd.f32 %v1542, %v1702
        %v1704 = vpop.f32.mrb[0].mxu0
        %v1705 = vpop.f32.mrb[0].mxu0
        %v1706 = vadd.f32 %v1545, %v1705
        %v1707 = vpop.f32.mrb[0].mxu0
        %1708 = vmatprep.mubr.bf16.mxu0 0
        %1709 = vmatmul.mubr.bf16.gmra.mrb[0].mxu0 %v701
        %v1710 = vpop.f32.mrb[0].mxu0
        %v1711 = vadd.f32 %v1550, %v1710
        %v1712 = vpop.f32.mrb[0].mxu0
        %v1713 = vpop.f32.mrb[0].mxu0
        %v1714 = vadd.f32 %v1553, %v1713
        %v1715 = vpop.f32.mrb[0].mxu0
        %1716 = vmatprep.mubr.bf16.mxu0 0
        %1717 = vmatmul.mubr.bf16.gmra.mrb[0].mxu0 %v704
        %v1718 = vpop.f32.mrb[0].mxu0
        %v1719 = vadd.f32 %v1558, %v1718
        %v1720 = vpop.f32.mrb[0].mxu0
        %v1721 = vpop.f32.mrb[0].mxu0
        %v1722 = vadd.f32 %v1561, %v1721
        %v1723 = vpop.f32.mrb[0].mxu0
        %1724 = vmatprep.mubr.bf16.mxu0 0
        %1725 = vmatmul.mubr.bf16.gmra.mrb[0].mxu0 %v707
        %v1726 = vpop.f32.mrb[0].mxu0
        %v1727 = vadd.f32 %v1566, %v1726
        %v1728 = vpop.f32.mrb[0].mxu0
        %v1729 = vpop.f32.mrb[0].mxu0
        %v1730 = vadd.f32 %v1569, %v1729
        %v1731 = vpop.f32.mrb[0].mxu0
        %1732 = vmatprep.mubr.bf16.mxu0 0
        %1733 = vmatmul.mubr.bf16.gmra.mrb[0].mxu0 %v710
        %v1734 = vpop.f32.mrb[0].mxu0
        %v1735 = vadd.f32 %v1574, %v1734
        %v1736 = vpop.f32.mrb[0].mxu0
        %v1737 = vpop.f32.mrb[0].mxu0
        %v1738 = vadd.f32 %v1577, %v1737
        %v1739 = vpop.f32.mrb[0].mxu0
        %1740 = vmatprep.mubr.bf16.mxu0 0
        %1741 = vmatmul.mubr.bf16.gmra.mrb[0].mxu0 %v713
        %v1742 = vpop.f32.mrb[0].mxu0
        %v1743 = vadd.f32 %v1582, %v1742
        %v1744 = vpop.f32.mrb[0].mxu0
        %v1745 = vpop.f32.mrb[0].mxu0
        %v1746 = vadd.f32 %v1585, %v1745
        %v1747 = vpop.f32.mrb[0].mxu0
        %1748 = vmatprep.mubr.bf16.mxu0 0
        %1749 = vmatmul.mubr.bf16.gmra.mrb[0].mxu0 %v716
        %v1750 = vpop.f32.mrb[0].mxu0
        %v1751 = vadd.f32 %v1590, %v1750
        %v1752 = vpop.f32.mrb[0].mxu0
        %v1753 = vpop.f32.mrb[0].mxu0
        %v1754 = vadd.f32 %v1593, %v1753
        %v1755 = vpop.f32.mrb[0].mxu0
        %1756 = vmatprep.mubr.bf16.mxu0 0
        %1757 = vmatmul.mubr.bf16.gmra.mrb[0].mxu0 %v719
        %v1758 = vpop.f32.mrb[0].mxu0
        %v1759 = vadd.f32 %v1598, %v1758
        %v1760 = vpop.f32.mrb[0].mxu0
        %v1761 = vpop.f32.mrb[0].mxu0
        %v1762 = vadd.f32 %v1601, %v1761
        %v1763 = vpop.f32.mrb[0].mxu0
        %1764 = vmatprep.mubr.bf16.mxu0 0
        %1765 = vmatmul.mubr.bf16.gmra.mrb[0].mxu0 %v722
        %v1766 = vpop.f32.mrb[0].mxu0
        %v1767 = vadd.f32 %v1606, %v1766
        %v1768 = vpop.f32.mrb[0].mxu0
        %v1769 = vpop.f32.mrb[0].mxu0
        %v1770 = vadd.f32 %v1609, %v1769
        %v1771 = vpop.f32.mrb[0].mxu0
        %1772 = vmatprep.mubr.bf16.mxu0 0
        %1773 = vmatmul.mubr.bf16.gmra.mrb[0].mxu0 %v725
        %v1774 = vpop.f32.mrb[0].mxu0
        %v1775 = vadd.f32 %v1614, %v1774
        %v1776 = vpop.f32.mrb[0].mxu0
        %v1777 = vpop.f32.mrb[0].mxu0
        %v1778 = vadd.f32 %v1617, %v1777
        %v1779 = vpop.f32.mrb[0].mxu0
        %1780 = vmatprep.mubr.bf16.mxu0 0
        %1781 = vmatmul.mubr.bf16.gmra.mrb[0].mxu0 %v728
        %v1782 = vpop.f32.mrb[0].mxu0
        %v1783 = vadd.f32 %v1622, %v1782
        %v1784 = vpop.f32.mrb[0].mxu0
        %v1785 = vpop.f32.mrb[0].mxu0
        %v1786 = vadd.f32 %v1625, %v1785
        %v1787 = vpop.f32.mrb[0].mxu0
        %1788 = vmatprep.mubr.bf16.mxu0 0
        %1789 = vmatmul.mubr.bf16.gmra.mrb[0].mxu0 %v731
        %v1790 = vpop.f32.mrb[0].mxu0
        %v1791 = vadd.f32 %v1630, %v1790
        %v1792 = vpop.f32.mrb[0].mxu0
        %v1793 = vpop.f32.mrb[0].mxu0
        %v1794 = vadd.f32 %v1633, %v1793
        %v1795 = vpop.f32.mrb[0].mxu0
        %1796 = vmatprep.mubr.bf16.mxu0 0
        %1797 = vmatmul.mubr.bf16.gmra.mrb[0].mxu0 %v734
        %v1798 = vpop.f32.mrb[0].mxu0
        %v1799 = vadd.f32 %v1638, %v1798
        %v1800 = vpop.f32.mrb[0].mxu0
        %v1801 = vpop.f32.mrb[0].mxu0
        %v1802 = vadd.f32 %v1641, %v1801
        %v1803 = vpop.f32.mrb[0].mxu0
        %1804 = vdwg.mxu0
        %v1807 = vunpack.c.l.b16 %v330
        %v1808 = vunpack.c.l.b16 %v331
        %v1809 = vpack.c.b16 %v1808, %v1807
        %v1812 = vunpack.c.l.b16 %v332
        %v1813 = vpack.c.b16 %v1812, %v1812
        %v1815 = vshrl.u32 %v1809, 16
        %v1817 = vshll.u32 %v1809, 16
        %v1819 = vrot.slane %v1817, 1
        %v1820 = vor.u32 %v1815, %v1819
        %v1822 = vshll.u32 %v1813, 16
        %v1824 = vrot.slane %v1822, 1
        %v1825 = vsel %vm477, %v1820, %v1824
        %v1827 = vrot.slane %v1809, 1
        %v1828 = vrot.slane %v1813, 1
        %v1829 = vsel %vm686, %v1827, %v1828
        %v1831 = vld [vmem:[%s1 + $0x180] sm:$0xf]
        %v1832 = vld [vmem:[%s1 + $0x184] sm:$0xf]
        %v1833 = vld [vmem:[%s1 + $0x188] sm:$0xf]
        %v1834 = vld [vmem:[%s1 + $0x18c] sm:$0xf]
        %v1835 = vld [vmem:[%s1 + $0x190] sm:$0xf]
        %v1836 = vld [vmem:[%s1 + $0x194] sm:$0xf]
        %v1837 = vld [vmem:[%s1 + $0x198] sm:$0xf]
        %v1838 = vld [vmem:[%s1 + $0x19c] sm:$0xf]
        %v1839 = vld [vmem:[%s1 + $0x1a0] sm:$0xf]
        %v1840 = vld [vmem:[%s1 + $0x1a4] sm:$0xf]
        %v1841 = vld [vmem:[%s1 + $0x1a8] sm:$0xf]
        %v1842 = vld [vmem:[%s1 + $0x1ac] sm:$0xf]
        %v1843 = vld [vmem:[%s1 + $0x1b0] sm:$0xf]
        %v1844 = vld [vmem:[%s1 + $0x1b4] sm:$0xf]
        %v1845 = vld [vmem:[%s1 + $0x1b8] sm:$0xf]
        %v1846 = vld [vmem:[%s1 + $0x1bc] sm:$0xf]
        %v1847 = vld [vmem:[%s1 + $0x1c0] sm:$0xf]
        %v1848 = vld [vmem:[%s1 + $0x1c4] sm:$0xf]
        %v1849 = vld [vmem:[%s1 + $0x1c8] sm:$0xf]
        %v1850 = vld [vmem:[%s1 + $0x1cc] sm:$0xf]
        %v1851 = vld [vmem:[%s1 + $0x1d0] sm:$0xf]
        %v1852 = vld [vmem:[%s1 + $0x1d4] sm:$0xf]
        %v1853 = vld [vmem:[%s1 + $0x1d8] sm:$0xf]
        %v1854 = vld [vmem:[%s1 + $0x1dc] sm:$0xf]
        %v1855 = vld [vmem:[%s1 + $0x1e0] sm:$0xf]
        %v1856 = vld [vmem:[%s1 + $0x1e4] sm:$0xf]
        %v1857 = vld [vmem:[%s1 + $0x1e8] sm:$0xf]
        %v1858 = vld [vmem:[%s1 + $0x1ec] sm:$0xf]
        %v1859 = vld [vmem:[%s1 + $0x1f0] sm:$0xf]
        %v1860 = vld [vmem:[%s1 + $0x1f4] sm:$0xf]
        %v1861 = vld [vmem:[%s1 + $0x1f8] sm:$0xf]
        %v1862 = vld [vmem:[%s1 + $0x1fc] sm:$0xf]
        %v1863 = vld [vmem:[%s1 + $0x200] sm:$0xf]
        %v1864 = vld [vmem:[%s1 + $0x204] sm:$0xf]
        %v1865 = vld [vmem:[%s1 + $0x208] sm:$0xf]
        %v1866 = vld [vmem:[%s1 + $0x20c] sm:$0xf]
        %v1867 = vld [vmem:[%s1 + $0x210] sm:$0xf]
        %v1868 = vld [vmem:[%s1 + $0x214] sm:$0xf]
        %v1869 = vld [vmem:[%s1 + $0x218] sm:$0xf]
        %v1870 = vld [vmem:[%s1 + $0x21c] sm:$0xf]
        %v1871 = vld [vmem:[%s1 + $0x220] sm:$0xf]
        %v1872 = vld [vmem:[%s1 + $0x224] sm:$0xf]
        %v1873 = vld [vmem:[%s1 + $0x228] sm:$0xf]
        %v1874 = vld [vmem:[%s1 + $0x22c] sm:$0xf]
        %v1875 = vld [vmem:[%s1 + $0x230] sm:$0xf]
        %v1876 = vld [vmem:[%s1 + $0x234] sm:$0xf]
        %v1877 = vld [vmem:[%s1 + $0x238] sm:$0xf]
        %v1878 = vld [vmem:[%s1 + $0x23c] sm:$0xf]
        %v1927 = vunpack.c.l.b16 %v1831
        %v1928 = vunpack.c.l.b16 %v1832
        %v1929 = vunpack.c.l.b16 %v1833
        %v1930 = vunpack.c.l.b16 %v1834
        %v1931 = vunpack.c.l.b16 %v1835
        %v1932 = vunpack.c.l.b16 %v1836
        %v1933 = vunpack.c.l.b16 %v1837
        %v1934 = vunpack.c.l.b16 %v1838
        %v1935 = vunpack.c.l.b16 %v1839
        %v1936 = vunpack.c.l.b16 %v1840
        %v1937 = vunpack.c.l.b16 %v1841
        %v1938 = vunpack.c.l.b16 %v1842
        %v1939 = vunpack.c.l.b16 %v1843
        %v1940 = vunpack.c.l.b16 %v1844
        %v1941 = vunpack.c.l.b16 %v1845
        %v1942 = vunpack.c.l.b16 %v1846
        %v1943 = vunpack.c.l.b16 %v1847
        %v1944 = vunpack.c.l.b16 %v1848
        %v1945 = vunpack.c.l.b16 %v1849
        %v1946 = vunpack.c.l.b16 %v1850
        %v1947 = vunpack.c.l.b16 %v1851
        %v1948 = vunpack.c.l.b16 %v1852
        %v1949 = vunpack.c.l.b16 %v1853
        %v1950 = vunpack.c.l.b16 %v1854
        %v1951 = vunpack.c.l.b16 %v1855
        %v1952 = vunpack.c.l.b16 %v1856
        %v1953 = vunpack.c.l.b16 %v1857
        %v1954 = vunpack.c.l.b16 %v1858
        %v1955 = vunpack.c.l.b16 %v1859
        %v1956 = vunpack.c.l.b16 %v1860
        %v1957 = vunpack.c.l.b16 %v1861
        %v1958 = vunpack.c.l.b16 %v1862
        %v1959 = vunpack.c.l.b16 %v1863
        %v1960 = vunpack.c.l.b16 %v1864
        %v1961 = vunpack.c.l.b16 %v1865
        %v1962 = vunpack.c.l.b16 %v1866
        %v1963 = vunpack.c.l.b16 %v1867
        %v1964 = vunpack.c.l.b16 %v1868
        %v1965 = vunpack.c.l.b16 %v1869
        %v1966 = vunpack.c.l.b16 %v1870
        %v1967 = vunpack.c.l.b16 %v1871
        %v1968 = vunpack.c.l.b16 %v1872
        %v1969 = vunpack.c.l.b16 %v1873
        %v1970 = vunpack.c.l.b16 %v1874
        %v1971 = vunpack.c.l.b16 %v1875
        %v1972 = vunpack.c.l.b16 %v1876
        %v1973 = vunpack.c.l.b16 %v1877
        %v1974 = vunpack.c.l.b16 %v1878
        %v1975 = vpack.c.b16 %v1928, %v1927
        %v1976 = vpack.c.b16 %v1930, %v1929
        %v1977 = vpack.c.b16 %v1932, %v1931
        %v1978 = vpack.c.b16 %v1934, %v1933
        %v1979 = vpack.c.b16 %v1936, %v1935
        %v1980 = vpack.c.b16 %v1938, %v1937
        %v1981 = vpack.c.b16 %v1940, %v1939
        %v1982 = vpack.c.b16 %v1942, %v1941
        %v1983 = vpack.c.b16 %v1944, %v1943
        %v1984 = vpack.c.b16 %v1946, %v1945
        %v1985 = vpack.c.b16 %v1948, %v1947
        %v1986 = vpack.c.b16 %v1950, %v1949
        %v1987 = vpack.c.b16 %v1952, %v1951
        %v1988 = vpack.c.b16 %v1954, %v1953
        %v1989 = vpack.c.b16 %v1956, %v1955
        %v1990 = vpack.c.b16 %v1958, %v1957
        %v1991 = vpack.c.b16 %v1960, %v1959
        %v1992 = vpack.c.b16 %v1962, %v1961
        %v1993 = vpack.c.b16 %v1964, %v1963
        %v1994 = vpack.c.b16 %v1966, %v1965
        %v1995 = vpack.c.b16 %v1968, %v1967
        %v1996 = vpack.c.b16 %v1970, %v1969
        %v1997 = vpack.c.b16 %v1972, %v1971
        %v1998 = vpack.c.b16 %v1974, %v1973
        %2023 = vmatprep.subr.bf16.mxu0 0
        %2024 = vmatpush1.bf16.msra.mxu0 %v1975
        %2025 = vmatprep.subr.bf16.mxu0 0
        %2026 = vmatpush1.bf16.msra.mxu0 %v1976
        %2027 = vmatprep.subr.bf16.mxu0 0
        %2028 = vmatpush1.bf16.msra.mxu0 %v1977
        %2029 = vmatprep.subr.bf16.mxu0 0
        %2030 = vmatpush1.bf16.msra.mxu0 %v1978
        %2031 = vmatprep.subr.bf16.mxu0 0
        %2032 = vmatpush1.bf16.msra.mxu0 %v1979
        %2033 = vmatprep.subr.bf16.mxu0 0
        %2034 = vmatpush1.bf16.msra.mxu0 %v1980
        %2035 = vmatprep.subr.bf16.mxu0 0
        %2036 = vmatpush1.bf16.msra.mxu0 %v1981
        %2037 = vmatprep.subr.bf16.mxu0 0
        %2038 = vmatpush1.bf16.msra.mxu0 %v1982
        %2039 = vmatprep.subr.bf16.mxu0 0
        %2040 = vmatpush1.bf16.msra.mxu0 %v1983
        %2041 = vmatprep.subr.bf16.mxu0 0
        %2042 = vmatpush1.bf16.msra.mxu0 %v1984
        %2043 = vmatprep.subr.bf16.mxu0 0
        %2044 = vmatpush1.bf16.msra.mxu0 %v1985
        %2045 = vmatprep.subr.bf16.mxu0 0
        %2046 = vmatpush1.bf16.msra.mxu0 %v1986
        %2047 = vmatprep.subr.bf16.mxu0 0
        %2048 = vmatpush1.bf16.msra.mxu0 %v1987
        %2049 = vmatprep.subr.bf16.mxu0 0
        %2050 = vmatpush1.bf16.msra.mxu0 %v1988
        %2051 = vmatprep.subr.bf16.mxu0 0
        %2052 = vmatpush1.bf16.msra.mxu0 %v1989
        %2053 = vmatprep.subr.bf16.mxu0 0
        %2054 = vmatpush1.bf16.msra.mxu0 %v1990
        %2055 = vmatprep.mubr.bf16.mxu0 %v513
        %2056 = vmatmul.mubr.bf16.gmra.mrb[0].mxu0 %v399
        %v2057 = vpop.f32.mrb[0].mxu0
        %v2058 = vadd.f32 0.0, %v2057
        %v2059 = vpop.f32.mrb[0].mxu0
        %v2060 = vpop.f32.mrb[0].mxu0
        %v2061 = vadd.f32 0.0, %v2060
        %v2062 = vpop.f32.mrb[0].mxu0
        %2063 = vmatprep.mubr.bf16.mxu0 %v525
        %2064 = vmatmul.mubr.bf16.gmra.mrb[0].mxu0 %v400
        %v2065 = vpop.f32.mrb[0].mxu0
        %v2066 = vadd.f32 0.0, %v2065
        %v2067 = vpop.f32.mrb[0].mxu0
        %v2068 = vpop.f32.mrb[0].mxu0
        %v2069 = vadd.f32 0.0, %v2068
        %v2070 = vpop.f32.mrb[0].mxu0
        %2071 = vmatprep.mubr.bf16.mxu0 %v537
        %2072 = vmatmul.mubr.bf16.gmra.mrb[0].mxu0 %v401
        %v2073 = vpop.f32.mrb[0].mxu0
        %v2074 = vadd.f32 0.0, %v2073
        %v2075 = vpop.f32.mrb[0].mxu0
        %v2076 = vpop.f32.mrb[0].mxu0
        %v2077 = vadd.f32 0.0, %v2076
        %v2078 = vpop.f32.mrb[0].mxu0
        %2079 = vmatprep.mubr.bf16.mxu0 %v549
        %2080 = vmatmul.mubr.bf16.gmra.mrb[0].mxu0 %v402
        %v2081 = vpop.f32.mrb[0].mxu0
        %v2082 = vadd.f32 0.0, %v2081
        %v2083 = vpop.f32.mrb[0].mxu0
        %v2084 = vpop.f32.mrb[0].mxu0
        %v2085 = vadd.f32 0.0, %v2084
        %v2086 = vpop.f32.mrb[0].mxu0
        %2087 = vmatprep.mubr.bf16.mxu0 %v561
        %2088 = vmatmul.mubr.bf16.gmra.mrb[0].mxu0 %v403
        %v2089 = vpop.f32.mrb[0].mxu0
        %v2090 = vadd.f32 0.0, %v2089
        %v2091 = vpop.f32.mrb[0].mxu0
        %v2092 = vpop.f32.mrb[0].mxu0
        %v2093 = vadd.f32 0.0, %v2092
        %v2094 = vpop.f32.mrb[0].mxu0
        %2095 = vmatprep.mubr.bf16.mxu0 %v573
        %2096 = vmatmul.mubr.bf16.gmra.mrb[0].mxu0 %v404
        %v2097 = vpop.f32.mrb[0].mxu0
        %v2098 = vadd.f32 0.0, %v2097
        %v2099 = vpop.f32.mrb[0].mxu0
        %v2100 = vpop.f32.mrb[0].mxu0
        %v2101 = vadd.f32 0.0, %v2100
        %v2102 = vpop.f32.mrb[0].mxu0
        %2103 = vmatprep.mubr.bf16.mxu0 %v585
        %2104 = vmatmul.mubr.bf16.gmra.mrb[0].mxu0 %v405
        %v2105 = vpop.f32.mrb[0].mxu0
        %v2106 = vadd.f32 0.0, %v2105
        %v2107 = vpop.f32.mrb[0].mxu0
        %v2108 = vpop.f32.mrb[0].mxu0
        %v2109 = vadd.f32 0.0, %v2108
        %v2110 = vpop.f32.mrb[0].mxu0
        %2111 = vmatprep.mubr.bf16.mxu0 %v597
        %2112 = vmatmul.mubr.bf16.gmra.mrb[0].mxu0 %v406
        %v2113 = vpop.f32.mrb[0].mxu0
        %v2114 = vadd.f32 0.0, %v2113
        %v2115 = vpop.f32.mrb[0].mxu0
        %v2116 = vpop.f32.mrb[0].mxu0
        %v2117 = vadd.f32 0.0, %v2116
        %v2118 = vpop.f32.mrb[0].mxu0
        %2119 = vmatprep.mubr.bf16.mxu0 %v609
        %2120 = vmatmul.mubr.bf16.gmra.mrb[0].mxu0 %v407
        %v2121 = vpop.f32.mrb[0].mxu0
        %v2122 = vadd.f32 0.0, %v2121
        %v2123 = vpop.f32.mrb[0].mxu0
        %v2124 = vpop.f32.mrb[0].mxu0
        %v2125 = vadd.f32 0.0, %v2124
        %v2126 = vpop.f32.mrb[0].mxu0
        %2127 = vmatprep.mubr.bf16.mxu0 %v621
        %2128 = vmatmul.mubr.bf16.gmra.mrb[0].mxu0 %v408
        %v2129 = vpop.f32.mrb[0].mxu0
        %v2130 = vadd.f32 0.0, %v2129
        %v2131 = vpop.f32.mrb[0].mxu0
        %v2132 = vpop.f32.mrb[0].mxu0
        %v2133 = vadd.f32 0.0, %v2132
        %v2134 = vpop.f32.mrb[0].mxu0
        %2135 = vmatprep.mubr.bf16.mxu0 %v633
        %2136 = vmatmul.mubr.bf16.gmra.mrb[0].mxu0 %v409
        %v2137 = vpop.f32.mrb[0].mxu0
        %v2138 = vadd.f32 0.0, %v2137
        %v2139 = vpop.f32.mrb[0].mxu0
        %v2140 = vpop.f32.mrb[0].mxu0
        %v2141 = vadd.f32 0.0, %v2140
        %v2142 = vpop.f32.mrb[0].mxu0
        %2143 = vmatprep.mubr.bf16.mxu0 %v645
        %2144 = vmatmul.mubr.bf16.gmra.mrb[0].mxu0 %v410
        %v2145 = vpop.f32.mrb[0].mxu0
        %v2146 = vadd.f32 0.0, %v2145
        %v2147 = vpop.f32.mrb[0].mxu0
        %v2148 = vpop.f32.mrb[0].mxu0
        %v2149 = vadd.f32 0.0, %v2148
        %v2150 = vpop.f32.mrb[0].mxu0
        %2151 = vmatprep.mubr.bf16.mxu0 %v657
        %2152 = vmatmul.mubr.bf16.gmra.mrb[0].mxu0 %v411
        %v2153 = vpop.f32.mrb[0].mxu0
        %v2154 = vadd.f32 0.0, %v2153
        %v2155 = vpop.f32.mrb[0].mxu0
        %v2156 = vpop.f32.mrb[0].mxu0
        %v2157 = vadd.f32 0.0, %v2156
        %v2158 = vpop.f32.mrb[0].mxu0
        %2159 = vmatprep.mubr.bf16.mxu0 %v669
        %2160 = vmatmul.mubr.bf16.gmra.mrb[0].mxu0 %v412
        %v2161 = vpop.f32.mrb[0].mxu0
        %v2162 = vadd.f32 0.0, %v2161
        %v2163 = vpop.f32.mrb[0].mxu0
        %v2164 = vpop.f32.mrb[0].mxu0
        %v2165 = vadd.f32 0.0, %v2164
        %v2166 = vpop.f32.mrb[0].mxu0
        %2167 = vmatprep.mubr.bf16.mxu0 %v819
        %2168 = vmatmul.mubr.bf16.gmra.mrb[0].mxu0 %v803
        %v2169 = vpop.f32.mrb[0].mxu0
        %v2170 = vadd.f32 0.0, %v2169
        %v2171 = vpop.f32.mrb[0].mxu0
        %v2172 = vpop.f32.mrb[0].mxu0
        %v2173 = vadd.f32 0.0, %v2172
        %v2174 = vpop.f32.mrb[0].mxu0
        %2175 = vmatprep.mubr.bf16.mxu0 %v1825
        %2176 = vmatmul.mubr.bf16.gmra.mrb[0].mxu0 %v1809
        %v2177 = vpop.f32.mrb[0].mxu0
        %v2178 = vadd.f32 0.0, %v2177
        %v2179 = vpop.f32.mrb[0].mxu0
        %v2180 = vpop.f32.mrb[0].mxu0
        %v2181 = vadd.f32 0.0, %v2180
        %v2182 = vpop.f32.mrb[0].mxu0
        %2183 = vdwg.mxu0
        %2184 = vmatprep.subr.bf16.mxu0 0
        %2185 = vmatpush1.bf16.msra.mxu0 %v1991
        %2186 = vmatprep.subr.bf16.mxu0 0
        %2187 = vmatpush1.bf16.msra.mxu0 %v1992
        %2188 = vmatprep.subr.bf16.mxu0 0
        %2189 = vmatpush1.bf16.msra.mxu0 %v1993
        %2190 = vmatprep.subr.bf16.mxu0 0
        %2191 = vmatpush1.bf16.msra.mxu0 %v1994
        %2192 = vmatprep.subr.bf16.mxu0 0
        %2193 = vmatpush1.bf16.msra.mxu0 %v1995
        %2194 = vmatprep.subr.bf16.mxu0 0
        %2195 = vmatpush1.bf16.msra.mxu0 %v1996
        %2196 = vmatprep.subr.bf16.mxu0 0
        %2197 = vmatpush1.bf16.msra.mxu0 %v1997
        %2198 = vmatprep.subr.bf16.mxu0 0
        %2199 = vmatpush1.bf16.msra.mxu0 %v1998
        %2200 = vmatprep.subr.bf16.mxu0 0
        %2201 = vmatpush1.bf16.msra.mxu0 0
        %2202 = vmatprep.subr.bf16.mxu0 0
        %2203 = vmatpush1.bf16.msra.mxu0 0
        %2204 = vmatprep.subr.bf16.mxu0 0
        %2205 = vmatpush1.bf16.msra.mxu0 0
        %2206 = vmatprep.subr.bf16.mxu0 0
        %2207 = vmatpush1.bf16.msra.mxu0 0
        %2208 = vmatprep.subr.bf16.mxu0 0
        %2209 = vmatpush1.bf16.msra.mxu0 0
        %2210 = vmatprep.subr.bf16.mxu0 0
        %2211 = vmatpush1.bf16.msra.mxu0 0
        %2212 = vmatprep.subr.bf16.mxu0 0
        %2213 = vmatpush1.bf16.msra.mxu0 0
        %2214 = vmatprep.subr.bf16.mxu0 0
        %2215 = vmatpush1.bf16.msra.mxu0 0
        %2216 = vmatprep.mubr.bf16.mxu0 0
        %2217 = vmatmul.mubr.bf16.gmra.mrb[0].mxu0 %v695
        %v2218 = vpop.f32.mrb[0].mxu0
        %v2219 = vadd.f32 %v2058, %v2218
        %v2220 = vpop.f32.mrb[0].mxu0
        %v2221 = vpop.f32.mrb[0].mxu0
        %v2222 = vadd.f32 %v2061, %v2221
        %v2223 = vpop.f32.mrb[0].mxu0
        %2224 = vmatprep.mubr.bf16.mxu0 0
        %2225 = vmatmul.mubr.bf16.gmra.mrb[0].mxu0 %v698
        %v2226 = vpop.f32.mrb[0].mxu0
        %v2227 = vadd.f32 %v2066, %v2226
        %v2228 = vpop.f32.mrb[0].mxu0
        %v2229 = vpop.f32.mrb[0].mxu0
        %v2230 = vadd.f32 %v2069, %v2229
        %v2231 = vpop.f32.mrb[0].mxu0
        %2232 = vmatprep.mubr.bf16.mxu0 0
        %2233 = vmatmul.mubr.bf16.gmra.mrb[0].mxu0 %v701
        %v2234 = vpop.f32.mrb[0].mxu0
        %v2235 = vadd.f32 %v2074, %v2234
        %v2236 = vpop.f32.mrb[0].mxu0
        %v2237 = vpop.f32.mrb[0].mxu0
        %v2238 = vadd.f32 %v2077, %v2237
        %v2239 = vpop.f32.mrb[0].mxu0
        %2240 = vmatprep.mubr.bf16.mxu0 0
        %2241 = vmatmul.mubr.bf16.gmra.mrb[0].mxu0 %v704
        %v2242 = vpop.f32.mrb[0].mxu0
        %v2243 = vadd.f32 %v2082, %v2242
        %v2244 = vpop.f32.mrb[0].mxu0
        %v2245 = vpop.f32.mrb[0].mxu0
        %v2246 = vadd.f32 %v2085, %v2245
        %v2247 = vpop.f32.mrb[0].mxu0
        %2248 = vmatprep.mubr.bf16.mxu0 0
        %2249 = vmatmul.mubr.bf16.gmra.mrb[0].mxu0 %v707
        %v2250 = vpop.f32.mrb[0].mxu0
        %v2251 = vadd.f32 %v2090, %v2250
        %v2252 = vpop.f32.mrb[0].mxu0
        %v2253 = vpop.f32.mrb[0].mxu0
        %v2254 = vadd.f32 %v2093, %v2253
        %v2255 = vpop.f32.mrb[0].mxu0
        %2256 = vmatprep.mubr.bf16.mxu0 0
        %2257 = vmatmul.mubr.bf16.gmra.mrb[0].mxu0 %v710
        %v2258 = vpop.f32.mrb[0].mxu0
        %v2259 = vadd.f32 %v2098, %v2258
        %v2260 = vpop.f32.mrb[0].mxu0
        %v2261 = vpop.f32.mrb[0].mxu0
        %v2262 = vadd.f32 %v2101, %v2261
        %v2263 = vpop.f32.mrb[0].mxu0
        %2264 = vmatprep.mubr.bf16.mxu0 0
        %2265 = vmatmul.mubr.bf16.gmra.mrb[0].mxu0 %v713
        %v2266 = vpop.f32.mrb[0].mxu0
        %v2267 = vadd.f32 %v2106, %v2266
        %v2268 = vpop.f32.mrb[0].mxu0
        %v2269 = vpop.f32.mrb[0].mxu0
        %v2270 = vadd.f32 %v2109, %v2269
        %v2271 = vpop.f32.mrb[0].mxu0
        %2272 = vmatprep.mubr.bf16.mxu0 0
        %2273 = vmatmul.mubr.bf16.gmra.mrb[0].mxu0 %v716
        %v2274 = vpop.f32.mrb[0].mxu0
        %v2275 = vadd.f32 %v2114, %v2274
        %v2276 = vpop.f32.mrb[0].mxu0
        %v2277 = vpop.f32.mrb[0].mxu0
        %v2278 = vadd.f32 %v2117, %v2277
        %v2279 = vpop.f32.mrb[0].mxu0
        %2280 = vmatprep.mubr.bf16.mxu0 0
        %2281 = vmatmul.mubr.bf16.gmra.mrb[0].mxu0 %v719
        %v2282 = vpop.f32.mrb[0].mxu0
        %v2283 = vadd.f32 %v2122, %v2282
        %v2284 = vpop.f32.mrb[0].mxu0
        %v2285 = vpop.f32.mrb[0].mxu0
        %v2286 = vadd.f32 %v2125, %v2285
        %v2287 = vpop.f32.mrb[0].mxu0
        %2288 = vmatprep.mubr.bf16.mxu0 0
        %2289 = vmatmul.mubr.bf16.gmra.mrb[0].mxu0 %v722
        %v2290 = vpop.f32.mrb[0].mxu0
        %v2291 = vadd.f32 %v2130, %v2290
        %v2292 = vpop.f32.mrb[0].mxu0
        %v2293 = vpop.f32.mrb[0].mxu0
        %v2294 = vadd.f32 %v2133, %v2293
        %v2295 = vpop.f32.mrb[0].mxu0
        %2296 = vmatprep.mubr.bf16.mxu0 0
        %2297 = vmatmul.mubr.bf16.gmra.mrb[0].mxu0 %v725
        %v2298 = vpop.f32.mrb[0].mxu0
        %v2299 = vadd.f32 %v2138, %v2298
        %v2300 = vpop.f32.mrb[0].mxu0
        %v2301 = vpop.f32.mrb[0].mxu0
        %v2302 = vadd.f32 %v2141, %v2301
        %v2303 = vpop.f32.mrb[0].mxu0
        %2304 = vmatprep.mubr.bf16.mxu0 0
        %2305 = vmatmul.mubr.bf16.gmra.mrb[0].mxu0 %v728
        %v2306 = vpop.f32.mrb[0].mxu0
        %v2307 = vadd.f32 %v2146, %v2306
        %v2308 = vpop.f32.mrb[0].mxu0
        %v2309 = vpop.f32.mrb[0].mxu0
        %v2310 = vadd.f32 %v2149, %v2309
        %v2311 = vpop.f32.mrb[0].mxu0
        %2312 = vmatprep.mubr.bf16.mxu0 0
        %2313 = vmatmul.mubr.bf16.gmra.mrb[0].mxu0 %v731
        %v2314 = vpop.f32.mrb[0].mxu0
        %v2315 = vadd.f32 %v2154, %v2314
        %v2316 = vpop.f32.mrb[0].mxu0
        %v2317 = vpop.f32.mrb[0].mxu0
        %v2318 = vadd.f32 %v2157, %v2317
        %v2319 = vpop.f32.mrb[0].mxu0
        %2320 = vmatprep.mubr.bf16.mxu0 0
        %2321 = vmatmul.mubr.bf16.gmra.mrb[0].mxu0 %v734
        %v2322 = vpop.f32.mrb[0].mxu0
        %v2323 = vadd.f32 %v2162, %v2322
        %v2324 = vpop.f32.mrb[0].mxu0
        %v2325 = vpop.f32.mrb[0].mxu0
        %v2326 = vadd.f32 %v2165, %v2325
        %v2327 = vpop.f32.mrb[0].mxu0
        %2328 = vmatprep.mubr.bf16.mxu0 0
        %2329 = vmatmul.mubr.bf16.gmra.mrb[0].mxu0 %v823
        %v2330 = vpop.f32.mrb[0].mxu0
        %v2331 = vadd.f32 %v2170, %v2330
        %v2332 = vpop.f32.mrb[0].mxu0
        %v2333 = vpop.f32.mrb[0].mxu0
        %v2334 = vadd.f32 %v2173, %v2333
        %v2335 = vpop.f32.mrb[0].mxu0
        %2336 = vmatprep.mubr.bf16.mxu0 0
        %2337 = vmatmul.mubr.bf16.gmra.mrb[0].mxu0 %v1829
        %v2338 = vpop.f32.mrb[0].mxu0
        %v2339 = vadd.f32 %v2178, %v2338
        %v2340 = vpop.f32.mrb[0].mxu0
        %v2341 = vpop.f32.mrb[0].mxu0
        %v2342 = vadd.f32 %v2181, %v2341
        %v2343 = vpop.f32.mrb[0].mxu0
        %2344 = vdwg.mxu0
        %v2345 = vadd.f32 %v1679, %v2219
        %v2346 = vadd.f32 %v1682, %v2222
        %v2347 = vadd.f32 %v1687, %v2227
        %v2348 = vadd.f32 %v1690, %v2230
        %v2349 = vadd.f32 %v1695, %v2235
        %v2350 = vadd.f32 %v1698, %v2238
        %v2351 = vadd.f32 %v1703, %v2243
        %v2352 = vadd.f32 %v1706, %v2246
        %v2353 = vadd.f32 %v1711, %v2251
        %v2354 = vadd.f32 %v1714, %v2254
        %v2355 = vadd.f32 %v1719, %v2259
        %v2356 = vadd.f32 %v1722, %v2262
        %v2357 = vadd.f32 %v1727, %v2267
        %v2358 = vadd.f32 %v1730, %v2270
        %v2359 = vadd.f32 %v1735, %v2275
        %v2360 = vadd.f32 %v1738, %v2278
        %v2361 = vadd.f32 %v1743, %v2283
        %v2362 = vadd.f32 %v1746, %v2286
        %v2363 = vadd.f32 %v1751, %v2291
        %v2364 = vadd.f32 %v1754, %v2294
        %v2365 = vadd.f32 %v1759, %v2299
        %v2366 = vadd.f32 %v1762, %v2302
        %v2367 = vadd.f32 %v1767, %v2307
        %v2368 = vadd.f32 %v1770, %v2310
        %v2369 = vadd.f32 %v1775, %v2315
        %v2370 = vadd.f32 %v1778, %v2318
        %v2371 = vadd.f32 %v1783, %v2323
        %v2372 = vadd.f32 %v1786, %v2326
        %v2373 = vadd.f32 %v1791, %v2331
        %v2374 = vadd.f32 %v1794, %v2334
        %v2375 = vadd.f32 %v1799, %v2339
        %v2376 = vadd.f32 %v1802, %v2342
        %v2377 = vpack.c.bf16 %v2346, %v2345
        %v2378 = vpack.c.bf16 %v2348, %v2347
        %v2379 = vpack.c.bf16 %v2350, %v2349
        %v2380 = vpack.c.bf16 %v2352, %v2351
        %v2381 = vpack.c.bf16 %v2354, %v2353
        %v2382 = vpack.c.bf16 %v2356, %v2355
        %v2383 = vpack.c.bf16 %v2358, %v2357
        %v2384 = vpack.c.bf16 %v2360, %v2359
        %v2385 = vpack.c.bf16 %v2362, %v2361
        %v2386 = vpack.c.bf16 %v2364, %v2363
        %v2387 = vpack.c.bf16 %v2366, %v2365
        %v2388 = vpack.c.bf16 %v2368, %v2367
        %v2389 = vpack.c.bf16 %v2370, %v2369
        %v2390 = vpack.c.bf16 %v2372, %v2371
        %v2391 = vpack.c.bf16 %v2374, %v2373
        %v2392 = vpack.c.bf16 %v2376, %v2375
        %v2409 = vunpack.c.l.b16 %v2377
        %v2410 = vunpack.c.h.b16 %v2377
        %v2411 = vunpack.c.l.b16 %v2378
        %v2412 = vunpack.c.h.b16 %v2378
        %v2413 = vunpack.c.l.b16 %v2379
        %v2414 = vunpack.c.h.b16 %v2379
        %v2415 = vunpack.c.l.b16 %v2380
        %v2416 = vunpack.c.h.b16 %v2380
        %v2417 = vunpack.c.l.b16 %v2381
        %v2418 = vunpack.c.h.b16 %v2381
        %v2419 = vunpack.c.l.b16 %v2382
        %v2420 = vunpack.c.h.b16 %v2382
        %v2421 = vunpack.c.l.b16 %v2383
        %v2422 = vunpack.c.h.b16 %v2383
        %v2423 = vunpack.c.l.b16 %v2384
        %v2424 = vunpack.c.h.b16 %v2384
        %v2425 = vunpack.c.l.b16 %v2385
        %v2426 = vunpack.c.h.b16 %v2385
        %v2427 = vunpack.c.l.b16 %v2386
        %v2428 = vunpack.c.h.b16 %v2386
        %v2429 = vunpack.c.l.b16 %v2387
        %v2430 = vunpack.c.h.b16 %v2387
        %v2431 = vunpack.c.l.b16 %v2388
        %v2432 = vunpack.c.h.b16 %v2388
        %v2433 = vunpack.c.l.b16 %v2389
        %v2434 = vunpack.c.h.b16 %v2389
        %v2435 = vunpack.c.l.b16 %v2390
        %v2436 = vunpack.c.h.b16 %v2390
        %v2437 = vunpack.c.l.b16 %v2391
        %v2438 = vunpack.c.h.b16 %v2391
        %v2439 = vunpack.c.l.b16 %v2392
        %v2440 = vunpack.c.h.b16 %v2392
        %v2441 = vpack.c.b16 %v2409, %v2409
        %v2442 = vpack.c.b16 %v2410, %v2410
        %v2443 = vpack.c.b16 %v2411, %v2411
        %v2444 = vpack.c.b16 %v2412, %v2412
        %v2445 = vpack.c.b16 %v2413, %v2413
        %v2446 = vpack.c.b16 %v2414, %v2414
        %v2447 = vpack.c.b16 %v2415, %v2415
        %v2448 = vpack.c.b16 %v2416, %v2416
        %v2449 = vpack.c.b16 %v2417, %v2417
        %v2450 = vpack.c.b16 %v2418, %v2418
        %v2451 = vpack.c.b16 %v2419, %v2419
        %v2452 = vpack.c.b16 %v2420, %v2420
        %v2453 = vpack.c.b16 %v2421, %v2421
        %v2454 = vpack.c.b16 %v2422, %v2422
        %v2455 = vpack.c.b16 %v2423, %v2423
        %v2456 = vpack.c.b16 %v2424, %v2424
        %v2457 = vpack.c.b16 %v2425, %v2425
        %v2458 = vpack.c.b16 %v2426, %v2426
        %v2459 = vpack.c.b16 %v2427, %v2427
        %v2460 = vpack.c.b16 %v2428, %v2428
        %v2461 = vpack.c.b16 %v2429, %v2429
        %v2462 = vpack.c.b16 %v2430, %v2430
        %v2463 = vpack.c.b16 %v2431, %v2431
        %v2464 = vpack.c.b16 %v2432, %v2432
        %v2465 = vpack.c.b16 %v2433, %v2433
        %v2466 = vpack.c.b16 %v2434, %v2434
        %v2467 = vpack.c.b16 %v2435, %v2435
        %v2468 = vpack.c.b16 %v2436, %v2436
        %v2469 = vpack.c.b16 %v2437, %v2437
        %v2470 = vpack.c.b16 %v2438, %v2438
        %v2471 = vpack.c.b16 %v2439, %v2439
        %v2472 = vpack.c.b16 %v2440, %v2440
        %2505 = vst [vmem:[%s251] sm:$0xf] %v2441
        %2506 = vst [vmem:[%s251 + $0x4] sm:$0xf] %v2442
        %2507 = vst [vmem:[%s251 + $0x8] sm:$0xf] %v2443
        %2508 = vst [vmem:[%s251 + $0xc] sm:$0xf] %v2444
        %2509 = vst [vmem:[%s251 + $0x10] sm:$0xf] %v2445
        %2510 = vst [vmem:[%s251 + $0x14] sm:$0xf] %v2446
        %2511 = vst [vmem:[%s251 + $0x18] sm:$0xf] %v2447
        %2512 = vst [vmem:[%s251 + $0x1c] sm:$0xf] %v2448
        %2513 = vst [vmem:[%s251 + $0x20] sm:$0xf] %v2449
        %2514 = vst [vmem:[%s251 + $0x24] sm:$0xf] %v2450
        %2515 = vst [vmem:[%s251 + $0x28] sm:$0xf] %v2451
        %2516 = vst [vmem:[%s251 + $0x2c] sm:$0xf] %v2452
        %2517 = vst [vmem:[%s251 + $0x30] sm:$0xf] %v2453
        %2518 = vst [vmem:[%s251 + $0x34] sm:$0xf] %v2454
        %2519 = vst [vmem:[%s251 + $0x38] sm:$0xf] %v2455
        %2520 = vst [vmem:[%s251 + $0x3c] sm:$0xf] %v2456
        %2521 = vst [vmem:[%s251 + $0x40] sm:$0xf] %v2457
        %2522 = vst [vmem:[%s251 + $0x44] sm:$0xf] %v2458
        %2523 = vst [vmem:[%s251 + $0x48] sm:$0xf] %v2459
        %2524 = vst [vmem:[%s251 + $0x4c] sm:$0xf] %v2460
        %2525 = vst [vmem:[%s251 + $0x50] sm:$0xf] %v2461
        %2526 = vst [vmem:[%s251 + $0x54] sm:$0xf] %v2462
        %2527 = vst [vmem:[%s251 + $0x58] sm:$0xf] %v2463
        %2528 = vst [vmem:[%s251 + $0x5c] sm:$0xf] %v2464
        %2529 = vst [vmem:[%s251 + $0x60] sm:$0xf] %v2465
        %2530 = vst [vmem:[%s251 + $0x64] sm:$0xf] %v2466
        %2531 = vst [vmem:[%s251 + $0x68] sm:$0xf] %v2467
        %2532 = vst [vmem:[%s251 + $0x6c] sm:$0xf] %v2468
        %2533 = vst [vmem:[%s251 + $0x70] sm:$0xf] %v2469
        %2534 = vst [vmem:[%s251 + $0x74] sm:$0xf] %v2470
        %2535 = vst [vmem:[%s251 + $0x78] sm:$0xf] %v2471
        %2536 = vst [vmem:[%s251 + $0x7c] sm:$0xf] %v2472
        %v2537 = vadd.f32 %v2345, %v2346
        %v2538 = vadd.f32 %v2537, %v2347
        %v2539 = vadd.f32 %v2538, %v2348
        %v2540 = vadd.f32 %v2539, %v2349
        %v2541 = vadd.f32 %v2540, %v2350
        %v2542 = vadd.f32 %v2541, %v2351
        %v2543 = vadd.f32 %v2542, %v2352
        %v2544 = vadd.f32 %v2543, %v2353
        %v2545 = vadd.f32 %v2544, %v2354
        %v2546 = vadd.f32 %v2545, %v2355
        %v2547 = vadd.f32 %v2546, %v2356
        %v2548 = vadd.f32 %v2547, %v2357
        %v2549 = vadd.f32 %v2548, %v2358
        %v2550 = vadd.f32 %v2549, %v2359
        %v2551 = vadd.f32 %v2550, %v2360
        %v2552 = vadd.f32 %v2551, %v2361
        %v2553 = vadd.f32 %v2552, %v2362
        %v2554 = vadd.f32 %v2553, %v2363
        %v2555 = vadd.f32 %v2554, %v2364
        %v2556 = vadd.f32 %v2555, %v2365
        %v2557 = vadd.f32 %v2556, %v2366
        %v2558 = vadd.f32 %v2557, %v2367
        %v2559 = vadd.f32 %v2558, %v2368
        %v2560 = vadd.f32 %v2559, %v2369
        %v2561 = vadd.f32 %v2560, %v2370
        %v2562 = vadd.f32 %v2561, %v2371
        %v2563 = vadd.f32 %v2562, %v2372
        %v2564 = vadd.f32 %v2563, %v2373
        %v2565 = vadd.f32 %v2564, %v2374
        %v2566 = vadd.f32 %v2565, %v2375
        %v2567 = vadd.f32 %v2566, %v2376
        %v2568 = vrot.slane %v2567, 4
        %v2569 = vadd.f32 %v2567, %v2568
        %v2570 = vrot.slane %v2569, 2
        %v2571 = vadd.f32 %v2569, %v2570
        %v2572 = vrot.slane %v2571, 1
        %v2573 = vadd.f32 %v2571, %v2572
        %v2574 = vmul.f32 %v2345, %v2345
        %v2575 = vmul.f32 %v2346, %v2346
        %v2576 = vmul.f32 %v2347, %v2347
        %v2577 = vmul.f32 %v2348, %v2348
        %v2578 = vmul.f32 %v2349, %v2349
        %v2579 = vmul.f32 %v2350, %v2350
        %v2580 = vmul.f32 %v2351, %v2351
        %v2581 = vmul.f32 %v2352, %v2352
        %v2582 = vmul.f32 %v2353, %v2353
        %v2583 = vmul.f32 %v2354, %v2354
        %v2584 = vmul.f32 %v2355, %v2355
        %v2585 = vmul.f32 %v2356, %v2356
        %v2586 = vmul.f32 %v2357, %v2357
        %v2587 = vmul.f32 %v2358, %v2358
        %v2588 = vmul.f32 %v2359, %v2359
        %v2589 = vmul.f32 %v2360, %v2360
        %v2590 = vmul.f32 %v2361, %v2361
        %v2591 = vmul.f32 %v2362, %v2362
        %v2592 = vmul.f32 %v2363, %v2363
        %v2593 = vmul.f32 %v2364, %v2364
        %v2594 = vmul.f32 %v2365, %v2365
        %v2595 = vmul.f32 %v2366, %v2366
        %v2596 = vmul.f32 %v2367, %v2367
        %v2597 = vmul.f32 %v2368, %v2368
        %v2598 = vmul.f32 %v2369, %v2369
        %v2599 = vmul.f32 %v2370, %v2370
        %v2600 = vmul.f32 %v2371, %v2371
        %v2601 = vmul.f32 %v2372, %v2372
        %v2602 = vmul.f32 %v2373, %v2373
        %v2603 = vmul.f32 %v2374, %v2374
        %v2604 = vmul.f32 %v2375, %v2375
        %v2605 = vmul.f32 %v2376, %v2376
        %v2606 = vadd.f32 %v2574, %v2575
        %v2607 = vadd.f32 %v2606, %v2576
        %v2608 = vadd.f32 %v2607, %v2577
        %v2609 = vadd.f32 %v2608, %v2578
        %v2610 = vadd.f32 %v2609, %v2579
        %v2611 = vadd.f32 %v2610, %v2580
        %v2612 = vadd.f32 %v2611, %v2581
        %v2613 = vadd.f32 %v2612, %v2582
        %v2614 = vadd.f32 %v2613, %v2583
        %v2615 = vadd.f32 %v2614, %v2584
        %v2616 = vadd.f32 %v2615, %v2585
        %v2617 = vadd.f32 %v2616, %v2586
        %v2618 = vadd.f32 %v2617, %v2587
        %v2619 = vadd.f32 %v2618, %v2588
        %v2620 = vadd.f32 %v2619, %v2589
        %v2621 = vadd.f32 %v2620, %v2590
        %v2622 = vadd.f32 %v2621, %v2591
        %v2623 = vadd.f32 %v2622, %v2592
        %v2624 = vadd.f32 %v2623, %v2593
        %v2625 = vadd.f32 %v2624, %v2594
        %v2626 = vadd.f32 %v2625, %v2595
        %v2627 = vadd.f32 %v2626, %v2596
        %v2628 = vadd.f32 %v2627, %v2597
        %v2629 = vadd.f32 %v2628, %v2598
        %v2630 = vadd.f32 %v2629, %v2599
        %v2631 = vadd.f32 %v2630, %v2600
        %v2632 = vadd.f32 %v2631, %v2601
        %v2633 = vadd.f32 %v2632, %v2602
        %v2634 = vadd.f32 %v2633, %v2603
        %v2635 = vadd.f32 %v2634, %v2604
        %v2636 = vadd.f32 %v2635, %v2605
        %v2637 = vrot.slane %v2636, 4
        %v2638 = vadd.f32 %v2636, %v2637
        %v2639 = vrot.slane %v2638, 2
        %v2640 = vadd.f32 %v2638, %v2639
        %v2641 = vrot.slane %v2640, 1
        %v2642 = vadd.f32 %v2640, %v2641
        %vm2643 = vcmask 1040384
        %v2644 = vsel %vm2643, %v2573, %v2642
        %2645 = vst [vmem:[%s258] sm:$0x3] %v2644
        %vm2646 = vsmask.f32 3328
        %vm2647 = vsmask.f32 7440
        %vm2648 = vmor %vm2646, %vm2647
        %v2650 = vshrl.u32 %v282, 16
        %v2652 = vrot.slane %v2650, 4
        %v2653 = vshll.u32 %v282, 16
        %v2655 = vrot.slane %v2653, 5
        %v2656 = vor.u32 %v2652, %v2655
        %v2657 = vrot.slane %v2656, 4
        %v2659 = vshll.u32 %v283, 16
        %v2661 = vrot.slane %v2659, 5
        %v2662 = vsel %vm2648, %v2657, %v2661
        %v2663 = vshrl.u32 %v283, 16
        %v2665 = vrot.slane %v2663, 4
        %v2666 = vor.u32 %v2665, %v2661
        %v2667 = vrot.slane %v2666, 4
        %v2669 = vshll.u32 %v284, 16
        %v2671 = vrot.slane %v2669, 5
        %v2672 = vsel %vm2648, %v2667, %v2671
        %v2674 = vshrl.u32 %v285, 16
        %v2676 = vrot.slane %v2674, 4
        %v2677 = vshll.u32 %v285, 16
        %v2679 = vrot.slane %v2677, 5
        %v2680 = vor.u32 %v2676, %v2679
        %v2681 = vrot.slane %v2680, 4
        %v2683 = vshll.u32 %v286, 16
        %v2685 = vrot.slane %v2683, 5
        %v2686 = vsel %vm2648, %v2681, %v2685
        %v2687 = vshrl.u32 %v286, 16
        %v2689 = vrot.slane %v2687, 4
        %v2690 = vor.u32 %v2689, %v2685
        %v2691 = vrot.slane %v2690, 4
        %v2693 = vshll.u32 %v287, 16
        %v2695 = vrot.slane %v2693, 5
        %v2696 = vsel %vm2648, %v2691, %v2695
        %v2698 = vshrl.u32 %v288, 16
        %v2700 = vrot.slane %v2698, 4
        %v2701 = vshll.u32 %v288, 16
        %v2703 = vrot.slane %v2701, 5
        %v2704 = vor.u32 %v2700, %v2703
        %v2705 = vrot.slane %v2704, 4
        %v2707 = vshll.u32 %v289, 16
        %v2709 = vrot.slane %v2707, 5
        %v2710 = vsel %vm2648, %v2705, %v2709
        %v2711 = vshrl.u32 %v289, 16
        %v2713 = vrot.slane %v2711, 4
        %v2714 = vor.u32 %v2713, %v2709
        %v2715 = vrot.slane %v2714, 4
        %v2717 = vshll.u32 %v290, 16
        %v2719 = vrot.slane %v2717, 5
        %v2720 = vsel %vm2648, %v2715, %v2719
        %v2722 = vshrl.u32 %v291, 16
        %v2724 = vrot.slane %v2722, 4
        %v2725 = vshll.u32 %v291, 16
        %v2727 = vrot.slane %v2725, 5
        %v2728 = vor.u32 %v2724, %v2727
        %v2729 = vrot.slane %v2728, 4
        %v2731 = vshll.u32 %v292, 16
        %v2733 = vrot.slane %v2731, 5
        %v2734 = vsel %vm2648, %v2729, %v2733
        %v2735 = vshrl.u32 %v292, 16
        %v2737 = vrot.slane %v2735, 4
        %v2738 = vor.u32 %v2737, %v2733
        %v2739 = vrot.slane %v2738, 4
        %v2741 = vshll.u32 %v293, 16
        %v2743 = vrot.slane %v2741, 5
        %v2744 = vsel %vm2648, %v2739, %v2743
        %v2746 = vshrl.u32 %v294, 16
        %v2748 = vrot.slane %v2746, 4
        %v2749 = vshll.u32 %v294, 16
        %v2751 = vrot.slane %v2749, 5
        %v2752 = vor.u32 %v2748, %v2751
        %v2753 = vrot.slane %v2752, 4
        %v2755 = vshll.u32 %v295, 16
        %v2757 = vrot.slane %v2755, 5
        %v2758 = vsel %vm2648, %v2753, %v2757
        %v2759 = vshrl.u32 %v295, 16
        %v2761 = vrot.slane %v2759, 4
        %v2762 = vor.u32 %v2761, %v2757
        %v2763 = vrot.slane %v2762, 4
        %v2765 = vshll.u32 %v296, 16
        %v2767 = vrot.slane %v2765, 5
        %v2768 = vsel %vm2648, %v2763, %v2767
        %v2770 = vshrl.u32 %v297, 16
        %v2772 = vrot.slane %v2770, 4
        %v2773 = vshll.u32 %v297, 16
        %v2775 = vrot.slane %v2773, 5
        %v2776 = vor.u32 %v2772, %v2775
        %v2777 = vrot.slane %v2776, 4
        %v2779 = vshll.u32 %v298, 16
        %v2781 = vrot.slane %v2779, 5
        %v2782 = vsel %vm2648, %v2777, %v2781
        %v2783 = vshrl.u32 %v298, 16
        %v2785 = vrot.slane %v2783, 4
        %v2786 = vor.u32 %v2785, %v2781
        %v2787 = vrot.slane %v2786, 4
        %v2789 = vshll.u32 %v299, 16
        %v2791 = vrot.slane %v2789, 5
        %v2792 = vsel %vm2648, %v2787, %v2791
        %v2794 = vshrl.u32 %v300, 16
        %v2796 = vrot.slane %v2794, 4
        %v2797 = vshll.u32 %v300, 16
        %v2799 = vrot.slane %v2797, 5
        %v2800 = vor.u32 %v2796, %v2799
        %v2801 = vrot.slane %v2800, 4
        %v2803 = vshll.u32 %v301, 16
        %v2805 = vrot.slane %v2803, 5
        %v2806 = vsel %vm2648, %v2801, %v2805
        %v2807 = vshrl.u32 %v301, 16
        %v2809 = vrot.slane %v2807, 4
        %v2810 = vor.u32 %v2809, %v2805
        %v2811 = vrot.slane %v2810, 4
        %v2813 = vshll.u32 %v302, 16
        %v2815 = vrot.slane %v2813, 5
        %v2816 = vsel %vm2648, %v2811, %v2815
        %v2818 = vshrl.u32 %v303, 16
        %v2820 = vrot.slane %v2818, 4
        %v2821 = vshll.u32 %v303, 16
        %v2823 = vrot.slane %v2821, 5
        %v2824 = vor.u32 %v2820, %v2823
        %v2825 = vrot.slane %v2824, 4
        %v2827 = vshll.u32 %v304, 16
        %v2829 = vrot.slane %v2827, 5
        %v2830 = vsel %vm2648, %v2825, %v2829
        %v2831 = vshrl.u32 %v304, 16
        %v2833 = vrot.slane %v2831, 4
        %v2834 = vor.u32 %v2833, %v2829
        %v2835 = vrot.slane %v2834, 4
        %v2837 = vshll.u32 %v305, 16
        %v2839 = vrot.slane %v2837, 5
        %v2840 = vsel %vm2648, %v2835, %v2839
        %v2842 = vshrl.u32 %v306, 16
        %v2844 = vrot.slane %v2842, 4
        %v2845 = vshll.u32 %v306, 16
        %v2847 = vrot.slane %v2845, 5
        %v2848 = vor.u32 %v2844, %v2847
        %v2849 = vrot.slane %v2848, 4
        %v2851 = vshll.u32 %v307, 16
        %v2853 = vrot.slane %v2851, 5
        %v2854 = vsel %vm2648, %v2849, %v2853
        %v2855 = vshrl.u32 %v307, 16
        %v2857 = vrot.slane %v2855, 4
        %v2858 = vor.u32 %v2857, %v2853
        %v2859 = vrot.slane %v2858, 4
        %v2861 = vshll.u32 %v308, 16
        %v2863 = vrot.slane %v2861, 5
        %v2864 = vsel %vm2648, %v2859, %v2863
        %v2866 = vshrl.u32 %v309, 16
        %v2868 = vrot.slane %v2866, 4
        %v2869 = vshll.u32 %v309, 16
        %v2871 = vrot.slane %v2869, 5
        %v2872 = vor.u32 %v2868, %v2871
        %v2873 = vrot.slane %v2872, 4
        %v2875 = vshll.u32 %v310, 16
        %v2877 = vrot.slane %v2875, 5
        %v2878 = vsel %vm2648, %v2873, %v2877
        %v2879 = vshrl.u32 %v310, 16
        %v2881 = vrot.slane %v2879, 4
        %v2882 = vor.u32 %v2881, %v2877
        %v2883 = vrot.slane %v2882, 4
        %v2885 = vshll.u32 %v311, 16
        %v2887 = vrot.slane %v2885, 5
        %v2888 = vsel %vm2648, %v2883, %v2887
        %v2890 = vshrl.u32 %v312, 16
        %v2892 = vrot.slane %v2890, 4
        %v2893 = vshll.u32 %v312, 16
        %v2895 = vrot.slane %v2893, 5
        %v2896 = vor.u32 %v2892, %v2895
        %v2897 = vrot.slane %v2896, 4
        %v2899 = vshll.u32 %v313, 16
        %v2901 = vrot.slane %v2899, 5
        %v2902 = vsel %vm2648, %v2897, %v2901
        %v2903 = vshrl.u32 %v313, 16
        %v2905 = vrot.slane %v2903, 4
        %v2906 = vor.u32 %v2905, %v2901
        %v2907 = vrot.slane %v2906, 4
        %v2909 = vshll.u32 %v314, 16
        %v2911 = vrot.slane %v2909, 5
        %v2912 = vsel %vm2648, %v2907, %v2911
        %v2914 = vshrl.u32 %v315, 16
        %v2916 = vrot.slane %v2914, 4
        %v2917 = vshll.u32 %v315, 16
        %v2919 = vrot.slane %v2917, 5
        %v2920 = vor.u32 %v2916, %v2919
        %v2921 = vrot.slane %v2920, 4
        %v2923 = vshll.u32 %v316, 16
        %v2925 = vrot.slane %v2923, 5
        %v2926 = vsel %vm2648, %v2921, %v2925
        %v2927 = vshrl.u32 %v316, 16
        %v2929 = vrot.slane %v2927, 4
        %v2930 = vor.u32 %v2929, %v2925
        %v2931 = vrot.slane %v2930, 4
        %v2933 = vshll.u32 %v317, 16
        %v2935 = vrot.slane %v2933, 5
        %v2936 = vsel %vm2648, %v2931, %v2935
        %v2938 = vshrl.u32 %v318, 16
        %v2940 = vrot.slane %v2938, 4
        %v2941 = vshll.u32 %v318, 16
        %v2943 = vrot.slane %v2941, 5
        %v2944 = vor.u32 %v2940, %v2943
        %v2945 = vrot.slane %v2944, 4
        %v2947 = vshll.u32 %v319, 16
        %v2949 = vrot.slane %v2947, 5
        %v2950 = vsel %vm2648, %v2945, %v2949
        %v2951 = vshrl.u32 %v319, 16
        %v2953 = vrot.slane %v2951, 4
        %v2954 = vor.u32 %v2953, %v2949
        %v2955 = vrot.slane %v2954, 4
        %v2957 = vshll.u32 %v320, 16
        %v2959 = vrot.slane %v2957, 5
        %v2960 = vsel %vm2648, %v2955, %v2959
        %v2962 = vshrl.u32 %v321, 16
        %v2964 = vrot.slane %v2962, 4
        %v2965 = vshll.u32 %v321, 16
        %v2967 = vrot.slane %v2965, 5
        %v2968 = vor.u32 %v2964, %v2967
        %v2969 = vrot.slane %v2968, 4
        %v2971 = vshll.u32 %v322, 16
        %v2973 = vrot.slane %v2971, 5
        %v2974 = vsel %vm2648, %v2969, %v2973
        %v2975 = vshrl.u32 %v322, 16
        %v2977 = vrot.slane %v2975, 4
        %v2978 = vor.u32 %v2977, %v2973
        %v2979 = vrot.slane %v2978, 4
        %v2981 = vshll.u32 %v323, 16
        %v2983 = vrot.slane %v2981, 5
        %v2984 = vsel %vm2648, %v2979, %v2983
        %v2986 = vshrl.u32 %v324, 16
        %v2988 = vrot.slane %v2986, 4
        %v2989 = vshll.u32 %v324, 16
        %v2991 = vrot.slane %v2989, 5
        %v2992 = vor.u32 %v2988, %v2991
        %v2993 = vrot.slane %v2992, 4
        %v2995 = vshll.u32 %v325, 16
        %v2997 = vrot.slane %v2995, 5
        %v2998 = vsel %vm2648, %v2993, %v2997
        %v2999 = vshrl.u32 %v325, 16
        %v3001 = vrot.slane %v2999, 4
        %v3002 = vor.u32 %v3001, %v2997
        %v3003 = vrot.slane %v3002, 4
        %v3005 = vshll.u32 %v326, 16
        %v3007 = vrot.slane %v3005, 5
        %v3008 = vsel %vm2648, %v3003, %v3007
        %v3010 = vshrl.u32 %v327, 16
        %v3012 = vrot.slane %v3010, 4
        %v3013 = vshll.u32 %v327, 16
        %v3015 = vrot.slane %v3013, 5
        %v3016 = vor.u32 %v3012, %v3015
        %v3017 = vrot.slane %v3016, 4
        %v3019 = vshll.u32 %v328, 16
        %v3021 = vrot.slane %v3019, 5
        %v3022 = vsel %vm2648, %v3017, %v3021
        %v3023 = vshrl.u32 %v328, 16
        %v3025 = vrot.slane %v3023, 4
        %v3026 = vor.u32 %v3025, %v3021
        %v3027 = vrot.slane %v3026, 4
        %v3029 = vshll.u32 %v329, 16
        %v3031 = vrot.slane %v3029, 5
        %v3032 = vsel %vm2648, %v3027, %v3031
        %v3033 = vld [vmem:[%s2] sm:$0xf]
        %v3034 = vld [vmem:[%s2 + $0x4] sm:$0xf]
        %v3035 = vld [vmem:[%s2 + $0x8] sm:$0xf]
        %v3036 = vld [vmem:[%s2 + $0xc] sm:$0xf]
        %v3037 = vld [vmem:[%s2 + $0x10] sm:$0xf]
        %v3038 = vld [vmem:[%s2 + $0x14] sm:$0xf]
        %v3039 = vld [vmem:[%s2 + $0x18] sm:$0xf]
        %v3040 = vld [vmem:[%s2 + $0x1c] sm:$0xf]
        %v3041 = vld [vmem:[%s2 + $0x20] sm:$0xf]
        %v3042 = vld [vmem:[%s2 + $0x24] sm:$0xf]
        %v3043 = vld [vmem:[%s2 + $0x28] sm:$0xf]
        %v3044 = vld [vmem:[%s2 + $0x2c] sm:$0xf]
        %v3045 = vld [vmem:[%s2 + $0x30] sm:$0xf]
        %v3046 = vld [vmem:[%s2 + $0x34] sm:$0xf]
        %v3047 = vld [vmem:[%s2 + $0x38] sm:$0xf]
        %v3048 = vld [vmem:[%s2 + $0x3c] sm:$0xf]
        %v3049 = vunpack.c.l.b16 %v2662
        %v3050 = vunpack.c.l.b16 %v2672
        %v3051 = vunpack.c.l.b16 %v2686
        %v3052 = vunpack.c.l.b16 %v2696
        %v3053 = vunpack.c.l.b16 %v2710
        %v3054 = vunpack.c.l.b16 %v2720
        %v3055 = vunpack.c.l.b16 %v2734
        %v3056 = vunpack.c.l.b16 %v2744
        %v3057 = vunpack.c.l.b16 %v2758
        %v3058 = vunpack.c.l.b16 %v2768
        %v3059 = vunpack.c.l.b16 %v2782
        %v3060 = vunpack.c.l.b16 %v2792
        %v3061 = vunpack.c.l.b16 %v2806
        %v3062 = vunpack.c.l.b16 %v2816
        %v3063 = vunpack.c.l.b16 %v2830
        %v3064 = vunpack.c.l.b16 %v2840
        %v3065 = vunpack.c.l.b16 %v2854
        %v3066 = vunpack.c.l.b16 %v2864
        %v3067 = vunpack.c.l.b16 %v2878
        %v3068 = vunpack.c.l.b16 %v2888
        %v3069 = vunpack.c.l.b16 %v2902
        %v3070 = vunpack.c.l.b16 %v2912
        %v3071 = vunpack.c.l.b16 %v2926
        %v3072 = vunpack.c.l.b16 %v2936
        %v3073 = vunpack.c.l.b16 %v2950
        %v3074 = vunpack.c.l.b16 %v2960
        %v3075 = vunpack.c.l.b16 %v2974
        %v3076 = vunpack.c.l.b16 %v2984
        %v3077 = vunpack.c.l.b16 %v2998
        %v3078 = vunpack.c.l.b16 %v3008
        %v3079 = vunpack.c.l.b16 %v3022
        %v3080 = vunpack.c.l.b16 %v3032
        %v3081 = vpack.c.b16 %v3050, %v3049
        %v3082 = vpack.c.b16 %v3052, %v3051
        %v3083 = vpack.c.b16 %v3054, %v3053
        %v3084 = vpack.c.b16 %v3056, %v3055
        %v3085 = vpack.c.b16 %v3058, %v3057
        %v3086 = vpack.c.b16 %v3060, %v3059
        %v3087 = vpack.c.b16 %v3062, %v3061
        %v3088 = vpack.c.b16 %v3064, %v3063
        %v3089 = vpack.c.b16 %v3066, %v3065
        %v3090 = vpack.c.b16 %v3068, %v3067
        %v3091 = vpack.c.b16 %v3070, %v3069
        %v3092 = vpack.c.b16 %v3072, %v3071
        %v3093 = vpack.c.b16 %v3074, %v3073
        %v3094 = vpack.c.b16 %v3076, %v3075
        %v3095 = vpack.c.b16 %v3078, %v3077
        %v3096 = vpack.c.b16 %v3080, %v3079
        %v3129 = vunpack.c.l.b16 %v3033
        %v3130 = vunpack.c.l.b16 %v3034
        %v3131 = vunpack.c.l.b16 %v3035
        %v3132 = vunpack.c.l.b16 %v3036
        %v3133 = vunpack.c.l.b16 %v3037
        %v3134 = vunpack.c.l.b16 %v3038
        %v3135 = vunpack.c.l.b16 %v3039
        %v3136 = vunpack.c.l.b16 %v3040
        %v3137 = vunpack.c.l.b16 %v3041
        %v3138 = vunpack.c.l.b16 %v3042
        %v3139 = vunpack.c.l.b16 %v3043
        %v3140 = vunpack.c.l.b16 %v3044
        %v3141 = vunpack.c.l.b16 %v3045
        %v3142 = vunpack.c.l.b16 %v3046
        %v3143 = vunpack.c.l.b16 %v3047
        %v3144 = vunpack.c.l.b16 %v3048
        %v3145 = vpack.c.b16 %v3130, %v3129
        %v3146 = vpack.c.b16 %v3132, %v3131
        %v3147 = vpack.c.b16 %v3134, %v3133
        %v3148 = vpack.c.b16 %v3136, %v3135
        %v3149 = vpack.c.b16 %v3138, %v3137
        %v3150 = vpack.c.b16 %v3140, %v3139
        %v3151 = vpack.c.b16 %v3142, %v3141
        %v3152 = vpack.c.b16 %v3144, %v3143
        %3161 = vmatprep.subr.bf16.mxu0 0
        %3162 = vmatpush1.bf16.msra.mxu0 %v3145
        %3163 = vmatprep.subr.bf16.mxu0 0
        %3164 = vmatpush1.bf16.msra.mxu0 %v3146
        %3165 = vmatprep.subr.bf16.mxu0 0
        %3166 = vmatpush1.bf16.msra.mxu0 %v3147
        %3167 = vmatprep.subr.bf16.mxu0 0
        %3168 = vmatpush1.bf16.msra.mxu0 %v3148
        %3169 = vmatprep.subr.bf16.mxu0 0
        %3170 = vmatpush1.bf16.msra.mxu0 %v3149
        %3171 = vmatprep.subr.bf16.mxu0 0
        %3172 = vmatpush1.bf16.msra.mxu0 %v3150
        %3173 = vmatprep.subr.bf16.mxu0 0
        %3174 = vmatpush1.bf16.msra.mxu0 %v3151
        %3175 = vmatprep.subr.bf16.mxu0 0
        %3176 = vmatpush1.bf16.msra.mxu0 %v3152
        %3177 = vmatprep.subr.bf16.mxu0 0
        %3178 = vmatpush1.bf16.msra.mxu0 0
        %3179 = vmatprep.subr.bf16.mxu0 0
        %3180 = vmatpush1.bf16.msra.mxu0 0
        %3181 = vmatprep.subr.bf16.mxu0 0
        %3182 = vmatpush1.bf16.msra.mxu0 0
        %3183 = vmatprep.subr.bf16.mxu0 0
        %3184 = vmatpush1.bf16.msra.mxu0 0
        %3185 = vmatprep.subr.bf16.mxu0 0
        %3186 = vmatpush1.bf16.msra.mxu0 0
        %3187 = vmatprep.subr.bf16.mxu0 0
        %3188 = vmatpush1.bf16.msra.mxu0 0
        %3189 = vmatprep.subr.bf16.mxu0 0
        %3190 = vmatpush1.bf16.msra.mxu0 0
        %3191 = vmatprep.subr.bf16.mxu0 0
        %3192 = vmatpush1.bf16.msra.mxu0 0
        %3193 = vmatprep.mubr.bf16.mxu0 0
        %3194 = vmatmul.mubr.bf16.gmra.mrb[0].mxu0 %v3081
        %v3195 = vpop.f32.mrb[0].mxu0
        %v3196 = vadd.f32 0.0, %v3195
        %v3197 = vpop.f32.mrb[0].mxu0
        %v3198 = vpop.f32.mrb[0].mxu0
        %v3199 = vadd.f32 0.0, %v3198
        %v3200 = vpop.f32.mrb[0].mxu0
        %3201 = vmatprep.mubr.bf16.mxu0 0
        %3202 = vmatmul.mubr.bf16.gmra.mrb[0].mxu0 %v3082
        %v3203 = vpop.f32.mrb[0].mxu0
        %v3204 = vadd.f32 0.0, %v3203
        %v3205 = vpop.f32.mrb[0].mxu0
        %v3206 = vpop.f32.mrb[0].mxu0
        %v3207 = vadd.f32 0.0, %v3206
        %v3208 = vpop.f32.mrb[0].mxu0
        %3209 = vmatprep.mubr.bf16.mxu0 0
        %3210 = vmatmul.mubr.bf16.gmra.mrb[0].mxu0 %v3083
        %v3211 = vpop.f32.mrb[0].mxu0
        %v3212 = vadd.f32 0.0, %v3211
        %v3213 = vpop.f32.mrb[0].mxu0
        %v3214 = vpop.f32.mrb[0].mxu0
        %v3215 = vadd.f32 0.0, %v3214
        %v3216 = vpop.f32.mrb[0].mxu0
        %3217 = vmatprep.mubr.bf16.mxu0 0
        %3218 = vmatmul.mubr.bf16.gmra.mrb[0].mxu0 %v3084
        %v3219 = vpop.f32.mrb[0].mxu0
        %v3220 = vadd.f32 0.0, %v3219
        %v3221 = vpop.f32.mrb[0].mxu0
        %v3222 = vpop.f32.mrb[0].mxu0
        %v3223 = vadd.f32 0.0, %v3222
        %v3224 = vpop.f32.mrb[0].mxu0
        %3225 = vmatprep.mubr.bf16.mxu0 0
        %3226 = vmatmul.mubr.bf16.gmra.mrb[0].mxu0 %v3085
        %v3227 = vpop.f32.mrb[0].mxu0
        %v3228 = vadd.f32 0.0, %v3227
        %v3229 = vpop.f32.mrb[0].mxu0
        %v3230 = vpop.f32.mrb[0].mxu0
        %v3231 = vadd.f32 0.0, %v3230
        %v3232 = vpop.f32.mrb[0].mxu0
        %3233 = vmatprep.mubr.bf16.mxu0 0
        %3234 = vmatmul.mubr.bf16.gmra.mrb[0].mxu0 %v3086
        %v3235 = vpop.f32.mrb[0].mxu0
        %v3236 = vadd.f32 0.0, %v3235
        %v3237 = vpop.f32.mrb[0].mxu0
        %v3238 = vpop.f32.mrb[0].mxu0
        %v3239 = vadd.f32 0.0, %v3238
        %v3240 = vpop.f32.mrb[0].mxu0
        %3241 = vmatprep.mubr.bf16.mxu0 0
        %3242 = vmatmul.mubr.bf16.gmra.mrb[0].mxu0 %v3087
        %v3243 = vpop.f32.mrb[0].mxu0
        %v3244 = vadd.f32 0.0, %v3243
        %v3245 = vpop.f32.mrb[0].mxu0
        %v3246 = vpop.f32.mrb[0].mxu0
        %v3247 = vadd.f32 0.0, %v3246
        %v3248 = vpop.f32.mrb[0].mxu0
        %3249 = vmatprep.mubr.bf16.mxu0 0
        %3250 = vmatmul.mubr.bf16.gmra.mrb[0].mxu0 %v3088
        %v3251 = vpop.f32.mrb[0].mxu0
        %v3252 = vadd.f32 0.0, %v3251
        %v3253 = vpop.f32.mrb[0].mxu0
        %v3254 = vpop.f32.mrb[0].mxu0
        %v3255 = vadd.f32 0.0, %v3254
        %v3256 = vpop.f32.mrb[0].mxu0
        %3257 = vmatprep.mubr.bf16.mxu0 0
        %3258 = vmatmul.mubr.bf16.gmra.mrb[0].mxu0 %v3089
        %v3259 = vpop.f32.mrb[0].mxu0
        %v3260 = vadd.f32 0.0, %v3259
        %v3261 = vpop.f32.mrb[0].mxu0
        %v3262 = vpop.f32.mrb[0].mxu0
        %v3263 = vadd.f32 0.0, %v3262
        %v3264 = vpop.f32.mrb[0].mxu0
        %3265 = vmatprep.mubr.bf16.mxu0 0
        %3266 = vmatmul.mubr.bf16.gmra.mrb[0].mxu0 %v3090
        %v3267 = vpop.f32.mrb[0].mxu0
        %v3268 = vadd.f32 0.0, %v3267
        %v3269 = vpop.f32.mrb[0].mxu0
        %v3270 = vpop.f32.mrb[0].mxu0
        %v3271 = vadd.f32 0.0, %v3270
        %v3272 = vpop.f32.mrb[0].mxu0
        %3273 = vmatprep.mubr.bf16.mxu0 0
        %3274 = vmatmul.mubr.bf16.gmra.mrb[0].mxu0 %v3091
        %v3275 = vpop.f32.mrb[0].mxu0
        %v3276 = vadd.f32 0.0, %v3275
        %v3277 = vpop.f32.mrb[0].mxu0
        %v3278 = vpop.f32.mrb[0].mxu0
        %v3279 = vadd.f32 0.0, %v3278
        %v3280 = vpop.f32.mrb[0].mxu0
        %3281 = vmatprep.mubr.bf16.mxu0 0
        %3282 = vmatmul.mubr.bf16.gmra.mrb[0].mxu0 %v3092
        %v3283 = vpop.f32.mrb[0].mxu0
        %v3284 = vadd.f32 0.0, %v3283
        %v3285 = vpop.f32.mrb[0].mxu0
        %v3286 = vpop.f32.mrb[0].mxu0
        %v3287 = vadd.f32 0.0, %v3286
        %v3288 = vpop.f32.mrb[0].mxu0
        %3289 = vmatprep.mubr.bf16.mxu0 0
        %3290 = vmatmul.mubr.bf16.gmra.mrb[0].mxu0 %v3093
        %v3291 = vpop.f32.mrb[0].mxu0
        %v3292 = vadd.f32 0.0, %v3291
        %v3293 = vpop.f32.mrb[0].mxu0
        %v3294 = vpop.f32.mrb[0].mxu0
        %v3295 = vadd.f32 0.0, %v3294
        %v3296 = vpop.f32.mrb[0].mxu0
        %3297 = vmatprep.mubr.bf16.mxu0 0
        %3298 = vmatmul.mubr.bf16.gmra.mrb[0].mxu0 %v3094
        %v3299 = vpop.f32.mrb[0].mxu0
        %v3300 = vadd.f32 0.0, %v3299
        %v3301 = vpop.f32.mrb[0].mxu0
        %v3302 = vpop.f32.mrb[0].mxu0
        %v3303 = vadd.f32 0.0, %v3302
        %v3304 = vpop.f32.mrb[0].mxu0
        %3305 = vmatprep.mubr.bf16.mxu0 0
        %3306 = vmatmul.mubr.bf16.gmra.mrb[0].mxu0 %v3095
        %v3307 = vpop.f32.mrb[0].mxu0
        %v3308 = vadd.f32 0.0, %v3307
        %v3309 = vpop.f32.mrb[0].mxu0
        %v3310 = vpop.f32.mrb[0].mxu0
        %v3311 = vadd.f32 0.0, %v3310
        %v3312 = vpop.f32.mrb[0].mxu0
        %3313 = vmatprep.mubr.bf16.mxu0 0
        %3314 = vmatmul.mubr.bf16.gmra.mrb[0].mxu0 %v3096
        %v3315 = vpop.f32.mrb[0].mxu0
        %v3316 = vadd.f32 0.0, %v3315
        %v3317 = vpop.f32.mrb[0].mxu0
        %v3318 = vpop.f32.mrb[0].mxu0
        %v3319 = vadd.f32 0.0, %v3318
        %v3320 = vpop.f32.mrb[0].mxu0
        %3321 = vdwg.mxu0
        %v3322 = vpack.c.bf16 %v3199, %v3196
        %v3323 = vpack.c.bf16 %v3207, %v3204
        %v3324 = vpack.c.bf16 %v3215, %v3212
        %v3325 = vpack.c.bf16 %v3223, %v3220
        %v3326 = vpack.c.bf16 %v3231, %v3228
        %v3327 = vpack.c.bf16 %v3239, %v3236
        %v3328 = vpack.c.bf16 %v3247, %v3244
        %v3329 = vpack.c.bf16 %v3255, %v3252
        %v3330 = vpack.c.bf16 %v3263, %v3260
        %v3331 = vpack.c.bf16 %v3271, %v3268
        %v3332 = vpack.c.bf16 %v3279, %v3276
        %v3333 = vpack.c.bf16 %v3287, %v3284
        %v3334 = vpack.c.bf16 %v3295, %v3292
        %v3335 = vpack.c.bf16 %v3303, %v3300
        %v3336 = vpack.c.bf16 %v3311, %v3308
        %v3337 = vpack.c.bf16 %v3319, %v3316
        %v3354 = vunpack.c.l.b16 %v3322
        %v3355 = vunpack.c.h.b16 %v3322
        %v3356 = vunpack.c.l.b16 %v3323
        %v3357 = vunpack.c.h.b16 %v3323
        %v3358 = vunpack.c.l.b16 %v3324
        %v3359 = vunpack.c.h.b16 %v3324
        %v3360 = vunpack.c.l.b16 %v3325
        %v3361 = vunpack.c.h.b16 %v3325
        %v3362 = vunpack.c.l.b16 %v3326
        %v3363 = vunpack.c.h.b16 %v3326
        %v3364 = vunpack.c.l.b16 %v3327
        %v3365 = vunpack.c.h.b16 %v3327
        %v3366 = vunpack.c.l.b16 %v3328
        %v3367 = vunpack.c.h.b16 %v3328
        %v3368 = vunpack.c.l.b16 %v3329
        %v3369 = vunpack.c.h.b16 %v3329
        %v3370 = vunpack.c.l.b16 %v3330
        %v3371 = vunpack.c.h.b16 %v3330
        %v3372 = vunpack.c.l.b16 %v3331
        %v3373 = vunpack.c.h.b16 %v3331
        %v3374 = vunpack.c.l.b16 %v3332
        %v3375 = vunpack.c.h.b16 %v3332
        %v3376 = vunpack.c.l.b16 %v3333
        %v3377 = vunpack.c.h.b16 %v3333
        %v3378 = vunpack.c.l.b16 %v3334
        %v3379 = vunpack.c.h.b16 %v3334
        %v3380 = vunpack.c.l.b16 %v3335
        %v3381 = vunpack.c.h.b16 %v3335
        %v3382 = vunpack.c.l.b16 %v3336
        %v3383 = vunpack.c.h.b16 %v3336
        %v3384 = vunpack.c.l.b16 %v3337
        %v3385 = vunpack.c.h.b16 %v3337
        %v3386 = vpack.c.b16 %v3354, %v3354
        %v3387 = vpack.c.b16 %v3355, %v3355
        %v3388 = vpack.c.b16 %v3356, %v3356
        %v3389 = vpack.c.b16 %v3357, %v3357
        %v3390 = vpack.c.b16 %v3358, %v3358
        %v3391 = vpack.c.b16 %v3359, %v3359
        %v3392 = vpack.c.b16 %v3360, %v3360
        %v3393 = vpack.c.b16 %v3361, %v3361
        %v3394 = vpack.c.b16 %v3362, %v3362
        %v3395 = vpack.c.b16 %v3363, %v3363
        %v3396 = vpack.c.b16 %v3364, %v3364
        %v3397 = vpack.c.b16 %v3365, %v3365
        %v3398 = vpack.c.b16 %v3366, %v3366
        %v3399 = vpack.c.b16 %v3367, %v3367
        %v3400 = vpack.c.b16 %v3368, %v3368
        %v3401 = vpack.c.b16 %v3369, %v3369
        %v3402 = vpack.c.b16 %v3370, %v3370
        %v3403 = vpack.c.b16 %v3371, %v3371
        %v3404 = vpack.c.b16 %v3372, %v3372
        %v3405 = vpack.c.b16 %v3373, %v3373
        %v3406 = vpack.c.b16 %v3374, %v3374
        %v3407 = vpack.c.b16 %v3375, %v3375
        %v3408 = vpack.c.b16 %v3376, %v3376
        %v3409 = vpack.c.b16 %v3377, %v3377
        %v3410 = vpack.c.b16 %v3378, %v3378
        %v3411 = vpack.c.b16 %v3379, %v3379
        %v3412 = vpack.c.b16 %v3380, %v3380
        %v3413 = vpack.c.b16 %v3381, %v3381
        %v3414 = vpack.c.b16 %v3382, %v3382
        %v3415 = vpack.c.b16 %v3383, %v3383
        %v3416 = vpack.c.b16 %v3384, %v3384
        %v3417 = vpack.c.b16 %v3385, %v3385
        %3450 = vst [vmem:[%s265] sm:$0xf] %v3386
        %3451 = vst [vmem:[%s265 + $0x4] sm:$0xf] %v3387
        %3452 = vst [vmem:[%s265 + $0x8] sm:$0xf] %v3388
        %3453 = vst [vmem:[%s265 + $0xc] sm:$0xf] %v3389
        %3454 = vst [vmem:[%s265 + $0x10] sm:$0xf] %v3390
        %3455 = vst [vmem:[%s265 + $0x14] sm:$0xf] %v3391
        %3456 = vst [vmem:[%s265 + $0x18] sm:$0xf] %v3392
        %3457 = vst [vmem:[%s265 + $0x1c] sm:$0xf] %v3393
        %3458 = vst [vmem:[%s265 + $0x20] sm:$0xf] %v3394
        %3459 = vst [vmem:[%s265 + $0x24] sm:$0xf] %v3395
        %3460 = vst [vmem:[%s265 + $0x28] sm:$0xf] %v3396
        %3461 = vst [vmem:[%s265 + $0x2c] sm:$0xf] %v3397
        %3462 = vst [vmem:[%s265 + $0x30] sm:$0xf] %v3398
        %3463 = vst [vmem:[%s265 + $0x34] sm:$0xf] %v3399
        %3464 = vst [vmem:[%s265 + $0x38] sm:$0xf] %v3400
        %3465 = vst [vmem:[%s265 + $0x3c] sm:$0xf] %v3401
        %3466 = vst [vmem:[%s265 + $0x40] sm:$0xf] %v3402
        %3467 = vst [vmem:[%s265 + $0x44] sm:$0xf] %v3403
        %3468 = vst [vmem:[%s265 + $0x48] sm:$0xf] %v3404
        %3469 = vst [vmem:[%s265 + $0x4c] sm:$0xf] %v3405
        %3470 = vst [vmem:[%s265 + $0x50] sm:$0xf] %v3406
        %3471 = vst [vmem:[%s265 + $0x54] sm:$0xf] %v3407
        %3472 = vst [vmem:[%s265 + $0x58] sm:$0xf] %v3408
        %3473 = vst [vmem:[%s265 + $0x5c] sm:$0xf] %v3409
        %3474 = vst [vmem:[%s265 + $0x60] sm:$0xf] %v3410
        %3475 = vst [vmem:[%s265 + $0x64] sm:$0xf] %v3411
        %3476 = vst [vmem:[%s265 + $0x68] sm:$0xf] %v3412
        %3477 = vst [vmem:[%s265 + $0x6c] sm:$0xf] %v3413
        %3478 = vst [vmem:[%s265 + $0x70] sm:$0xf] %v3414
        %3479 = vst [vmem:[%s265 + $0x74] sm:$0xf] %v3415
        %3480 = vst [vmem:[%s265 + $0x78] sm:$0xf] %v3416
        %3481 = vst [vmem:[%s265 + $0x7c] sm:$0xf] %v3417
        %v3482 = vadd.f32 %v3196, %v3199
        %v3483 = vadd.f32 %v3482, %v3204
        %v3484 = vadd.f32 %v3483, %v3207
        %v3485 = vadd.f32 %v3484, %v3212
        %v3486 = vadd.f32 %v3485, %v3215
        %v3487 = vadd.f32 %v3486, %v3220
        %v3488 = vadd.f32 %v3487, %v3223
        %v3489 = vadd.f32 %v3488, %v3228
        %v3490 = vadd.f32 %v3489, %v3231
        %v3491 = vadd.f32 %v3490, %v3236
        %v3492 = vadd.f32 %v3491, %v3239
        %v3493 = vadd.f32 %v3492, %v3244
        %v3494 = vadd.f32 %v3493, %v3247
        %v3495 = vadd.f32 %v3494, %v3252
        %v3496 = vadd.f32 %v3495, %v3255
        %v3497 = vadd.f32 %v3496, %v3260
        %v3498 = vadd.f32 %v3497, %v3263
        %v3499 = vadd.f32 %v3498, %v3268
        %v3500 = vadd.f32 %v3499, %v3271
        %v3501 = vadd.f32 %v3500, %v3276
        %v3502 = vadd.f32 %v3501, %v3279
        %v3503 = vadd.f32 %v3502, %v3284
        %v3504 = vadd.f32 %v3503, %v3287
        %v3505 = vadd.f32 %v3504, %v3292
        %v3506 = vadd.f32 %v3505, %v3295
        %v3507 = vadd.f32 %v3506, %v3300
        %v3508 = vadd.f32 %v3507, %v3303
        %v3509 = vadd.f32 %v3508, %v3308
        %v3510 = vadd.f32 %v3509, %v3311
        %v3511 = vadd.f32 %v3510, %v3316
        %v3512 = vadd.f32 %v3511, %v3319
        %v3513 = vrot.slane %v3512, 4
        %v3514 = vadd.f32 %v3512, %v3513
        %v3515 = vrot.slane %v3514, 2
        %v3516 = vadd.f32 %v3514, %v3515
        %v3517 = vrot.slane %v3516, 1
        %v3518 = vadd.f32 %v3516, %v3517
        %v3519 = vmul.f32 %v3196, %v3196
        %v3520 = vmul.f32 %v3199, %v3199
        %v3521 = vmul.f32 %v3204, %v3204
        %v3522 = vmul.f32 %v3207, %v3207
        %v3523 = vmul.f32 %v3212, %v3212
        %v3524 = vmul.f32 %v3215, %v3215
        %v3525 = vmul.f32 %v3220, %v3220
        %v3526 = vmul.f32 %v3223, %v3223
        %v3527 = vmul.f32 %v3228, %v3228
        %v3528 = vmul.f32 %v3231, %v3231
        %v3529 = vmul.f32 %v3236, %v3236
        %v3530 = vmul.f32 %v3239, %v3239
        %v3531 = vmul.f32 %v3244, %v3244
        %v3532 = vmul.f32 %v3247, %v3247
        %v3533 = vmul.f32 %v3252, %v3252
        %v3534 = vmul.f32 %v3255, %v3255
        %v3535 = vmul.f32 %v3260, %v3260
        %v3536 = vmul.f32 %v3263, %v3263
        %v3537 = vmul.f32 %v3268, %v3268
        %v3538 = vmul.f32 %v3271, %v3271
        %v3539 = vmul.f32 %v3276, %v3276
        %v3540 = vmul.f32 %v3279, %v3279
        %v3541 = vmul.f32 %v3284, %v3284
        %v3542 = vmul.f32 %v3287, %v3287
        %v3543 = vmul.f32 %v3292, %v3292
        %v3544 = vmul.f32 %v3295, %v3295
        %v3545 = vmul.f32 %v3300, %v3300
        %v3546 = vmul.f32 %v3303, %v3303
        %v3547 = vmul.f32 %v3308, %v3308
        %v3548 = vmul.f32 %v3311, %v3311
        %v3549 = vmul.f32 %v3316, %v3316
        %v3550 = vmul.f32 %v3319, %v3319
        %v3551 = vadd.f32 %v3519, %v3520
        %v3552 = vadd.f32 %v3551, %v3521
        %v3553 = vadd.f32 %v3552, %v3522
        %v3554 = vadd.f32 %v3553, %v3523
        %v3555 = vadd.f32 %v3554, %v3524
        %v3556 = vadd.f32 %v3555, %v3525
        %v3557 = vadd.f32 %v3556, %v3526
        %v3558 = vadd.f32 %v3557, %v3527
        %v3559 = vadd.f32 %v3558, %v3528
        %v3560 = vadd.f32 %v3559, %v3529
        %v3561 = vadd.f32 %v3560, %v3530
        %v3562 = vadd.f32 %v3561, %v3531
        %v3563 = vadd.f32 %v3562, %v3532
        %v3564 = vadd.f32 %v3563, %v3533
        %v3565 = vadd.f32 %v3564, %v3534
        %v3566 = vadd.f32 %v3565, %v3535
        %v3567 = vadd.f32 %v3566, %v3536
        %v3568 = vadd.f32 %v3567, %v3537
        %v3569 = vadd.f32 %v3568, %v3538
        %v3570 = vadd.f32 %v3569, %v3539
        %v3571 = vadd.f32 %v3570, %v3540
        %v3572 = vadd.f32 %v3571, %v3541
        %v3573 = vadd.f32 %v3572, %v3542
        %v3574 = vadd.f32 %v3573, %v3543
        %v3575 = vadd.f32 %v3574, %v3544
        %v3576 = vadd.f32 %v3575, %v3545
        %v3577 = vadd.f32 %v3576, %v3546
        %v3578 = vadd.f32 %v3577, %v3547
        %v3579 = vadd.f32 %v3578, %v3548
        %v3580 = vadd.f32 %v3579, %v3549
        %v3581 = vadd.f32 %v3580, %v3550
        %v3582 = vrot.slane %v3581, 4
        %v3583 = vadd.f32 %v3581, %v3582
        %v3584 = vrot.slane %v3583, 2
        %v3585 = vadd.f32 %v3583, %v3584
        %v3586 = vrot.slane %v3585, 1
        %v3587 = vadd.f32 %v3585, %v3586
        %v3588 = vsel %vm2643, %v3518, %v3587
        %3589 = vst [vmem:[%s272] sm:$0x3] %v3588
        %s3590 = sand.u32 %s103, 1
        %s3591 = scalar_lea.sflag [#allocation3], %s3590
        %s3592 = sand.u32 %s103, 1
        %s3593 = smul.addr %s3592, 128
        %s3594 = scalar_lea.vmem [#allocation2], %s3593
        %s3595 = sand.u32 %s27, 1
        %s3596 = scalar_lea.sflag [#allocation5], %s3595
        %s3597 = sand.u32 %s129, 1
        %s3598 = smul.addr %s3597, 2
        %s3599 = scalar_lea.vmem [#allocation4], %s3598
        %s3600 = sand.u32 %s27, 1
        %s3601 = scalar_lea.sflag [#allocation5], %s3600
        %s3602 = sand.u32 %s155, 1
        %s3603 = smul.addr %s3602, 128
        %s3604 = scalar_lea.vmem [#allocation6], %s3603
        %s3605 = sand.u32 %s181, 1
        %s3606 = scalar_lea.sflag [#allocation8], %s3605
        %s3607 = sand.u32 %s181, 1
        %s3608 = smul.addr %s3607, 2
        %s3609 = scalar_lea.vmem [#allocation7], %s3608
        // Predicated region
        $region33: #{tpu_custom_call.1} parent=31 // pred_check
          %p3610 = pneg %p113
        $region34: #{tpu_custom_call.1} parent=31 // pred_check_branch
          %3612 = sbr.rel (%p3610) target = $region36
        $region35: #{tpu_custom_call.1} parent=31 // pred_region
          %s3614 = ssub.s32 2048, 2048
          %3615 = vsyncadd %s3591, %s3614
          %s3616 = smul.addr %s27, 32
          %s3617 = smul.addr %s3616, 64
          %s3618 = scalar_lea.hbm %s3, %s3617
          %s3619 = sshll.u32 %s3594, 4
          %s3620 = int_to_ptr.vmem [resolvable:$true] %s3619
          %3625 = dma.vmem_to_hbm [thread:$0]  %s3620, 2048, %s3618, %s3591, 64, 64, 4
        $region36: #{tpu_custom_call.1} parent=31 // pred_fallthru
          _
        // Predicated region
        $region37: #{tpu_custom_call.1} parent=31 // pred_check
          %p3626 = pneg %p139
        $region38: #{tpu_custom_call.1} parent=31 // pred_check_branch
          %3628 = sbr.rel (%p3626) target = $region40
        $region39: #{tpu_custom_call.1} parent=31 // pred_region
          %s3630 = ssub.s32 32, 32
          %3631 = vsyncadd %s3596, %s3630
          %s3632 = smul.addr %s27, 32
          %s3633 = scalar_lea.hbm %s4, %s3632
          %s3635 = sshll.u32 %s3599, 4
          %s3636 = int_to_ptr.vmem [resolvable:$true] %s3635
          %3638 = dma.vmem_to_hbm [thread:$0]  %s3636, 32, %s3633, %s3596
        $region40: #{tpu_custom_call.1} parent=31 // pred_fallthru
          _
        // Predicated region
        $region41: #{tpu_custom_call.1} parent=31 // pred_check
          %p3639 = pneg %p165
        $region42: #{tpu_custom_call.1} parent=31 // pred_check_branch
          %3641 = sbr.rel (%p3639) target = $region44
        $region43: #{tpu_custom_call.1} parent=31 // pred_region
          %s3643 = ssub.s32 2048, 2048
          %3644 = vsyncadd %s3601, %s3643
          %s3645 = smul.addr %s27, 32
          %s3646 = smul.addr %s3645, 64
          %s3647 = scalar_lea.hbm %s5, %s3646
          %s3648 = sshll.u32 %s3604, 4
          %s3649 = int_to_ptr.vmem [resolvable:$true] %s3648
          %3654 = dma.vmem_to_hbm [thread:$0]  %s3649, 2048, %s3647, %s3601, 64, 64, 4
        $region44: #{tpu_custom_call.1} parent=31 // pred_fallthru
          _
        // Predicated region
        $region45: #{tpu_custom_call.1} parent=31 // pred_check
          %p3655 = pneg %p191
        $region46: #{tpu_custom_call.1} parent=31 // pred_check_branch
          %3657 = sbr.rel (%p3655) target = $region48
        $region47: #{tpu_custom_call.1} parent=31 // pred_region
          %s3659 = ssub.s32 32, 32
          %3660 = vsyncadd %s3606, %s3659
          %s3661 = smul.addr %s27, 32
          %s3662 = scalar_lea.hbm %s6, %s3661
          %s3664 = sshll.u32 %s3609, 4
          %s3665 = int_to_ptr.vmem [resolvable:$true] %s3664
          %3667 = dma.vmem_to_hbm [thread:$0]  %s3665, 32, %s3662, %s3606
        $region48: #{tpu_custom_call.1} parent=31 // pred_fallthru
          _
      $region32: #{tpu_custom_call.1} parent=5 // pred_fallthru
        _
      %p3668 = scmp.le.s32.totalorder 2, %s22
      // Predicated region
      $region49: #{tpu_custom_call.1} parent=5 // pred_check
        %p3669 = pneg %p3668
      $region50: #{tpu_custom_call.1} parent=5 // pred_check_branch
        %3671 = sbr.rel (%p3669) target = $region52
      $region51: #{tpu_custom_call.1} parent=5 // pred_region
        %s3672 = ssub.s32 %s22, 2
        // Predicated region
        $region53: #{tpu_custom_call.1} parent=51 // pred_check
          %p3673 = pneg %p119
        $region54: #{tpu_custom_call.1} parent=51 // pred_check_branch
          %3675 = sbr.rel (%p3673) target = $region56
        $region55: #{tpu_custom_call.1} parent=51 // pred_region
          %s3676 = sand.u32 %s104, 1
          %s3677 = scalar_lea.sflag [#allocation3], %s3676
          %s3678 = sand.u32 %s104, 1
          %s3679 = smul.addr %s3678, 128
          %s3680 = scalar_lea.vmem [#allocation2], %s3679
          %3681 = dma.done %s3677, 2048
        $region56: #{tpu_custom_call.1} parent=51 // pred_fallthru
          _
        // Predicated region
        $region57: #{tpu_custom_call.1} parent=51 // pred_check
          %p3682 = pneg %p145
        $region58: #{tpu_custom_call.1} parent=51 // pred_check_branch
          %3684 = sbr.rel (%p3682) target = $region60
        $region59: #{tpu_custom_call.1} parent=51 // pred_region
          %s3685 = sand.u32 %s28, 1
          %s3686 = scalar_lea.sflag [#allocation5], %s3685
          %s3687 = sand.u32 %s130, 1
          %s3688 = smul.addr %s3687, 2
          %s3689 = scalar_lea.vmem [#allocation4], %s3688
          %3690 = dma.done %s3686, 32
        $region60: #{tpu_custom_call.1} parent=51 // pred_fallthru
          _
        // Predicated region
        $region61: #{tpu_custom_call.1} parent=51 // pred_check
          %p3691 = pneg %p171
        $region62: #{tpu_custom_call.1} parent=51 // pred_check_branch
          %3693 = sbr.rel (%p3691) target = $region64
        $region63: #{tpu_custom_call.1} parent=51 // pred_region
          %s3694 = sand.u32 %s28, 1
          %s3695 = scalar_lea.sflag [#allocation5], %s3694
          %s3696 = sand.u32 %s156, 1
          %s3697 = smul.addr %s3696, 128
          %s3698 = scalar_lea.vmem [#allocation6], %s3697
          %3699 = dma.done %s3695, 2048
        $region64: #{tpu_custom_call.1} parent=51 // pred_fallthru
          _
        // Predicated region
        $region65: #{tpu_custom_call.1} parent=51 // pred_check
          %p3700 = pneg %p197
        $region66: #{tpu_custom_call.1} parent=51 // pred_check_branch
          %3702 = sbr.rel (%p3700) target = $region68
        $region67: #{tpu_custom_call.1} parent=51 // pred_region
          %s3703 = sand.u32 %s182, 1
          %s3704 = scalar_lea.sflag [#allocation8], %s3703
          %s3705 = sand.u32 %s182, 1
          %s3706 = smul.addr %s3705, 2
          %s3707 = scalar_lea.vmem [#allocation7], %s3706
          %3708 = dma.done %s3704, 32
        $region68: #{tpu_custom_call.1} parent=51 // pred_fallthru
          _
      $region52: #{tpu_custom_call.1} parent=5 // pred_fallthru
        _
    $region6: #{tpu_custom_call.1} parent=1 // loop_footer
      %s26 = sadd.s32 1, %s22
    $region7: #{tpu_custom_call.1} parent=1 // loop_footer_branch
      %21 = sbr.rel target = $region3
    $region8: #{tpu_custom_call.1} parent=1 // loop_exit
      _
    %3709 = vsyncpa [#allocation3], 1
    %s3710 = scalar_lea.sflag [#allocation3], 1
    %3711 = vsyncpa %s3710, 1
    %3712 = vsyncpa [#allocation5], 1
    %s3713 = scalar_lea.sflag [#allocation5], 1
    %3714 = vsyncpa %s3713, 1
    %3715 = vsyncpa [#allocation8], 1
    %s3716 = scalar_lea.sflag [#allocation8], 1
    %3717 = vsyncpa %s3716, 1

</llo_original>
